<compile_context>
chip_gen: v7x
topology: tpu7x:2x2x1
jax: 0.10.0
libtpu: 0.0.40
codegen_flags: <defaults>
</compile_context>

<pallas_src>
import functools

import jax
import jax.numpy as jnp
from jax import lax
from jax.experimental import pallas as pl
from jax.experimental.pallas import tpu as pltpu

# ---------------- config (scaled-down dinov2-small) ----------------
PATCH = 14
C_IN = 3
HIDDEN = 64
HEADS = 2
HEAD_DIM = HIDDEN // HEADS
LAYERS = 2
MLP = 128
EPS = 1e-6
LS_GAMMA = 0.1  # layerscale init, folded into the projection weights


def _round_up(x, m):
    return (x + m - 1) // m * m


# ---------------- fused ViT encoder kernel ----------------
def _dino_vit_kernel(
    # inputs
    patches_ref,                     # (1, n_patches, k_pad)  f32
    patch_w_ref, patch_b_ref,        # (k_pad, H) bf16, (1, H) f32
    cls_ref, pos_ref,                # (1, H) f32, (t_pad, H) f32
    ln1_g_ref, ln1_b_ref,            # (L, 1, H) f32
    qkv_w_ref, qkv_b_ref,            # (L, H, 3H) bf16, (L, 1, 3H) f32
    out_w_ref, out_b_ref,            # (L, H, H) bf16, (L, 1, H) f32
    ln2_g_ref, ln2_b_ref,            # (L, 1, H) f32
    fc1_w_ref, fc1_b_ref,            # (L, H, MLP) bf16, (L, 1, MLP) f32
    fc2_w_ref, fc2_b_ref,            # (L, MLP, H) bf16, (L, 1, H) f32
    lnf_g_ref, lnf_b_ref,            # (1, H) f32
    # output
    o_ref,                           # (1, n_patches, H) f32
    # scratch
    x_scr,                           # (t_pad, H) f32
    *, n_patches, t_real, t_pad,
):
    f32 = jnp.float32
    bf16 = jnp.bfloat16
    scale = 1.0 / (HEAD_DIM ** 0.5)

    def layer_norm(x, g, b):
        mu = jnp.mean(x, axis=-1, keepdims=True)
        var = jnp.mean(jnp.square(x - mu), axis=-1, keepdims=True)
        return (x - mu) * lax.rsqrt(var + EPS) * g + b

    # --- patch embedding (stride=PATCH conv == im2col matmul), then CLS + pos emb ---
    emb = jnp.dot(patches_ref[0].astype(bf16), patch_w_ref[...],
                  preferred_element_type=f32) + patch_b_ref[...]       # (n_patches, H)
    x_scr[...] = jnp.zeros_like(x_scr)
    x_scr[0:n_patches, :] = emb                                        # patch tokens first
    x_scr[n_patches:n_patches + 1, :] = cls_ref[...]                   # CLS token last
    xs = x_scr[...] + pos_ref[...]                                     # (t_pad, H) f32

    # Mask for padded key rows (token rows padded up to a multiple of 8 sublanes).
    if t_pad > t_real:
        key_valid = lax.broadcasted_iota(jnp.int32, (t_pad, t_pad), 1) < t_real
    else:
        key_valid = None

    # --- transformer layers (statically unrolled; stacked weights stay VMEM-resident) ---
    for li in range(LAYERS):
        # attention block
        nx = layer_norm(xs, ln1_g_ref[li], ln1_b_ref[li])
        qkv = jnp.dot(nx.astype(bf16), qkv_w_ref[li],
                      preferred_element_type=f32) + qkv_b_ref[li]      # (t_pad, 3H)
        w_out = out_w_ref[li]                                          # (H, H) bf16
        attn = jnp.zeros((t_pad, HIDDEN), f32)
        for hh in range(HEADS):
            c0 = hh * HEAD_DIM
            qh = qkv[:, c0:c0 + HEAD_DIM].astype(bf16)
            kh = qkv[:, HIDDEN + c0:HIDDEN + c0 + HEAD_DIM].astype(bf16)
            vh = qkv[:, 2 * HIDDEN + c0:2 * HIDDEN + c0 + HEAD_DIM].astype(bf16)
            # q @ k^T without an explicit transpose: contract the last dims directly.
            s = lax.dot_general(qh, kh, (((1,), (1,)), ((), ())),
                                preferred_element_type=f32) * scale    # (t_pad, t_pad)
            if key_valid is not None:
                s = jnp.where(key_valid, s, -1e30)
            s = s - jnp.max(s, axis=-1, keepdims=True)
            p = jnp.exp(s)
            p = p * pl.reciprocal(jnp.sum(p, axis=-1, keepdims=True), approx=True)
            oh = jnp.dot(p.astype(bf16), vh, preferred_element_type=f32)   # (t_pad, d)
            # concat(heads) @ W_out == sum_h  oh @ W_out[h*d:(h+1)*d, :]
            attn = attn + jnp.dot(oh.astype(bf16), w_out[c0:c0 + HEAD_DIM, :],
                                  preferred_element_type=f32)
        xs = xs + attn + out_b_ref[li]          # layerscale already folded into out_w/out_b

        # MLP block
        nx = layer_norm(xs, ln2_g_ref[li], ln2_b_ref[li])
        h1 = jnp.dot(nx.astype(bf16), fc1_w_ref[li],
                     preferred_element_type=f32) + fc1_b_ref[li]
        # TODO(synk): HF Dinov2 uses exact erf-based GELU; tanh approx used for robust lowering.
        h1 = jax.nn.gelu(h1, approximate=True)
        xs = xs + jnp.dot(h1.astype(bf16), fc2_w_ref[li],
                          preferred_element_type=f32) + fc2_b_ref[li]

    # final LayerNorm, drop CLS + pad rows, emit patch tokens only
    xs = layer_norm(xs, lnf_g_ref[...], lnf_b_ref[...])
    o_ref[0] = xs[0:n_patches, :].astype(o_ref.dtype)


# ---------------- deterministic synthetic parameters ----------------
def init_params(key):
    n_pos_max = 1024  # generous pos-emb table; sliced at run time
    keys = jax.random.split(key, 3 + LAYERS)

    def w(k, shape, scale=0.02):
        return (scale * jax.random.normal(k, shape)).astype(jnp.float32)

    k_raw = C_IN * PATCH * PATCH
    k_pad = _round_up(k_raw, 128)            # 588 -> 640 (aligned MXU contraction dim)
    patch_w = jnp.pad(w(keys[0], (k_raw, HIDDEN)), ((0, k_pad - k_raw), (0, 0)))

    layer_keys = [jax.random.split(keys[3 + li], 4) for li in range(LAYERS)]
    stack = lambda fn: jnp.stack([fn(li) for li in range(LAYERS)], axis=0)

    params = {
        "patch_w": patch_w.astype(jnp.bfloat16),
        "patch_b": jnp.zeros((1, HIDDEN), jnp.float32),
        "cls": w(keys[1], (1, HIDDEN)),
        "pos": w(keys[2], (1, 1 + n_pos_max, HIDDEN)),
        "lnf_g": jnp.ones((1, HIDDEN), jnp.float32),
        "lnf_b": jnp.zeros((1, HIDDEN), jnp.float32),
        # stacked per-layer parameters (leading dim = LAYERS)
        "ln1_g": jnp.ones((LAYERS, 1, HIDDEN), jnp.float32),
        "ln1_b": jnp.zeros((LAYERS, 1, HIDDEN), jnp.float32),
        "qkv_w": stack(lambda li: w(layer_keys[li][0], (HIDDEN, 3 * HIDDEN))).astype(jnp.bfloat16),
        "qkv_b": jnp.zeros((LAYERS, 1, 3 * HIDDEN), jnp.float32),
        # layerscale gamma folded exactly into the projections: (xW+b)*g == x(Wg)+(bg)
        "out_w": (stack(lambda li: w(layer_keys[li][1], (HIDDEN, HIDDEN))) * LS_GAMMA).astype(jnp.bfloat16),
        "out_b": jnp.zeros((LAYERS, 1, HIDDEN), jnp.float32),
        "ln2_g": jnp.ones((LAYERS, 1, HIDDEN), jnp.float32),
        "ln2_b": jnp.zeros((LAYERS, 1, HIDDEN), jnp.float32),
        "fc1_w": stack(lambda li: w(layer_keys[li][2], (HIDDEN, MLP))).astype(jnp.bfloat16),
        "fc1_b": jnp.zeros((LAYERS, 1, MLP), jnp.float32),
        "fc2_w": (stack(lambda li: w(layer_keys[li][3], (MLP, HIDDEN))) * LS_GAMMA).astype(jnp.bfloat16),
        "fc2_b": jnp.zeros((LAYERS, 1, HIDDEN), jnp.float32),
    }
    return params


# ---------------- forward pass ----------------
def dino_feature_pyramid(x, params):
    """x: (B, C_IN, H, W) NCHW float32 -> (B, H//14, W//14, HIDDEN)."""
    B, C, H, W = x.shape
    h, w = H // PATCH, W // PATCH
    n_patches = h * w
    t_real = n_patches + 1
    t_pad = _round_up(t_real, 8)
    k_raw = C * PATCH * PATCH
    k_pad = params["patch_w"].shape[0]

    # im2col for the stride=PATCH conv.
    # TODO(synk): this transpose stays a separate XLA op; a gather-style BlockSpec could pull
    # (PATCH, PATCH) tiles straight from NCHW but is unnecessary at these sizes.
    patches = x.reshape(B, C, h, PATCH, w, PATCH)
    patches = patches.transpose(0, 2, 4, 1, 3, 5).reshape(B, n_patches, k_raw)
    patches = jnp.pad(patches, ((0, 0), (0, 0), (0, k_pad - k_raw)))

    # Position table laid out for the kernel's token order (patch tokens first, CLS last,
    # zero pad).  Self-attention is permutation-equivariant, so this is numerically the
    # same computation as the reference's CLS-first ordering.
    # TODO(synk): real DINOv2 bicubically interpolates the pretrained pos grid; the
    # synthetic table is simply sliced.
    pos = params["pos"][0]
    pos_k = jnp.concatenate([pos[1:t_real], pos[0:1]], axis=0)
    pos_k = jnp.pad(pos_k, ((0, t_pad - t_real), (0, 0)))

    weights = (
        params["patch_w"], params["patch_b"], params["cls"], pos_k,
        params["ln1_g"], params["ln1_b"], params["qkv_w"], params["qkv_b"],
        params["out_w"], params["out_b"], params["ln2_g"], params["ln2_b"],
        params["fc1_w"], params["fc1_b"], params["fc2_w"], params["fc2_b"],
        params["lnf_g"], params["lnf_b"],
    )

    def rep_spec(a):
        zeros = (0,) * a.ndim
        return pl.BlockSpec(a.shape, lambda b, _z=zeros: _z)   # full block, VMEM-resident

    kernel = functools.partial(
        _dino_vit_kernel, n_patches=n_patches, t_real=t_real, t_pad=t_pad)

    out = pl.pallas_call(
        kernel,
        out_shape=jax.ShapeDtypeStruct((B, n_patches, HIDDEN), jnp.float32),
        grid=(B,),
        in_specs=[pl.BlockSpec((1, n_patches, k_pad), lambda b: (b, 0, 0))]
                 + [rep_spec(a) for a in weights],
        out_specs=pl.BlockSpec((1, n_patches, HIDDEN), lambda b: (b, 0, 0)),
        scratch_shapes=[pltpu.VMEM((t_pad, HIDDEN), jnp.float32)],
        compiler_params=pltpu.CompilerParams(dimension_semantics=("parallel",)),
    )(patches, *weights)

    return out.reshape(B, h, w, HIDDEN)   # 'b (h w) c -> b h w c'


if __name__ == "__main__":
    key = jax.random.PRNGKey(0)
    pk, xk = jax.random.split(key)
    params = init_params(pk)

    # Small image whose spatial dims are divisible by patch_size=14.
    x = jax.random.normal(xk, (2, C_IN, 56, 56), dtype=jnp.float32)

    fwd = jax.jit(dino_feature_pyramid)
    out = jax.block_until_ready(fwd(x, params))

    assert out.shape == (2, 4, 4, HIDDEN), out.shape
    assert out.dtype == jnp.float32
    assert bool(jnp.all(jnp.isfinite(out)))
    print("KERNEL_OK")
</pallas_src>

<mosaic_0001>
module attributes {stable_mosaic.version = 11 : i64} {
  func.func @_dino_vit_kernel(%arg0: i32, %arg1: memref<1x16x640xf32, #tpu.memory_space<vmem>>, %arg2: memref<640x64xbf16, #tpu.memory_space<vmem>>, %arg3: memref<1x64xf32, #tpu.memory_space<vmem>>, %arg4: memref<1x64xf32, #tpu.memory_space<vmem>>, %arg5: memref<24x64xf32, #tpu.memory_space<vmem>>, %arg6: memref<2x1x64xf32, #tpu.memory_space<vmem>>, %arg7: memref<2x1x64xf32, #tpu.memory_space<vmem>>, %arg8: memref<2x64x192xbf16, #tpu.memory_space<vmem>>, %arg9: memref<2x1x192xf32, #tpu.memory_space<vmem>>, %arg10: memref<2x64x64xbf16, #tpu.memory_space<vmem>>, %arg11: memref<2x1x64xf32, #tpu.memory_space<vmem>>, %arg12: memref<2x1x64xf32, #tpu.memory_space<vmem>>, %arg13: memref<2x1x64xf32, #tpu.memory_space<vmem>>, %arg14: memref<2x64x128xbf16, #tpu.memory_space<vmem>>, %arg15: memref<2x1x128xf32, #tpu.memory_space<vmem>>, %arg16: memref<2x128x64xbf16, #tpu.memory_space<vmem>>, %arg17: memref<2x1x64xf32, #tpu.memory_space<vmem>>, %arg18: memref<1x64xf32, #tpu.memory_space<vmem>>, %arg19: memref<1x64xf32, #tpu.memory_space<vmem>>, %arg20: memref<1x16x64xf32, #tpu.memory_space<vmem>>, %arg21: memref<24x64xf32, #tpu.memory_space<vmem>>) attributes {dimension_semantics = [#tpu.dimension_semantics<parallel>], iteration_bounds = array<i64: 2>, scalar_prefetch = 0 : i64, scratch_operands = 1 : i64, tpu.core_type = #tpu.core_type<tc>, window_params = [{transform_indices = @transform_0, window_bounds = array<i64: 1, 16, 640>}, {pipeline_mode = #tpu.pipeline_mode<synchronous>, transform_indices = @transform_1, window_bounds = array<i64: 640, 64>}, {pipeline_mode = #tpu.pipeline_mode<synchronous>, transform_indices = @transform_2, window_bounds = array<i64: 1, 64>}, {pipeline_mode = #tpu.pipeline_mode<synchronous>, transform_indices = @transform_3, window_bounds = array<i64: 1, 64>}, {pipeline_mode = #tpu.pipeline_mode<synchronous>, transform_indices = @transform_4, window_bounds = array<i64: 24, 64>}, {pipeline_mode = #tpu.pipeline_mode<synchronous>, transform_indices = @transform_5, window_bounds = array<i64: 2, 1, 64>}, {pipeline_mode = #tpu.pipeline_mode<synchronous>, transform_indices = @transform_6, window_bounds = array<i64: 2, 1, 64>}, {pipeline_mode = #tpu.pipeline_mode<synchronous>, transform_indices = @transform_7, window_bounds = array<i64: 2, 64, 192>}, {pipeline_mode = #tpu.pipeline_mode<synchronous>, transform_indices = @transform_8, window_bounds = array<i64: 2, 1, 192>}, {pipeline_mode = #tpu.pipeline_mode<synchronous>, transform_indices = @transform_9, window_bounds = array<i64: 2, 64, 64>}, {pipeline_mode = #tpu.pipeline_mode<synchronous>, transform_indices = @transform_10, window_bounds = array<i64: 2, 1, 64>}, {pipeline_mode = #tpu.pipeline_mode<synchronous>, transform_indices = @transform_11, window_bounds = array<i64: 2, 1, 64>}, {pipeline_mode = #tpu.pipeline_mode<synchronous>, transform_indices = @transform_12, window_bounds = array<i64: 2, 1, 64>}, {pipeline_mode = #tpu.pipeline_mode<synchronous>, transform_indices = @transform_13, window_bounds = array<i64: 2, 64, 128>}, {pipeline_mode = #tpu.pipeline_mode<synchronous>, transform_indices = @transform_14, window_bounds = array<i64: 2, 1, 128>}, {pipeline_mode = #tpu.pipeline_mode<synchronous>, transform_indices = @transform_15, window_bounds = array<i64: 2, 128, 64>}, {pipeline_mode = #tpu.pipeline_mode<synchronous>, transform_indices = @transform_16, window_bounds = array<i64: 2, 1, 64>}, {pipeline_mode = #tpu.pipeline_mode<synchronous>, transform_indices = @transform_17, window_bounds = array<i64: 1, 64>}, {pipeline_mode = #tpu.pipeline_mode<synchronous>, transform_indices = @transform_18, window_bounds = array<i64: 1, 64>}, {transform_indices = @transform_19, window_bounds = array<i64: 1, 16, 64>}]} {
    %c0 = arith.constant 0 : index
    %c0_0 = arith.constant 0 : index
    %c0_1 = arith.constant 0 : index
    %0 = vector.load %arg1[%c0, %c0_0, %c0_1] : memref<1x16x640xf32, #tpu.memory_space<vmem>>, vector<1x16x640xf32>
    %1 = vector.shape_cast %0 : vector<1x16x640xf32> to vector<16x640xf32>
    %2 = arith.truncf %1 : vector<16x640xf32> to vector<16x640xbf16>
    %c0_2 = arith.constant 0 : index
    %c0_3 = arith.constant 0 : index
    %3 = vector.load %arg2[%c0_2, %c0_3] : memref<640x64xbf16, #tpu.memory_space<vmem>>, vector<640x64xbf16>
    %cst = arith.constant dense<0.000000e+00> : vector<16x64xf32>
    %4 = tpu.matmul %2, %3, %cst {dimension_numbers = #tpu.dot_dimension_numbers<[1], [0], [0], [1], [0, 0, 1, 1], [], []>} : vector<16x640xbf16>, vector<640x64xbf16>, vector<16x64xf32> -> vector<16x64xf32>
    %c0_4 = arith.constant 0 : index
    %c0_5 = arith.constant 0 : index
    %5 = vector.load %arg3[%c0_4, %c0_5] : memref<1x64xf32, #tpu.memory_space<vmem>>, vector<1x64xf32>
    %6 = vector.broadcast %5 : vector<1x64xf32> to vector<16x64xf32>
    %7 = arith.addf %4, %6 : vector<16x64xf32>
    %cst_6 = arith.constant 0.000000e+00 : f32
    %8 = vector.broadcast %cst_6 : f32 to vector<24x64xf32>
    %c0_7 = arith.constant 0 : index
    %c0_8 = arith.constant 0 : index
    %9 = vector.load %arg21[%c0_7, %c0_8] : memref<24x64xf32, #tpu.memory_space<vmem>>, vector<24x64xf32>
    tpu.vector_store %arg21[%c0_7, %c0_8], %8 {strides = array<i32>} : memref<24x64xf32, #tpu.memory_space<vmem>>, vector<24x64xf32>,
    %c0_9 = arith.constant 0 : index
    %c0_10 = arith.constant 0 : index
    %10 = vector.load %arg21[%c0_9, %c0_10] : memref<24x64xf32, #tpu.memory_space<vmem>>, vector<16x64xf32>
    tpu.vector_store %arg21[%c0_9, %c0_10], %7 {strides = array<i32>} : memref<24x64xf32, #tpu.memory_space<vmem>>, vector<16x64xf32>,
    %c0_11 = arith.constant 0 : index
    %c0_12 = arith.constant 0 : index
    %11 = vector.load %arg4[%c0_11, %c0_12] : memref<1x64xf32, #tpu.memory_space<vmem>>, vector<1x64xf32>
    %c16 = arith.constant 16 : index
    %c0_13 = arith.constant 0 : index
    %12 = vector.load %arg21[%c16, %c0_13] : memref<24x64xf32, #tpu.memory_space<vmem>>, vector<1x64xf32>
    tpu.vector_store %arg21[%c16, %c0_13], %11 {strides = array<i32>} : memref<24x64xf32, #tpu.memory_space<vmem>>, vector<1x64xf32>,
    %c0_14 = arith.constant 0 : index
    %c0_15 = arith.constant 0 : index
    %13 = vector.load %arg21[%c0_14, %c0_15] : memref<24x64xf32, #tpu.memory_space<vmem>>, vector<24x64xf32>
    %c0_16 = arith.constant 0 : index
    %c0_17 = arith.constant 0 : index
    %14 = vector.load %arg5[%c0_16, %c0_17] : memref<24x64xf32, #tpu.memory_space<vmem>>, vector<24x64xf32>
    %15 = arith.addf %13, %14 : vector<24x64xf32>
    %16 = tpu.iota {dimensions = array<i32: 1>} : vector<24x24xi32>
    %c17_i32 = arith.constant 17 : i32
    %17 = vector.broadcast %c17_i32 : i32 to vector<24x24xi32>
    %18 = arith.cmpi slt, %16, %17 : vector<24x24xi32>
    %c0_18 = arith.constant 0 : index
    %c0_19 = arith.constant 0 : index
    %c0_20 = arith.constant 0 : index
    %19 = vector.load %arg6[%c0_18, %c0_19, %c0_20] : memref<2x1x64xf32, #tpu.memory_space<vmem>>, vector<1x1x64xf32>
    %20 = vector.shape_cast %19 : vector<1x1x64xf32> to vector<1x64xf32>
    %c0_21 = arith.constant 0 : index
    %c0_22 = arith.constant 0 : index
    %c0_23 = arith.constant 0 : index
    %21 = vector.load %arg7[%c0_21, %c0_22, %c0_23] : memref<2x1x64xf32, #tpu.memory_space<vmem>>, vector<1x1x64xf32>
    %22 = vector.shape_cast %21 : vector<1x1x64xf32> to vector<1x64xf32>
    %cst_24 = arith.constant dense<0.000000e+00> : vector<24xf32>
    %23 = vector.multi_reduction <add>, %15, %cst_24 [1] : vector<24x64xf32> to vector<24xf32>
    %24 = vector.shape_cast %23 : vector<24xf32> to vector<24x1xf32>
    %cst_25 = arith.constant 6.400000e+01 : f32
    %25 = vector.broadcast %cst_25 : f32 to vector<24x1xf32>
    %26 = arith.divf %24, %25 : vector<24x1xf32>
    %27 = vector.broadcast %26 : vector<24x1xf32> to vector<24x64xf32>
    %28 = arith.subf %15, %27 : vector<24x64xf32>
    %29 = arith.mulf %28, %28 : vector<24x64xf32>
    %cst_26 = arith.constant dense<0.000000e+00> : vector<24xf32>
    %30 = vector.multi_reduction <add>, %29, %cst_26 [1] : vector<24x64xf32> to vector<24xf32>
    %31 = vector.shape_cast %30 : vector<24xf32> to vector<24x1xf32>
    %cst_27 = arith.constant 6.400000e+01 : f32
    %32 = vector.broadcast %cst_27 : f32 to vector<24x1xf32>
    %33 = arith.divf %31, %32 : vector<24x1xf32>
    %34 = vector.broadcast %26 : vector<24x1xf32> to vector<24x64xf32>
    %35 = arith.subf %15, %34 : vector<24x64xf32>
    %cst_28 = arith.constant 9.99999997E-7 : f32
    %36 = vector.broadcast %cst_28 : f32 to vector<24x1xf32>
    %37 = arith.addf %33, %36 : vector<24x1xf32>
    %38 = math.rsqrt %37 : vector<24x1xf32>
    %39 = vector.broadcast %38 : vector<24x1xf32> to vector<24x64xf32>
    %40 = arith.mulf %35, %39 : vector<24x64xf32>
    %41 = vector.broadcast %20 : vector<1x64xf32> to vector<24x64xf32>
    %42 = arith.mulf %40, %41 : vector<24x64xf32>
    %43 = vector.broadcast %22 : vector<1x64xf32> to vector<24x64xf32>
    %44 = arith.addf %42, %43 : vector<24x64xf32>
    %45 = arith.truncf %44 : vector<24x64xf32> to vector<24x64xbf16>
    %c0_29 = arith.constant 0 : index
    %c0_30 = arith.constant 0 : index
    %c0_31 = arith.constant 0 : index
    %46 = vector.load %arg8[%c0_29, %c0_30, %c0_31] : memref<2x64x192xbf16, #tpu.memory_space<vmem>>, vector<1x64x192xbf16>
    %47 = vector.shape_cast %46 : vector<1x64x192xbf16> to vector<64x192xbf16>
    %cst_32 = arith.constant dense<0.000000e+00> : vector<24x192xf32>
    %48 = tpu.matmul %45, %47, %cst_32 {dimension_numbers = #tpu.dot_dimension_numbers<[1], [0], [0], [1], [0, 0, 1, 1], [], []>} : vector<24x64xbf16>, vector<64x192xbf16>, vector<24x192xf32> -> vector<24x192xf32>
    %c0_33 = arith.constant 0 : index
    %c0_34 = arith.constant 0 : index
    %c0_35 = arith.constant 0 : index
    %49 = vector.load %arg9[%c0_33, %c0_34, %c0_35] : memref<2x1x192xf32, #tpu.memory_space<vmem>>, vector<1x1x192xf32>
    %50 = vector.shape_cast %49 : vector<1x1x192xf32> to vector<1x192xf32>
    %51 = vector.broadcast %50 : vector<1x192xf32> to vector<24x192xf32>
    %52 = arith.addf %48, %51 : vector<24x192xf32>
    %c0_36 = arith.constant 0 : index
    %c0_37 = arith.constant 0 : index
    %c0_38 = arith.constant 0 : index
    %53 = vector.load %arg10[%c0_36, %c0_37, %c0_38] : memref<2x64x64xbf16, #tpu.memory_space<vmem>>, vector<1x64x64xbf16>
    %54 = vector.shape_cast %53 : vector<1x64x64xbf16> to vector<64x64xbf16>
    %cst_39 = arith.constant 0.000000e+00 : f32
    %55 = vector.broadcast %cst_39 : f32 to vector<24x64xf32>
    %56 = vector.extract_strided_slice %52 {offsets = [0, 0], sizes = [24, 32], strides = [1, 1]} : vector<24x192xf32> to vector<24x32xf32>
    %57 = arith.truncf %56 : vector<24x32xf32> to vector<24x32xbf16>
    %58 = vector.extract_strided_slice %52 {offsets = [0, 64], sizes = [24, 32], strides = [1, 1]} : vector<24x192xf32> to vector<24x32xf32>
    %59 = arith.truncf %58 : vector<24x32xf32> to vector<24x32xbf16>
    %60 = vector.extract_strided_slice %52 {offsets = [0, 128], sizes = [24, 32], strides = [1, 1]} : vector<24x192xf32> to vector<24x32xf32>
    %61 = arith.truncf %60 : vector<24x32xf32> to vector<24x32xbf16>
    %cst_40 = arith.constant dense<0.000000e+00> : vector<24x24xf32>
    %62 = tpu.matmul %57, %59, %cst_40 {dimension_numbers = #tpu.dot_dimension_numbers<[1], [1], [0], [0], [0, 0, 1, 0], [], []>} : vector<24x32xbf16>, vector<24x32xbf16>, vector<24x24xf32> -> vector<24x24xf32>
    %cst_41 = arith.constant 0.176776692 : f32
    %63 = vector.broadcast %cst_41 : f32 to vector<24x24xf32>
    %64 = arith.mulf %62, %63 : vector<24x24xf32>
    %cst_42 = arith.constant -1.000000e+30 : f32
    %65 = vector.broadcast %cst_42 : f32 to vector<24x24xf32>
    %66 = arith.select %18, %64, %65 : vector<24x24xi1>, vector<24x24xf32>
    %cst_43 = arith.constant dense<0xFF800000> : vector<24xf32>
    %67 = vector.multi_reduction <maximumf>, %66, %cst_43 [1] : vector<24x24xf32> to vector<24xf32>
    %68 = vector.shape_cast %67 : vector<24xf32> to vector<24x1xf32>
    %69 = vector.broadcast %68 : vector<24x1xf32> to vector<24x24xf32>
    %70 = arith.subf %66, %69 : vector<24x24xf32>
    %71 = math.exp %70 : vector<24x24xf32>
    %cst_44 = arith.constant dense<0.000000e+00> : vector<24xf32>
    %72 = vector.multi_reduction <add>, %71, %cst_44 [1] : vector<24x24xf32> to vector<24xf32>
    %73 = vector.shape_cast %72 : vector<24xf32> to vector<24x1xf32>
    %74 = tpu.reciprocal %73 {approx = true} : vector<24x1xf32> -> vector<24x1xf32>
    %75 = vector.broadcast %74 : vector<24x1xf32> to vector<24x24xf32>
    %76 = arith.mulf %71, %75 : vector<24x24xf32>
    %77 = arith.truncf %76 : vector<24x24xf32> to vector<24x24xbf16>
    %cst_45 = arith.constant dense<0.000000e+00> : vector<24x32xf32>
    %78 = tpu.matmul %77, %61, %cst_45 {dimension_numbers = #tpu.dot_dimension_numbers<[1], [0], [0], [1], [0, 0, 1, 1], [], []>} : vector<24x24xbf16>, vector<24x32xbf16>, vector<24x32xf32> -> vector<24x32xf32>
    %79 = arith.truncf %78 : vector<24x32xf32> to vector<24x32xbf16>
    %80 = vector.extract_strided_slice %54 {offsets = [0, 0], sizes = [32, 64], strides = [1, 1]} : vector<64x64xbf16> to vector<32x64xbf16>
    %cst_46 = arith.constant dense<0.000000e+00> : vector<24x64xf32>
    %81 = tpu.matmul %79, %80, %cst_46 {dimension_numbers = #tpu.dot_dimension_numbers<[1], [0], [0], [1], [0, 0, 1, 1], [], []>} : vector<24x32xbf16>, vector<32x64xbf16>, vector<24x64xf32> -> vector<24x64xf32>
    %82 = arith.addf %55, %81 : vector<24x64xf32>
    %83 = vector.extract_strided_slice %52 {offsets = [0, 32], sizes = [24, 32], strides = [1, 1]} : vector<24x192xf32> to vector<24x32xf32>
    %84 = arith.truncf %83 : vector<24x32xf32> to vector<24x32xbf16>
    %85 = vector.extract_strided_slice %52 {offsets = [0, 96], sizes = [24, 32], strides = [1, 1]} : vector<24x192xf32> to vector<24x32xf32>
    %86 = arith.truncf %85 : vector<24x32xf32> to vector<24x32xbf16>
    %87 = vector.extract_strided_slice %52 {offsets = [0, 160], sizes = [24, 32], strides = [1, 1]} : vector<24x192xf32> to vector<24x32xf32>
    %88 = arith.truncf %87 : vector<24x32xf32> to vector<24x32xbf16>
    %cst_47 = arith.constant dense<0.000000e+00> : vector<24x24xf32>
    %89 = tpu.matmul %84, %86, %cst_47 {dimension_numbers = #tpu.dot_dimension_numbers<[1], [1], [0], [0], [0, 0, 1, 0], [], []>} : vector<24x32xbf16>, vector<24x32xbf16>, vector<24x24xf32> -> vector<24x24xf32>
    %cst_48 = arith.constant 0.176776692 : f32
    %90 = vector.broadcast %cst_48 : f32 to vector<24x24xf32>
    %91 = arith.mulf %89, %90 : vector<24x24xf32>
    %cst_49 = arith.constant -1.000000e+30 : f32
    %92 = vector.broadcast %cst_49 : f32 to vector<24x24xf32>
    %93 = arith.select %18, %91, %92 : vector<24x24xi1>, vector<24x24xf32>
    %cst_50 = arith.constant dense<0xFF800000> : vector<24xf32>
    %94 = vector.multi_reduction <maximumf>, %93, %cst_50 [1] : vector<24x24xf32> to vector<24xf32>
    %95 = vector.shape_cast %94 : vector<24xf32> to vector<24x1xf32>
    %96 = vector.broadcast %95 : vector<24x1xf32> to vector<24x24xf32>
    %97 = arith.subf %93, %96 : vector<24x24xf32>
    %98 = math.exp %97 : vector<24x24xf32>
    %cst_51 = arith.constant dense<0.000000e+00> : vector<24xf32>
    %99 = vector.multi_reduction <add>, %98, %cst_51 [1] : vector<24x24xf32> to vector<24xf32>
    %100 = vector.shape_cast %99 : vector<24xf32> to vector<24x1xf32>
    %101 = tpu.reciprocal %100 {approx = true} : vector<24x1xf32> -> vector<24x1xf32>
    %102 = vector.broadcast %101 : vector<24x1xf32> to vector<24x24xf32>
    %103 = arith.mulf %98, %102 : vector<24x24xf32>
    %104 = arith.truncf %103 : vector<24x24xf32> to vector<24x24xbf16>
    %cst_52 = arith.constant dense<0.000000e+00> : vector<24x32xf32>
    %105 = tpu.matmul %104, %88, %cst_52 {dimension_numbers = #tpu.dot_dimension_numbers<[1], [0], [0], [1], [0, 0, 1, 1], [], []>} : vector<24x24xbf16>, vector<24x32xbf16>, vector<24x32xf32> -> vector<24x32xf32>
    %106 = arith.truncf %105 : vector<24x32xf32> to vector<24x32xbf16>
    %107 = vector.extract_strided_slice %54 {offsets = [32, 0], sizes = [32, 64], strides = [1, 1]} : vector<64x64xbf16> to vector<32x64xbf16>
    %cst_53 = arith.constant dense<0.000000e+00> : vector<24x64xf32>
    %108 = tpu.matmul %106, %107, %cst_53 {dimension_numbers = #tpu.dot_dimension_numbers<[1], [0], [0], [1], [0, 0, 1, 1], [], []>} : vector<24x32xbf16>, vector<32x64xbf16>, vector<24x64xf32> -> vector<24x64xf32>
    %109 = arith.addf %82, %108 : vector<24x64xf32>
    %110 = arith.addf %15, %109 : vector<24x64xf32>
    %c0_54 = arith.constant 0 : index
    %c0_55 = arith.constant 0 : index
    %c0_56 = arith.constant 0 : index
    %111 = vector.load %arg11[%c0_54, %c0_55, %c0_56] : memref<2x1x64xf32, #tpu.memory_space<vmem>>, vector<1x1x64xf32>
    %112 = vector.shape_cast %111 : vector<1x1x64xf32> to vector<1x64xf32>
    %113 = vector.broadcast %112 : vector<1x64xf32> to vector<24x64xf32>
    %114 = arith.addf %110, %113 : vector<24x64xf32>
    %c0_57 = arith.constant 0 : index
    %c0_58 = arith.constant 0 : index
    %c0_59 = arith.constant 0 : index
    %115 = vector.load %arg12[%c0_57, %c0_58, %c0_59] : memref<2x1x64xf32, #tpu.memory_space<vmem>>, vector<1x1x64xf32>
    %116 = vector.shape_cast %115 : vector<1x1x64xf32> to vector<1x64xf32>
    %c0_60 = arith.constant 0 : index
    %c0_61 = arith.constant 0 : index
    %c0_62 = arith.constant 0 : index
    %117 = vector.load %arg13[%c0_60, %c0_61, %c0_62] : memref<2x1x64xf32, #tpu.memory_space<vmem>>, vector<1x1x64xf32>
    %118 = vector.shape_cast %117 : vector<1x1x64xf32> to vector<1x64xf32>
    %cst_63 = arith.constant dense<0.000000e+00> : vector<24xf32>
    %119 = vector.multi_reduction <add>, %114, %cst_63 [1] : vector<24x64xf32> to vector<24xf32>
    %120 = vector.shape_cast %119 : vector<24xf32> to vector<24x1xf32>
    %cst_64 = arith.constant 6.400000e+01 : f32
    %121 = vector.broadcast %cst_64 : f32 to vector<24x1xf32>
    %122 = arith.divf %120, %121 : vector<24x1xf32>
    %123 = vector.broadcast %122 : vector<24x1xf32> to vector<24x64xf32>
    %124 = arith.subf %114, %123 : vector<24x64xf32>
    %125 = arith.mulf %124, %124 : vector<24x64xf32>
    %cst_65 = arith.constant dense<0.000000e+00> : vector<24xf32>
    %126 = vector.multi_reduction <add>, %125, %cst_65 [1] : vector<24x64xf32> to vector<24xf32>
    %127 = vector.shape_cast %126 : vector<24xf32> to vector<24x1xf32>
    %cst_66 = arith.constant 6.400000e+01 : f32
    %128 = vector.broadcast %cst_66 : f32 to vector<24x1xf32>
    %129 = arith.divf %127, %128 : vector<24x1xf32>
    %130 = vector.broadcast %122 : vector<24x1xf32> to vector<24x64xf32>
    %131 = arith.subf %114, %130 : vector<24x64xf32>
    %cst_67 = arith.constant 9.99999997E-7 : f32
    %132 = vector.broadcast %cst_67 : f32 to vector<24x1xf32>
    %133 = arith.addf %129, %132 : vector<24x1xf32>
    %134 = math.rsqrt %133 : vector<24x1xf32>
    %135 = vector.broadcast %134 : vector<24x1xf32> to vector<24x64xf32>
    %136 = arith.mulf %131, %135 : vector<24x64xf32>
    %137 = vector.broadcast %116 : vector<1x64xf32> to vector<24x64xf32>
    %138 = arith.mulf %136, %137 : vector<24x64xf32>
    %139 = vector.broadcast %118 : vector<1x64xf32> to vector<24x64xf32>
    %140 = arith.addf %138, %139 : vector<24x64xf32>
    %141 = arith.truncf %140 : vector<24x64xf32> to vector<24x64xbf16>
    %c0_68 = arith.constant 0 : index
    %c0_69 = arith.constant 0 : index
    %c0_70 = arith.constant 0 : index
    %142 = vector.load %arg14[%c0_68, %c0_69, %c0_70] : memref<2x64x128xbf16, #tpu.memory_space<vmem>>, vector<1x64x128xbf16>
    %143 = vector.shape_cast %142 : vector<1x64x128xbf16> to vector<64x128xbf16>
    %cst_71 = arith.constant dense<0.000000e+00> : vector<24x128xf32>
    %144 = tpu.matmul %141, %143, %cst_71 {dimension_numbers = #tpu.dot_dimension_numbers<[1], [0], [0], [1], [0, 0, 1, 1], [], []>} : vector<24x64xbf16>, vector<64x128xbf16>, vector<24x128xf32> -> vector<24x128xf32>
    %c0_72 = arith.constant 0 : index
    %c0_73 = arith.constant 0 : index
    %c0_74 = arith.constant 0 : index
    %145 = vector.load %arg15[%c0_72, %c0_73, %c0_74] : memref<2x1x128xf32, #tpu.memory_space<vmem>>, vector<1x1x128xf32>
    %146 = vector.shape_cast %145 : vector<1x1x128xf32> to vector<1x128xf32>
    %147 = vector.broadcast %146 : vector<1x128xf32> to vector<24x128xf32>
    %148 = arith.addf %144, %147 : vector<24x128xf32>
    %149 = arith.mulf %148, %148 : vector<24x128xf32>
    %150 = arith.mulf %148, %149 : vector<24x128xf32>
    %cst_75 = arith.constant 4.471500e-02 : f32
    %151 = vector.broadcast %cst_75 : f32 to vector<24x128xf32>
    %152 = arith.mulf %151, %150 : vector<24x128xf32>
    %153 = arith.addf %148, %152 : vector<24x128xf32>
    %cst_76 = arith.constant 0.797884583 : f32
    %154 = vector.broadcast %cst_76 : f32 to vector<24x128xf32>
    %155 = arith.mulf %154, %153 : vector<24x128xf32>
    %156 = math.tanh %155 : vector<24x128xf32>
    %cst_77 = arith.constant 1.000000e+00 : f32
    %157 = vector.broadcast %cst_77 : f32 to vector<24x128xf32>
    %158 = arith.addf %157, %156 : vector<24x128xf32>
    %cst_78 = arith.constant 5.000000e-01 : f32
    %159 = vector.broadcast %cst_78 : f32 to vector<24x128xf32>
    %160 = arith.mulf %159, %158 : vector<24x128xf32>
    %161 = arith.mulf %148, %160 : vector<24x128xf32>
    %162 = arith.truncf %161 : vector<24x128xf32> to vector<24x128xbf16>
    %c0_79 = arith.constant 0 : index
    %c0_80 = arith.constant 0 : index
    %c0_81 = arith.constant 0 : index
    %163 = vector.load %arg16[%c0_79, %c0_80, %c0_81] : memref<2x128x64xbf16, #tpu.memory_space<vmem>>, vector<1x128x64xbf16>
    %164 = vector.shape_cast %163 : vector<1x128x64xbf16> to vector<128x64xbf16>
    %cst_82 = arith.constant dense<0.000000e+00> : vector<24x64xf32>
    %165 = tpu.matmul %162, %164, %cst_82 {dimension_numbers = #tpu.dot_dimension_numbers<[1], [0], [0], [1], [0, 0, 1, 1], [], []>} : vector<24x128xbf16>, vector<128x64xbf16>, vector<24x64xf32> -> vector<24x64xf32>
    %166 = arith.addf %114, %165 : vector<24x64xf32>
    %c0_83 = arith.constant 0 : index
    %c0_84 = arith.constant 0 : index
    %c0_85 = arith.constant 0 : index
    %167 = vector.load %arg17[%c0_83, %c0_84, %c0_85] : memref<2x1x64xf32, #tpu.memory_space<vmem>>, vector<1x1x64xf32>
    %168 = vector.shape_cast %167 : vector<1x1x64xf32> to vector<1x64xf32>
    %169 = vector.broadcast %168 : vector<1x64xf32> to vector<24x64xf32>
    %170 = arith.addf %166, %169 : vector<24x64xf32>
    %c1 = arith.constant 1 : index
    %c0_86 = arith.constant 0 : index
    %c0_87 = arith.constant 0 : index
    %171 = vector.load %arg6[%c1, %c0_86, %c0_87] : memref<2x1x64xf32, #tpu.memory_space<vmem>>, vector<1x1x64xf32>
    %172 = vector.shape_cast %171 : vector<1x1x64xf32> to vector<1x64xf32>
    %c1_88 = arith.constant 1 : index
    %c0_89 = arith.constant 0 : index
    %c0_90 = arith.constant 0 : index
    %173 = vector.load %arg7[%c1_88, %c0_89, %c0_90] : memref<2x1x64xf32, #tpu.memory_space<vmem>>, vector<1x1x64xf32>
    %174 = vector.shape_cast %173 : vector<1x1x64xf32> to vector<1x64xf32>
    %cst_91 = arith.constant dense<0.000000e+00> : vector<24xf32>
    %175 = vector.multi_reduction <add>, %170, %cst_91 [1] : vector<24x64xf32> to vector<24xf32>
    %176 = vector.shape_cast %175 : vector<24xf32> to vector<24x1xf32>
    %cst_92 = arith.constant 6.400000e+01 : f32
    %177 = vector.broadcast %cst_92 : f32 to vector<24x1xf32>
    %178 = arith.divf %176, %177 : vector<24x1xf32>
    %179 = vector.broadcast %178 : vector<24x1xf32> to vector<24x64xf32>
    %180 = arith.subf %170, %179 : vector<24x64xf32>
    %181 = arith.mulf %180, %180 : vector<24x64xf32>
    %cst_93 = arith.constant dense<0.000000e+00> : vector<24xf32>
    %182 = vector.multi_reduction <add>, %181, %cst_93 [1] : vector<24x64xf32> to vector<24xf32>
    %183 = vector.shape_cast %182 : vector<24xf32> to vector<24x1xf32>
    %cst_94 = arith.constant 6.400000e+01 : f32
    %184 = vector.broadcast %cst_94 : f32 to vector<24x1xf32>
    %185 = arith.divf %183, %184 : vector<24x1xf32>
    %186 = vector.broadcast %178 : vector<24x1xf32> to vector<24x64xf32>
    %187 = arith.subf %170, %186 : vector<24x64xf32>
    %cst_95 = arith.constant 9.99999997E-7 : f32
    %188 = vector.broadcast %cst_95 : f32 to vector<24x1xf32>
    %189 = arith.addf %185, %188 : vector<24x1xf32>
    %190 = math.rsqrt %189 : vector<24x1xf32>
    %191 = vector.broadcast %190 : vector<24x1xf32> to vector<24x64xf32>
    %192 = arith.mulf %187, %191 : vector<24x64xf32>
    %193 = vector.broadcast %172 : vector<1x64xf32> to vector<24x64xf32>
    %194 = arith.mulf %192, %193 : vector<24x64xf32>
    %195 = vector.broadcast %174 : vector<1x64xf32> to vector<24x64xf32>
    %196 = arith.addf %194, %195 : vector<24x64xf32>
    %197 = arith.truncf %196 : vector<24x64xf32> to vector<24x64xbf16>
    %c1_96 = arith.constant 1 : index
    %c0_97 = arith.constant 0 : index
    %c0_98 = arith.constant 0 : index
    %198 = vector.load %arg8[%c1_96, %c0_97, %c0_98] : memref<2x64x192xbf16, #tpu.memory_space<vmem>>, vector<1x64x192xbf16>
    %199 = vector.shape_cast %198 : vector<1x64x192xbf16> to vector<64x192xbf16>
    %cst_99 = arith.constant dense<0.000000e+00> : vector<24x192xf32>
    %200 = tpu.matmul %197, %199, %cst_99 {dimension_numbers = #tpu.dot_dimension_numbers<[1], [0], [0], [1], [0, 0, 1, 1], [], []>} : vector<24x64xbf16>, vector<64x192xbf16>, vector<24x192xf32> -> vector<24x192xf32>
    %c1_100 = arith.constant 1 : index
    %c0_101 = arith.constant 0 : index
    %c0_102 = arith.constant 0 : index
    %201 = vector.load %arg9[%c1_100, %c0_101, %c0_102] : memref<2x1x192xf32, #tpu.memory_space<vmem>>, vector<1x1x192xf32>
    %202 = vector.shape_cast %201 : vector<1x1x192xf32> to vector<1x192xf32>
    %203 = vector.broadcast %202 : vector<1x192xf32> to vector<24x192xf32>
    %204 = arith.addf %200, %203 : vector<24x192xf32>
    %c1_103 = arith.constant 1 : index
    %c0_104 = arith.constant 0 : index
    %c0_105 = arith.constant 0 : index
    %205 = vector.load %arg10[%c1_103, %c0_104, %c0_105] : memref<2x64x64xbf16, #tpu.memory_space<vmem>>, vector<1x64x64xbf16>
    %206 = vector.shape_cast %205 : vector<1x64x64xbf16> to vector<64x64xbf16>
    %cst_106 = arith.constant 0.000000e+00 : f32
    %207 = vector.broadcast %cst_106 : f32 to vector<24x64xf32>
    %208 = vector.extract_strided_slice %204 {offsets = [0, 0], sizes = [24, 32], strides = [1, 1]} : vector<24x192xf32> to vector<24x32xf32>
    %209 = arith.truncf %208 : vector<24x32xf32> to vector<24x32xbf16>
    %210 = vector.extract_strided_slice %204 {offsets = [0, 64], sizes = [24, 32], strides = [1, 1]} : vector<24x192xf32> to vector<24x32xf32>
    %211 = arith.truncf %210 : vector<24x32xf32> to vector<24x32xbf16>
    %212 = vector.extract_strided_slice %204 {offsets = [0, 128], sizes = [24, 32], strides = [1, 1]} : vector<24x192xf32> to vector<24x32xf32>
    %213 = arith.truncf %212 : vector<24x32xf32> to vector<24x32xbf16>
    %cst_107 = arith.constant dense<0.000000e+00> : vector<24x24xf32>
    %214 = tpu.matmul %209, %211, %cst_107 {dimension_numbers = #tpu.dot_dimension_numbers<[1], [1], [0], [0], [0, 0, 1, 0], [], []>} : vector<24x32xbf16>, vector<24x32xbf16>, vector<24x24xf32> -> vector<24x24xf32>
    %cst_108 = arith.constant 0.176776692 : f32
    %215 = vector.broadcast %cst_108 : f32 to vector<24x24xf32>
    %216 = arith.mulf %214, %215 : vector<24x24xf32>
    %cst_109 = arith.constant -1.000000e+30 : f32
    %217 = vector.broadcast %cst_109 : f32 to vector<24x24xf32>
    %218 = arith.select %18, %216, %217 : vector<24x24xi1>, vector<24x24xf32>
    %cst_110 = arith.constant dense<0xFF800000> : vector<24xf32>
    %219 = vector.multi_reduction <maximumf>, %218, %cst_110 [1] : vector<24x24xf32> to vector<24xf32>
    %220 = vector.shape_cast %219 : vector<24xf32> to vector<24x1xf32>
    %221 = vector.broadcast %220 : vector<24x1xf32> to vector<24x24xf32>
    %222 = arith.subf %218, %221 : vector<24x24xf32>
    %223 = math.exp %222 : vector<24x24xf32>
    %cst_111 = arith.constant dense<0.000000e+00> : vector<24xf32>
    %224 = vector.multi_reduction <add>, %223, %cst_111 [1] : vector<24x24xf32> to vector<24xf32>
    %225 = vector.shape_cast %224 : vector<24xf32> to vector<24x1xf32>
    %226 = tpu.reciprocal %225 {approx = true} : vector<24x1xf32> -> vector<24x1xf32>
    %227 = vector.broadcast %226 : vector<24x1xf32> to vector<24x24xf32>
    %228 = arith.mulf %223, %227 : vector<24x24xf32>
    %229 = arith.truncf %228 : vector<24x24xf32> to vector<24x24xbf16>
    %cst_112 = arith.constant dense<0.000000e+00> : vector<24x32xf32>
    %230 = tpu.matmul %229, %213, %cst_112 {dimension_numbers = #tpu.dot_dimension_numbers<[1], [0], [0], [1], [0, 0, 1, 1], [], []>} : vector<24x24xbf16>, vector<24x32xbf16>, vector<24x32xf32> -> vector<24x32xf32>
    %231 = arith.truncf %230 : vector<24x32xf32> to vector<24x32xbf16>
    %232 = vector.extract_strided_slice %206 {offsets = [0, 0], sizes = [32, 64], strides = [1, 1]} : vector<64x64xbf16> to vector<32x64xbf16>
    %cst_113 = arith.constant dense<0.000000e+00> : vector<24x64xf32>
    %233 = tpu.matmul %231, %232, %cst_113 {dimension_numbers = #tpu.dot_dimension_numbers<[1], [0], [0], [1], [0, 0, 1, 1], [], []>} : vector<24x32xbf16>, vector<32x64xbf16>, vector<24x64xf32> -> vector<24x64xf32>
    %234 = arith.addf %207, %233 : vector<24x64xf32>
    %235 = vector.extract_strided_slice %204 {offsets = [0, 32], sizes = [24, 32], strides = [1, 1]} : vector<24x192xf32> to vector<24x32xf32>
    %236 = arith.truncf %235 : vector<24x32xf32> to vector<24x32xbf16>
    %237 = vector.extract_strided_slice %204 {offsets = [0, 96], sizes = [24, 32], strides = [1, 1]} : vector<24x192xf32> to vector<24x32xf32>
    %238 = arith.truncf %237 : vector<24x32xf32> to vector<24x32xbf16>
    %239 = vector.extract_strided_slice %204 {offsets = [0, 160], sizes = [24, 32], strides = [1, 1]} : vector<24x192xf32> to vector<24x32xf32>
    %240 = arith.truncf %239 : vector<24x32xf32> to vector<24x32xbf16>
    %cst_114 = arith.constant dense<0.000000e+00> : vector<24x24xf32>
    %241 = tpu.matmul %236, %238, %cst_114 {dimension_numbers = #tpu.dot_dimension_numbers<[1], [1], [0], [0], [0, 0, 1, 0], [], []>} : vector<24x32xbf16>, vector<24x32xbf16>, vector<24x24xf32> -> vector<24x24xf32>
    %cst_115 = arith.constant 0.176776692 : f32
    %242 = vector.broadcast %cst_115 : f32 to vector<24x24xf32>
    %243 = arith.mulf %241, %242 : vector<24x24xf32>
    %cst_116 = arith.constant -1.000000e+30 : f32
    %244 = vector.broadcast %cst_116 : f32 to vector<24x24xf32>
    %245 = arith.select %18, %243, %244 : vector<24x24xi1>, vector<24x24xf32>
    %cst_117 = arith.constant dense<0xFF800000> : vector<24xf32>
    %246 = vector.multi_reduction <maximumf>, %245, %cst_117 [1] : vector<24x24xf32> to vector<24xf32>
    %247 = vector.shape_cast %246 : vector<24xf32> to vector<24x1xf32>
    %248 = vector.broadcast %247 : vector<24x1xf32> to vector<24x24xf32>
    %249 = arith.subf %245, %248 : vector<24x24xf32>
    %250 = math.exp %249 : vector<24x24xf32>
    %cst_118 = arith.constant dense<0.000000e+00> : vector<24xf32>
    %251 = vector.multi_reduction <add>, %250, %cst_118 [1] : vector<24x24xf32> to vector<24xf32>
    %252 = vector.shape_cast %251 : vector<24xf32> to vector<24x1xf32>
    %253 = tpu.reciprocal %252 {approx = true} : vector<24x1xf32> -> vector<24x1xf32>
    %254 = vector.broadcast %253 : vector<24x1xf32> to vector<24x24xf32>
    %255 = arith.mulf %250, %254 : vector<24x24xf32>
    %256 = arith.truncf %255 : vector<24x24xf32> to vector<24x24xbf16>
    %cst_119 = arith.constant dense<0.000000e+00> : vector<24x32xf32>
    %257 = tpu.matmul %256, %240, %cst_119 {dimension_numbers = #tpu.dot_dimension_numbers<[1], [0], [0], [1], [0, 0, 1, 1], [], []>} : vector<24x24xbf16>, vector<24x32xbf16>, vector<24x32xf32> -> vector<24x32xf32>
    %258 = arith.truncf %257 : vector<24x32xf32> to vector<24x32xbf16>
    %259 = vector.extract_strided_slice %206 {offsets = [32, 0], sizes = [32, 64], strides = [1, 1]} : vector<64x64xbf16> to vector<32x64xbf16>
    %cst_120 = arith.constant dense<0.000000e+00> : vector<24x64xf32>
    %260 = tpu.matmul %258, %259, %cst_120 {dimension_numbers = #tpu.dot_dimension_numbers<[1], [0], [0], [1], [0, 0, 1, 1], [], []>} : vector<24x32xbf16>, vector<32x64xbf16>, vector<24x64xf32> -> vector<24x64xf32>
    %261 = arith.addf %234, %260 : vector<24x64xf32>
    %262 = arith.addf %170, %261 : vector<24x64xf32>
    %c1_121 = arith.constant 1 : index
    %c0_122 = arith.constant 0 : index
    %c0_123 = arith.constant 0 : index
    %263 = vector.load %arg11[%c1_121, %c0_122, %c0_123] : memref<2x1x64xf32, #tpu.memory_space<vmem>>, vector<1x1x64xf32>
    %264 = vector.shape_cast %263 : vector<1x1x64xf32> to vector<1x64xf32>
    %265 = vector.broadcast %264 : vector<1x64xf32> to vector<24x64xf32>
    %266 = arith.addf %262, %265 : vector<24x64xf32>
    %c1_124 = arith.constant 1 : index
    %c0_125 = arith.constant 0 : index
    %c0_126 = arith.constant 0 : index
    %267 = vector.load %arg12[%c1_124, %c0_125, %c0_126] : memref<2x1x64xf32, #tpu.memory_space<vmem>>, vector<1x1x64xf32>
    %268 = vector.shape_cast %267 : vector<1x1x64xf32> to vector<1x64xf32>
    %c1_127 = arith.constant 1 : index
    %c0_128 = arith.constant 0 : index
    %c0_129 = arith.constant 0 : index
    %269 = vector.load %arg13[%c1_127, %c0_128, %c0_129] : memref<2x1x64xf32, #tpu.memory_space<vmem>>, vector<1x1x64xf32>
    %270 = vector.shape_cast %269 : vector<1x1x64xf32> to vector<1x64xf32>
    %cst_130 = arith.constant dense<0.000000e+00> : vector<24xf32>
    %271 = vector.multi_reduction <add>, %266, %cst_130 [1] : vector<24x64xf32> to vector<24xf32>
    %272 = vector.shape_cast %271 : vector<24xf32> to vector<24x1xf32>
    %cst_131 = arith.constant 6.400000e+01 : f32
    %273 = vector.broadcast %cst_131 : f32 to vector<24x1xf32>
    %274 = arith.divf %272, %273 : vector<24x1xf32>
    %275 = vector.broadcast %274 : vector<24x1xf32> to vector<24x64xf32>
    %276 = arith.subf %266, %275 : vector<24x64xf32>
    %277 = arith.mulf %276, %276 : vector<24x64xf32>
    %cst_132 = arith.constant dense<0.000000e+00> : vector<24xf32>
    %278 = vector.multi_reduction <add>, %277, %cst_132 [1] : vector<24x64xf32> to vector<24xf32>
    %279 = vector.shape_cast %278 : vector<24xf32> to vector<24x1xf32>
    %cst_133 = arith.constant 6.400000e+01 : f32
    %280 = vector.broadcast %cst_133 : f32 to vector<24x1xf32>
    %281 = arith.divf %279, %280 : vector<24x1xf32>
    %282 = vector.broadcast %274 : vector<24x1xf32> to vector<24x64xf32>
    %283 = arith.subf %266, %282 : vector<24x64xf32>
    %cst_134 = arith.constant 9.99999997E-7 : f32
    %284 = vector.broadcast %cst_134 : f32 to vector<24x1xf32>
    %285 = arith.addf %281, %284 : vector<24x1xf32>
    %286 = math.rsqrt %285 : vector<24x1xf32>
    %287 = vector.broadcast %286 : vector<24x1xf32> to vector<24x64xf32>
    %288 = arith.mulf %283, %287 : vector<24x64xf32>
    %289 = vector.broadcast %268 : vector<1x64xf32> to vector<24x64xf32>
    %290 = arith.mulf %288, %289 : vector<24x64xf32>
    %291 = vector.broadcast %270 : vector<1x64xf32> to vector<24x64xf32>
    %292 = arith.addf %290, %291 : vector<24x64xf32>
    %293 = arith.truncf %292 : vector<24x64xf32> to vector<24x64xbf16>
    %c1_135 = arith.constant 1 : index
    %c0_136 = arith.constant 0 : index
    %c0_137 = arith.constant 0 : index
    %294 = vector.load %arg14[%c1_135, %c0_136, %c0_137] : memref<2x64x128xbf16, #tpu.memory_space<vmem>>, vector<1x64x128xbf16>
    %295 = vector.shape_cast %294 : vector<1x64x128xbf16> to vector<64x128xbf16>
    %cst_138 = arith.constant dense<0.000000e+00> : vector<24x128xf32>
    %296 = tpu.matmul %293, %295, %cst_138 {dimension_numbers = #tpu.dot_dimension_numbers<[1], [0], [0], [1], [0, 0, 1, 1], [], []>} : vector<24x64xbf16>, vector<64x128xbf16>, vector<24x128xf32> -> vector<24x128xf32>
    %c1_139 = arith.constant 1 : index
    %c0_140 = arith.constant 0 : index
    %c0_141 = arith.constant 0 : index
    %297 = vector.load %arg15[%c1_139, %c0_140, %c0_141] : memref<2x1x128xf32, #tpu.memory_space<vmem>>, vector<1x1x128xf32>
    %298 = vector.shape_cast %297 : vector<1x1x128xf32> to vector<1x128xf32>
    %299 = vector.broadcast %298 : vector<1x128xf32> to vector<24x128xf32>
    %300 = arith.addf %296, %299 : vector<24x128xf32>
    %301 = arith.mulf %300, %300 : vector<24x128xf32>
    %302 = arith.mulf %300, %301 : vector<24x128xf32>
    %cst_142 = arith.constant 4.471500e-02 : f32
    %303 = vector.broadcast %cst_142 : f32 to vector<24x128xf32>
    %304 = arith.mulf %303, %302 : vector<24x128xf32>
    %305 = arith.addf %300, %304 : vector<24x128xf32>
    %cst_143 = arith.constant 0.797884583 : f32
    %306 = vector.broadcast %cst_143 : f32 to vector<24x128xf32>
    %307 = arith.mulf %306, %305 : vector<24x128xf32>
    %308 = math.tanh %307 : vector<24x128xf32>
    %cst_144 = arith.constant 1.000000e+00 : f32
    %309 = vector.broadcast %cst_144 : f32 to vector<24x128xf32>
    %310 = arith.addf %309, %308 : vector<24x128xf32>
    %cst_145 = arith.constant 5.000000e-01 : f32
    %311 = vector.broadcast %cst_145 : f32 to vector<24x128xf32>
    %312 = arith.mulf %311, %310 : vector<24x128xf32>
    %313 = arith.mulf %300, %312 : vector<24x128xf32>
    %314 = arith.truncf %313 : vector<24x128xf32> to vector<24x128xbf16>
    %c1_146 = arith.constant 1 : index
    %c0_147 = arith.constant 0 : index
    %c0_148 = arith.constant 0 : index
    %315 = vector.load %arg16[%c1_146, %c0_147, %c0_148] : memref<2x128x64xbf16, #tpu.memory_space<vmem>>, vector<1x128x64xbf16>
    %316 = vector.shape_cast %315 : vector<1x128x64xbf16> to vector<128x64xbf16>
    %cst_149 = arith.constant dense<0.000000e+00> : vector<24x64xf32>
    %317 = tpu.matmul %314, %316, %cst_149 {dimension_numbers = #tpu.dot_dimension_numbers<[1], [0], [0], [1], [0, 0, 1, 1], [], []>} : vector<24x128xbf16>, vector<128x64xbf16>, vector<24x64xf32> -> vector<24x64xf32>
    %318 = arith.addf %266, %317 : vector<24x64xf32>
    %c1_150 = arith.constant 1 : index
    %c0_151 = arith.constant 0 : index
    %c0_152 = arith.constant 0 : index
    %319 = vector.load %arg17[%c1_150, %c0_151, %c0_152] : memref<2x1x64xf32, #tpu.memory_space<vmem>>, vector<1x1x64xf32>
    %320 = vector.shape_cast %319 : vector<1x1x64xf32> to vector<1x64xf32>
    %321 = vector.broadcast %320 : vector<1x64xf32> to vector<24x64xf32>
    %322 = arith.addf %318, %321 : vector<24x64xf32>
    %c0_153 = arith.constant 0 : index
    %c0_154 = arith.constant 0 : index
    %323 = vector.load %arg18[%c0_153, %c0_154] : memref<1x64xf32, #tpu.memory_space<vmem>>, vector<1x64xf32>
    %c0_155 = arith.constant 0 : index
    %c0_156 = arith.constant 0 : index
    %324 = vector.load %arg19[%c0_155, %c0_156] : memref<1x64xf32, #tpu.memory_space<vmem>>, vector<1x64xf32>
    %cst_157 = arith.constant dense<0.000000e+00> : vector<24xf32>
    %325 = vector.multi_reduction <add>, %322, %cst_157 [1] : vector<24x64xf32> to vector<24xf32>
    %326 = vector.shape_cast %325 : vector<24xf32> to vector<24x1xf32>
    %cst_158 = arith.constant 6.400000e+01 : f32
    %327 = vector.broadcast %cst_158 : f32 to vector<24x1xf32>
    %328 = arith.divf %326, %327 : vector<24x1xf32>
    %329 = vector.broadcast %328 : vector<24x1xf32> to vector<24x64xf32>
    %330 = arith.subf %322, %329 : vector<24x64xf32>
    %331 = arith.mulf %330, %330 : vector<24x64xf32>
    %cst_159 = arith.constant dense<0.000000e+00> : vector<24xf32>
    %332 = vector.multi_reduction <add>, %331, %cst_159 [1] : vector<24x64xf32> to vector<24xf32>
    %333 = vector.shape_cast %332 : vector<24xf32> to vector<24x1xf32>
    %cst_160 = arith.constant 6.400000e+01 : f32
    %334 = vector.broadcast %cst_160 : f32 to vector<24x1xf32>
    %335 = arith.divf %333, %334 : vector<24x1xf32>
    %336 = vector.broadcast %328 : vector<24x1xf32> to vector<24x64xf32>
    %337 = arith.subf %322, %336 : vector<24x64xf32>
    %cst_161 = arith.constant 9.99999997E-7 : f32
    %338 = vector.broadcast %cst_161 : f32 to vector<24x1xf32>
    %339 = arith.addf %335, %338 : vector<24x1xf32>
    %340 = math.rsqrt %339 : vector<24x1xf32>
    %341 = vector.broadcast %340 : vector<24x1xf32> to vector<24x64xf32>
    %342 = arith.mulf %337, %341 : vector<24x64xf32>
    %343 = vector.broadcast %323 : vector<1x64xf32> to vector<24x64xf32>
    %344 = arith.mulf %342, %343 : vector<24x64xf32>
    %345 = vector.broadcast %324 : vector<1x64xf32> to vector<24x64xf32>
    %346 = arith.addf %344, %345 : vector<24x64xf32>
    %347 = vector.extract_strided_slice %346 {offsets = [0, 0], sizes = [16, 64], strides = [1, 1]} : vector<24x64xf32> to vector<16x64xf32>
    %c0_162 = arith.constant 0 : index
    %c0_163 = arith.constant 0 : index
    %c0_164 = arith.constant 0 : index
    %348 = vector.load %arg20[%c0_162, %c0_163, %c0_164] : memref<1x16x64xf32, #tpu.memory_space<vmem>>, vector<1x16x64xf32>
    %349 = vector.shape_cast %348 : vector<1x16x64xf32> to vector<16x64xf32>
    %350 = vector.shape_cast %347 : vector<16x64xf32> to vector<1x16x64xf32>
    tpu.vector_store %arg20[%c0_162, %c0_163, %c0_164], %350 {strides = array<i32>} : memref<1x16x64xf32, #tpu.memory_space<vmem>>, vector<1x16x64xf32>,
    return
  }
  func.func @transform_0(%arg0: i32) -> (i32, i32, i32) {
    %c0_i32 = arith.constant 0 : i32
    %c0_i32_0 = arith.constant 0 : i32
    %c0_i32_1 = arith.constant 0 : i32
    return %arg0, %c0_i32, %c0_i32_0 : i32, i32, i32
  }
  func.func @transform_1(%arg0: i32) -> (i32, i32) {
    %c0_i32 = arith.constant 0 : i32
    %c0_i32_0 = arith.constant 0 : i32
    %c0_i32_1 = arith.constant 0 : i32
    return %c0_i32, %c0_i32_0 : i32, i32
  }
  func.func @transform_2(%arg0: i32) -> (i32, i32) {
    %c0_i32 = arith.constant 0 : i32
    %c0_i32_0 = arith.constant 0 : i32
    %c0_i32_1 = arith.constant 0 : i32
    return %c0_i32, %c0_i32_0 : i32, i32
  }
  func.func @transform_3(%arg0: i32) -> (i32, i32) {
    %c0_i32 = arith.constant 0 : i32
    %c0_i32_0 = arith.constant 0 : i32
    %c0_i32_1 = arith.constant 0 : i32
    return %c0_i32, %c0_i32_0 : i32, i32
  }
  func.func @transform_4(%arg0: i32) -> (i32, i32) {
    %c0_i32 = arith.constant 0 : i32
    %c0_i32_0 = arith.constant 0 : i32
    %c0_i32_1 = arith.constant 0 : i32
    return %c0_i32, %c0_i32_0 : i32, i32
  }
  func.func @transform_5(%arg0: i32) -> (i32, i32, i32) {
    %c0_i32 = arith.constant 0 : i32
    %c0_i32_0 = arith.constant 0 : i32
    %c0_i32_1 = arith.constant 0 : i32
    %c0_i32_2 = arith.constant 0 : i32
    return %c0_i32, %c0_i32_0, %c0_i32_1 : i32, i32, i32
  }
  func.func @transform_6(%arg0: i32) -> (i32, i32, i32) {
    %c0_i32 = arith.constant 0 : i32
    %c0_i32_0 = arith.constant 0 : i32
    %c0_i32_1 = arith.constant 0 : i32
    %c0_i32_2 = arith.constant 0 : i32
    return %c0_i32, %c0_i32_0, %c0_i32_1 : i32, i32, i32
  }
  func.func @transform_7(%arg0: i32) -> (i32, i32, i32) {
    %c0_i32 = arith.constant 0 : i32
    %c0_i32_0 = arith.constant 0 : i32
    %c0_i32_1 = arith.constant 0 : i32
    %c0_i32_2 = arith.constant 0 : i32
    return %c0_i32, %c0_i32_0, %c0_i32_1 : i32, i32, i32
  }
  func.func @transform_8(%arg0: i32) -> (i32, i32, i32) {
    %c0_i32 = arith.constant 0 : i32
    %c0_i32_0 = arith.constant 0 : i32
    %c0_i32_1 = arith.constant 0 : i32
    %c0_i32_2 = arith.constant 0 : i32
    return %c0_i32, %c0_i32_0, %c0_i32_1 : i32, i32, i32
  }
  func.func @transform_9(%arg0: i32) -> (i32, i32, i32) {
    %c0_i32 = arith.constant 0 : i32
    %c0_i32_0 = arith.constant 0 : i32
    %c0_i32_1 = arith.constant 0 : i32
    %c0_i32_2 = arith.constant 0 : i32
    return %c0_i32, %c0_i32_0, %c0_i32_1 : i32, i32, i32
  }
  func.func @transform_10(%arg0: i32) -> (i32, i32, i32) {
    %c0_i32 = arith.constant 0 : i32
    %c0_i32_0 = arith.constant 0 : i32
    %c0_i32_1 = arith.constant 0 : i32
    %c0_i32_2 = arith.constant 0 : i32
    return %c0_i32, %c0_i32_0, %c0_i32_1 : i32, i32, i32
  }
  func.func @transform_11(%arg0: i32) -> (i32, i32, i32) {
    %c0_i32 = arith.constant 0 : i32
    %c0_i32_0 = arith.constant 0 : i32
    %c0_i32_1 = arith.constant 0 : i32
    %c0_i32_2 = arith.constant 0 : i32
    return %c0_i32, %c0_i32_0, %c0_i32_1 : i32, i32, i32
  }
  func.func @transform_12(%arg0: i32) -> (i32, i32, i32) {
    %c0_i32 = arith.constant 0 : i32
    %c0_i32_0 = arith.constant 0 : i32
    %c0_i32_1 = arith.constant 0 : i32
    %c0_i32_2 = arith.constant 0 : i32
    return %c0_i32, %c0_i32_0, %c0_i32_1 : i32, i32, i32
  }
  func.func @transform_13(%arg0: i32) -> (i32, i32, i32) {
    %c0_i32 = arith.constant 0 : i32
    %c0_i32_0 = arith.constant 0 : i32
    %c0_i32_1 = arith.constant 0 : i32
    %c0_i32_2 = arith.constant 0 : i32
    return %c0_i32, %c0_i32_0, %c0_i32_1 : i32, i32, i32
  }
  func.func @transform_14(%arg0: i32) -> (i32, i32, i32) {
    %c0_i32 = arith.constant 0 : i32
    %c0_i32_0 = arith.constant 0 : i32
    %c0_i32_1 = arith.constant 0 : i32
    %c0_i32_2 = arith.constant 0 : i32
    return %c0_i32, %c0_i32_0, %c0_i32_1 : i32, i32, i32
  }
  func.func @transform_15(%arg0: i32) -> (i32, i32, i32) {
    %c0_i32 = arith.constant 0 : i32
    %c0_i32_0 = arith.constant 0 : i32
    %c0_i32_1 = arith.constant 0 : i32
    %c0_i32_2 = arith.constant 0 : i32
    return %c0_i32, %c0_i32_0, %c0_i32_1 : i32, i32, i32
  }
  func.func @transform_16(%arg0: i32) -> (i32, i32, i32) {
    %c0_i32 = arith.constant 0 : i32
    %c0_i32_0 = arith.constant 0 : i32
    %c0_i32_1 = arith.constant 0 : i32
    %c0_i32_2 = arith.constant 0 : i32
    return %c0_i32, %c0_i32_0, %c0_i32_1 : i32, i32, i32
  }
  func.func @transform_17(%arg0: i32) -> (i32, i32) {
    %c0_i32 = arith.constant 0 : i32
    %c0_i32_0 = arith.constant 0 : i32
    %c0_i32_1 = arith.constant 0 : i32
    return %c0_i32, %c0_i32_0 : i32, i32
  }
  func.func @transform_18(%arg0: i32) -> (i32, i32) {
    %c0_i32 = arith.constant 0 : i32
    %c0_i32_0 = arith.constant 0 : i32
    %c0_i32_1 = arith.constant 0 : i32
    return %c0_i32, %c0_i32_0 : i32, i32
  }
  func.func @transform_19(%arg0: i32) -> (i32, i32, i32) {
    %c0_i32 = arith.constant 0 : i32
    %c0_i32_0 = arith.constant 0 : i32
    %c0_i32_1 = arith.constant 0 : i32
    return %arg0, %c0_i32, %c0_i32_0 : i32, i32, i32
  }
}

</mosaic_0001>

<llo_original>
// kernel: dino_feature_pyramid.1
$region0: #{dino_feature_pyramid.1}
  #allocation0 [shape = 'u32[]', space=smem, size = 0x4, offset = 0x4, fixed_abs, tag = 'smem constant byte address 0x4 - core index']
  #allocation1 [shape = 'u32[144,128]{1,0:T(1,128)}', space=vmem, size = 0x12000, scoped, tag = 'internal scratch']
  #allocation2 [shape = 'f32[24,64]{1,0:T(8,128)}', space=vmem, size = 0x3000, scoped, tag = 'scratch operand']
  %s0 = inlined_call_operand.vmem [shape: f32[2,16,640], index: 0, kind: input, shape index: {}]
  %s1 = inlined_call_operand.vmem [shape: bf16[640,64], index: 1, kind: input, shape index: {}]
  %s2 = inlined_call_operand.vmem [shape: f32[1,64], index: 2, kind: input, shape index: {}]
  %s3 = inlined_call_operand.vmem [shape: f32[1,64], index: 3, kind: input, shape index: {}]
  %s4 = inlined_call_operand.vmem [shape: f32[24,64], index: 4, kind: input, shape index: {}]
  %s5 = inlined_call_operand.vmem [shape: f32[2,1,64], index: 5, kind: input, shape index: {}]
  %s6 = inlined_call_operand.vmem [shape: f32[2,1,64], index: 6, kind: input, shape index: {}]
  %s7 = inlined_call_operand.vmem [shape: bf16[2,64,192], index: 7, kind: input, shape index: {}]
  %s8 = inlined_call_operand.vmem [shape: f32[2,1,192], index: 8, kind: input, shape index: {}]
  %s9 = inlined_call_operand.vmem [shape: bf16[2,64,64], index: 9, kind: input, shape index: {}]
  %s10 = inlined_call_operand.vmem [shape: f32[2,1,64], index: 10, kind: input, shape index: {}]
  %s11 = inlined_call_operand.vmem [shape: f32[2,1,64], index: 11, kind: input, shape index: {}]
  %s12 = inlined_call_operand.vmem [shape: f32[2,1,64], index: 12, kind: input, shape index: {}]
  %s13 = inlined_call_operand.vmem [shape: bf16[2,64,128], index: 13, kind: input, shape index: {}]
  %s14 = inlined_call_operand.vmem [shape: f32[2,1,128], index: 14, kind: input, shape index: {}]
  %s15 = inlined_call_operand.vmem [shape: bf16[2,128,64], index: 15, kind: input, shape index: {}]
  %s16 = inlined_call_operand.vmem [shape: f32[2,1,64], index: 16, kind: input, shape index: {}]
  %s17 = inlined_call_operand.vmem [shape: f32[1,64], index: 17, kind: input, shape index: {}]
  %s18 = inlined_call_operand.vmem [shape: f32[1,64], index: 18, kind: input, shape index: {}]
  %s19 = inlined_call_operand.hbm [shape: f32[2,16,64], index: 19, kind: output, shape index: {}]
  %s20 = sld [smem:[#allocation0]]
  $region109: #{dino_feature_pyramid.1} parent=0
    _
  %s22 = ssub.s32 1, %s20
  %s23 = scalar_select 0, %s22, %s20
  $region1: #{dino_feature_pyramid.1} parent=0
    #allocation3 [shape = 'u8[16384]{0}', space=vmem, size = 0x4000, scoped, tag = 'output window, operand 0']
    #allocation4 [shape = 's32[2]{0}', space=sflag, size = 0x8, scoped, tag = 'scoped memory for dino_feature_pyramid.1']
    %24 = vsyncpa [#allocation4], 0
    %s25 = scalar_lea.sflag [#allocation4], 1
    %26 = vsyncpa %s25, 0
    loop: start=0, step=1, limit=4
    $region2: #{dino_feature_pyramid.1} parent=1 // loop_pre_header
      _
    $region3: #{dino_feature_pyramid.1} parent=1 // loop_header
      %s28 = sphi 0, %s32
      %p29 = scmp.ge.s32.totalorder %s28, 4
      %s38 = sphi 0, %s40
      %s41 = sphi 0, %s38
      %s42 = sphi 0, %s41
      %s58 = sphi 0, %s42
      %s62 = sphi 0, %s62
      %s64 = sphi 0, %s62
      %s65 = sphi 0, %s64
      %s79 = sphi 0, %s65
      %s83 = sphi 0, %s83
      %s85 = sphi 0, %s83
      %s86 = sphi 0, %s85
      %s100 = sphi 0, %s86
      %s104 = sphi 0, %s104
      %s106 = sphi 0, %s104
      %s107 = sphi 0, %s106
      %s121 = sphi 0, %s107
      %s125 = sphi 0, %s125
      %s127 = sphi 0, %s125
      %s128 = sphi 0, %s127
      %s142 = sphi 0, %s128
      %s146 = sphi 0, %s146
      %s148 = sphi 0, %s146
      %s149 = sphi 0, %s148
      %s163 = sphi 0, %s149
      %s167 = sphi 0, %s167
      %s169 = sphi 0, %s167
      %s170 = sphi 0, %s169
      %s184 = sphi 0, %s170
      %s188 = sphi 0, %s188
      %s190 = sphi 0, %s188
      %s191 = sphi 0, %s190
      %s205 = sphi 0, %s191
      %s209 = sphi 0, %s209
      %s211 = sphi 0, %s209
      %s212 = sphi 0, %s211
      %s226 = sphi 0, %s212
      %s230 = sphi 0, %s230
      %s232 = sphi 0, %s230
      %s233 = sphi 0, %s232
      %s247 = sphi 0, %s233
      %s251 = sphi 0, %s251
      %s253 = sphi 0, %s251
      %s254 = sphi 0, %s253
      %s268 = sphi 0, %s254
      %s272 = sphi 0, %s272
      %s274 = sphi 0, %s272
      %s275 = sphi 0, %s274
      %s289 = sphi 0, %s275
      %s293 = sphi 0, %s293
      %s295 = sphi 0, %s293
      %s296 = sphi 0, %s295
      %s310 = sphi 0, %s296
      %s314 = sphi 0, %s314
      %s316 = sphi 0, %s314
      %s317 = sphi 0, %s316
      %s331 = sphi 0, %s317
      %s335 = sphi 0, %s335
      %s337 = sphi 0, %s335
      %s338 = sphi 0, %s337
      %s352 = sphi 0, %s338
      %s356 = sphi 0, %s356
      %s358 = sphi 0, %s356
      %s359 = sphi 0, %s358
      %s373 = sphi 0, %s359
      %s377 = sphi 0, %s377
      %s379 = sphi 0, %s377
      %s380 = sphi 0, %s379
      %s394 = sphi 0, %s380
      %s398 = sphi 0, %s398
      %s400 = sphi 0, %s398
      %s401 = sphi 0, %s400
      %s415 = sphi 0, %s401
      %s419 = sphi 0, %s419
      %s421 = sphi 0, %s419
      %s422 = sphi 0, %s421
      %s436 = sphi 0, %s422
      %s442 = sphi 0, %s444
      %s445 = sphi 0, %s442
      %s446 = sphi 0, %s445
      %s462 = sphi 0, %s446
    $region4: #{dino_feature_pyramid.1} parent=1 // loop_header_branch
      %31 = sbr.rel (%p29) target = $region8
    $region5: #{dino_feature_pyramid.1} parent=1 // loop_body
      %s33 = ssub.s32 %s28, 1
      %s34 = ssub.s32 %s28, 2
      %s35 = sadd.s32 %s28, 1
      %s36 = ssub.s32 %s28, %s35
      %p37 = scmp.eq.s32.totalorder %s36, 0
      %s39 = sadd.s32 %s38, 1
      %s40 = scalar_select %p37, %s38, %s39
      %p43 = pneg %p37
      %p44 = scmp.eq.s32.totalorder %s28, 1
      %p45 = por %p43, %p44
      %p46 = scmp.ne.s32.totalorder %s38, %s41
      %p47 = scmp.eq.s32.totalorder %s28, 0
      %p48 = por %p46, %p47
      %p49 = scmp.ne.s32.totalorder %s38, %s41
      %p50 = scmp.eq.s32.totalorder %s33, 1
      %p51 = por %p49, %p50
      %p52 = scmp.ne.s32.totalorder %s41, %s42
      %p53 = scmp.eq.s32.totalorder %s33, 0
      %p54 = por %p52, %p53
      %p55 = scmp.ne.s32.totalorder %s41, %s42
      %p56 = scmp.eq.s32.totalorder %s34, 1
      %p57 = por %p55, %p56
      %p59 = scmp.ne.s32.totalorder %s42, %s58
      %p60 = scmp.eq.s32.totalorder %s34, 0
      %p61 = por %p59, %p60
      %s63 = sadd.s32 %s62, 1
      %p66 = scmp.eq.s32.totalorder %s28, 1
      %p67 = scmp.ne.s32.totalorder %s62, %s64
      %p68 = scmp.eq.s32.totalorder %s28, 0
      %p69 = por %p67, %p68
      %p70 = scmp.ne.s32.totalorder %s62, %s64
      %p71 = scmp.eq.s32.totalorder %s33, 1
      %p72 = por %p70, %p71
      %p73 = scmp.ne.s32.totalorder %s64, %s65
      %p74 = scmp.eq.s32.totalorder %s33, 0
      %p75 = por %p73, %p74
      %p76 = scmp.ne.s32.totalorder %s64, %s65
      %p77 = scmp.eq.s32.totalorder %s34, 1
      %p78 = por %p76, %p77
      %p80 = scmp.ne.s32.totalorder %s65, %s79
      %p81 = scmp.eq.s32.totalorder %s34, 0
      %p82 = por %p80, %p81
      %s84 = sadd.s32 %s83, 1
      %p87 = scmp.eq.s32.totalorder %s28, 1
      %p88 = scmp.ne.s32.totalorder %s83, %s85
      %p89 = scmp.eq.s32.totalorder %s28, 0
      %p90 = por %p88, %p89
      %p91 = scmp.ne.s32.totalorder %s83, %s85
      %p92 = scmp.eq.s32.totalorder %s33, 1
      %p93 = por %p91, %p92
      %p94 = scmp.ne.s32.totalorder %s85, %s86
      %p95 = scmp.eq.s32.totalorder %s33, 0
      %p96 = por %p94, %p95
      %p97 = scmp.ne.s32.totalorder %s85, %s86
      %p98 = scmp.eq.s32.totalorder %s34, 1
      %p99 = por %p97, %p98
      %p101 = scmp.ne.s32.totalorder %s86, %s100
      %p102 = scmp.eq.s32.totalorder %s34, 0
      %p103 = por %p101, %p102
      %s105 = sadd.s32 %s104, 1
      %p108 = scmp.eq.s32.totalorder %s28, 1
      %p109 = scmp.ne.s32.totalorder %s104, %s106
      %p110 = scmp.eq.s32.totalorder %s28, 0
      %p111 = por %p109, %p110
      %p112 = scmp.ne.s32.totalorder %s104, %s106
      %p113 = scmp.eq.s32.totalorder %s33, 1
      %p114 = por %p112, %p113
      %p115 = scmp.ne.s32.totalorder %s106, %s107
      %p116 = scmp.eq.s32.totalorder %s33, 0
      %p117 = por %p115, %p116
      %p118 = scmp.ne.s32.totalorder %s106, %s107
      %p119 = scmp.eq.s32.totalorder %s34, 1
      %p120 = por %p118, %p119
      %p122 = scmp.ne.s32.totalorder %s107, %s121
      %p123 = scmp.eq.s32.totalorder %s34, 0
      %p124 = por %p122, %p123
      %s126 = sadd.s32 %s125, 1
      %p129 = scmp.eq.s32.totalorder %s28, 1
      %p130 = scmp.ne.s32.totalorder %s125, %s127
      %p131 = scmp.eq.s32.totalorder %s28, 0
      %p132 = por %p130, %p131
      %p133 = scmp.ne.s32.totalorder %s125, %s127
      %p134 = scmp.eq.s32.totalorder %s33, 1
      %p135 = por %p133, %p134
      %p136 = scmp.ne.s32.totalorder %s127, %s128
      %p137 = scmp.eq.s32.totalorder %s33, 0
      %p138 = por %p136, %p137
      %p139 = scmp.ne.s32.totalorder %s127, %s128
      %p140 = scmp.eq.s32.totalorder %s34, 1
      %p141 = por %p139, %p140
      %p143 = scmp.ne.s32.totalorder %s128, %s142
      %p144 = scmp.eq.s32.totalorder %s34, 0
      %p145 = por %p143, %p144
      %s147 = sadd.s32 %s146, 1
      %p150 = scmp.eq.s32.totalorder %s28, 1
      %p151 = scmp.ne.s32.totalorder %s146, %s148
      %p152 = scmp.eq.s32.totalorder %s28, 0
      %p153 = por %p151, %p152
      %p154 = scmp.ne.s32.totalorder %s146, %s148
      %p155 = scmp.eq.s32.totalorder %s33, 1
      %p156 = por %p154, %p155
      %p157 = scmp.ne.s32.totalorder %s148, %s149
      %p158 = scmp.eq.s32.totalorder %s33, 0
      %p159 = por %p157, %p158
      %p160 = scmp.ne.s32.totalorder %s148, %s149
      %p161 = scmp.eq.s32.totalorder %s34, 1
      %p162 = por %p160, %p161
      %p164 = scmp.ne.s32.totalorder %s149, %s163
      %p165 = scmp.eq.s32.totalorder %s34, 0
      %p166 = por %p164, %p165
      %s168 = sadd.s32 %s167, 1
      %p171 = scmp.eq.s32.totalorder %s28, 1
      %p172 = scmp.ne.s32.totalorder %s167, %s169
      %p173 = scmp.eq.s32.totalorder %s28, 0
      %p174 = por %p172, %p173
      %p175 = scmp.ne.s32.totalorder %s167, %s169
      %p176 = scmp.eq.s32.totalorder %s33, 1
      %p177 = por %p175, %p176
      %p178 = scmp.ne.s32.totalorder %s169, %s170
      %p179 = scmp.eq.s32.totalorder %s33, 0
      %p180 = por %p178, %p179
      %p181 = scmp.ne.s32.totalorder %s169, %s170
      %p182 = scmp.eq.s32.totalorder %s34, 1
      %p183 = por %p181, %p182
      %p185 = scmp.ne.s32.totalorder %s170, %s184
      %p186 = scmp.eq.s32.totalorder %s34, 0
      %p187 = por %p185, %p186
      %s189 = sadd.s32 %s188, 1
      %p192 = scmp.eq.s32.totalorder %s28, 1
      %p193 = scmp.ne.s32.totalorder %s188, %s190
      %p194 = scmp.eq.s32.totalorder %s28, 0
      %p195 = por %p193, %p194
      %p196 = scmp.ne.s32.totalorder %s188, %s190
      %p197 = scmp.eq.s32.totalorder %s33, 1
      %p198 = por %p196, %p197
      %p199 = scmp.ne.s32.totalorder %s190, %s191
      %p200 = scmp.eq.s32.totalorder %s33, 0
      %p201 = por %p199, %p200
      %p202 = scmp.ne.s32.totalorder %s190, %s191
      %p203 = scmp.eq.s32.totalorder %s34, 1
      %p204 = por %p202, %p203
      %p206 = scmp.ne.s32.totalorder %s191, %s205
      %p207 = scmp.eq.s32.totalorder %s34, 0
      %p208 = por %p206, %p207
      %s210 = sadd.s32 %s209, 1
      %p213 = scmp.eq.s32.totalorder %s28, 1
      %p214 = scmp.ne.s32.totalorder %s209, %s211
      %p215 = scmp.eq.s32.totalorder %s28, 0
      %p216 = por %p214, %p215
      %p217 = scmp.ne.s32.totalorder %s209, %s211
      %p218 = scmp.eq.s32.totalorder %s33, 1
      %p219 = por %p217, %p218
      %p220 = scmp.ne.s32.totalorder %s211, %s212
      %p221 = scmp.eq.s32.totalorder %s33, 0
      %p222 = por %p220, %p221
      %p223 = scmp.ne.s32.totalorder %s211, %s212
      %p224 = scmp.eq.s32.totalorder %s34, 1
      %p225 = por %p223, %p224
      %p227 = scmp.ne.s32.totalorder %s212, %s226
      %p228 = scmp.eq.s32.totalorder %s34, 0
      %p229 = por %p227, %p228
      %s231 = sadd.s32 %s230, 1
      %p234 = scmp.eq.s32.totalorder %s28, 1
      %p235 = scmp.ne.s32.totalorder %s230, %s232
      %p236 = scmp.eq.s32.totalorder %s28, 0
      %p237 = por %p235, %p236
      %p238 = scmp.ne.s32.totalorder %s230, %s232
      %p239 = scmp.eq.s32.totalorder %s33, 1
      %p240 = por %p238, %p239
      %p241 = scmp.ne.s32.totalorder %s232, %s233
      %p242 = scmp.eq.s32.totalorder %s33, 0
      %p243 = por %p241, %p242
      %p244 = scmp.ne.s32.totalorder %s232, %s233
      %p245 = scmp.eq.s32.totalorder %s34, 1
      %p246 = por %p244, %p245
      %p248 = scmp.ne.s32.totalorder %s233, %s247
      %p249 = scmp.eq.s32.totalorder %s34, 0
      %p250 = por %p248, %p249
      %s252 = sadd.s32 %s251, 1
      %p255 = scmp.eq.s32.totalorder %s28, 1
      %p256 = scmp.ne.s32.totalorder %s251, %s253
      %p257 = scmp.eq.s32.totalorder %s28, 0
      %p258 = por %p256, %p257
      %p259 = scmp.ne.s32.totalorder %s251, %s253
      %p260 = scmp.eq.s32.totalorder %s33, 1
      %p261 = por %p259, %p260
      %p262 = scmp.ne.s32.totalorder %s253, %s254
      %p263 = scmp.eq.s32.totalorder %s33, 0
      %p264 = por %p262, %p263
      %p265 = scmp.ne.s32.totalorder %s253, %s254
      %p266 = scmp.eq.s32.totalorder %s34, 1
      %p267 = por %p265, %p266
      %p269 = scmp.ne.s32.totalorder %s254, %s268
      %p270 = scmp.eq.s32.totalorder %s34, 0
      %p271 = por %p269, %p270
      %s273 = sadd.s32 %s272, 1
      %p276 = scmp.eq.s32.totalorder %s28, 1
      %p277 = scmp.ne.s32.totalorder %s272, %s274
      %p278 = scmp.eq.s32.totalorder %s28, 0
      %p279 = por %p277, %p278
      %p280 = scmp.ne.s32.totalorder %s272, %s274
      %p281 = scmp.eq.s32.totalorder %s33, 1
      %p282 = por %p280, %p281
      %p283 = scmp.ne.s32.totalorder %s274, %s275
      %p284 = scmp.eq.s32.totalorder %s33, 0
      %p285 = por %p283, %p284
      %p286 = scmp.ne.s32.totalorder %s274, %s275
      %p287 = scmp.eq.s32.totalorder %s34, 1
      %p288 = por %p286, %p287
      %p290 = scmp.ne.s32.totalorder %s275, %s289
      %p291 = scmp.eq.s32.totalorder %s34, 0
      %p292 = por %p290, %p291
      %s294 = sadd.s32 %s293, 1
      %p297 = scmp.eq.s32.totalorder %s28, 1
      %p298 = scmp.ne.s32.totalorder %s293, %s295
      %p299 = scmp.eq.s32.totalorder %s28, 0
      %p300 = por %p298, %p299
      %p301 = scmp.ne.s32.totalorder %s293, %s295
      %p302 = scmp.eq.s32.totalorder %s33, 1
      %p303 = por %p301, %p302
      %p304 = scmp.ne.s32.totalorder %s295, %s296
      %p305 = scmp.eq.s32.totalorder %s33, 0
      %p306 = por %p304, %p305
      %p307 = scmp.ne.s32.totalorder %s295, %s296
      %p308 = scmp.eq.s32.totalorder %s34, 1
      %p309 = por %p307, %p308
      %p311 = scmp.ne.s32.totalorder %s296, %s310
      %p312 = scmp.eq.s32.totalorder %s34, 0
      %p313 = por %p311, %p312
      %s315 = sadd.s32 %s314, 1
      %p318 = scmp.eq.s32.totalorder %s28, 1
      %p319 = scmp.ne.s32.totalorder %s314, %s316
      %p320 = scmp.eq.s32.totalorder %s28, 0
      %p321 = por %p319, %p320
      %p322 = scmp.ne.s32.totalorder %s314, %s316
      %p323 = scmp.eq.s32.totalorder %s33, 1
      %p324 = por %p322, %p323
      %p325 = scmp.ne.s32.totalorder %s316, %s317
      %p326 = scmp.eq.s32.totalorder %s33, 0
      %p327 = por %p325, %p326
      %p328 = scmp.ne.s32.totalorder %s316, %s317
      %p329 = scmp.eq.s32.totalorder %s34, 1
      %p330 = por %p328, %p329
      %p332 = scmp.ne.s32.totalorder %s317, %s331
      %p333 = scmp.eq.s32.totalorder %s34, 0
      %p334 = por %p332, %p333
      %s336 = sadd.s32 %s335, 1
      %p339 = scmp.eq.s32.totalorder %s28, 1
      %p340 = scmp.ne.s32.totalorder %s335, %s337
      %p341 = scmp.eq.s32.totalorder %s28, 0
      %p342 = por %p340, %p341
      %p343 = scmp.ne.s32.totalorder %s335, %s337
      %p344 = scmp.eq.s32.totalorder %s33, 1
      %p345 = por %p343, %p344
      %p346 = scmp.ne.s32.totalorder %s337, %s338
      %p347 = scmp.eq.s32.totalorder %s33, 0
      %p348 = por %p346, %p347
      %p349 = scmp.ne.s32.totalorder %s337, %s338
      %p350 = scmp.eq.s32.totalorder %s34, 1
      %p351 = por %p349, %p350
      %p353 = scmp.ne.s32.totalorder %s338, %s352
      %p354 = scmp.eq.s32.totalorder %s34, 0
      %p355 = por %p353, %p354
      %s357 = sadd.s32 %s356, 1
      %p360 = scmp.eq.s32.totalorder %s28, 1
      %p361 = scmp.ne.s32.totalorder %s356, %s358
      %p362 = scmp.eq.s32.totalorder %s28, 0
      %p363 = por %p361, %p362
      %p364 = scmp.ne.s32.totalorder %s356, %s358
      %p365 = scmp.eq.s32.totalorder %s33, 1
      %p366 = por %p364, %p365
      %p367 = scmp.ne.s32.totalorder %s358, %s359
      %p368 = scmp.eq.s32.totalorder %s33, 0
      %p369 = por %p367, %p368
      %p370 = scmp.ne.s32.totalorder %s358, %s359
      %p371 = scmp.eq.s32.totalorder %s34, 1
      %p372 = por %p370, %p371
      %p374 = scmp.ne.s32.totalorder %s359, %s373
      %p375 = scmp.eq.s32.totalorder %s34, 0
      %p376 = por %p374, %p375
      %s378 = sadd.s32 %s377, 1
      %p381 = scmp.eq.s32.totalorder %s28, 1
      %p382 = scmp.ne.s32.totalorder %s377, %s379
      %p383 = scmp.eq.s32.totalorder %s28, 0
      %p384 = por %p382, %p383
      %p385 = scmp.ne.s32.totalorder %s377, %s379
      %p386 = scmp.eq.s32.totalorder %s33, 1
      %p387 = por %p385, %p386
      %p388 = scmp.ne.s32.totalorder %s379, %s380
      %p389 = scmp.eq.s32.totalorder %s33, 0
      %p390 = por %p388, %p389
      %p391 = scmp.ne.s32.totalorder %s379, %s380
      %p392 = scmp.eq.s32.totalorder %s34, 1
      %p393 = por %p391, %p392
      %p395 = scmp.ne.s32.totalorder %s380, %s394
      %p396 = scmp.eq.s32.totalorder %s34, 0
      %p397 = por %p395, %p396
      %s399 = sadd.s32 %s398, 1
      %p402 = scmp.eq.s32.totalorder %s28, 1
      %p403 = scmp.ne.s32.totalorder %s398, %s400
      %p404 = scmp.eq.s32.totalorder %s28, 0
      %p405 = por %p403, %p404
      %p406 = scmp.ne.s32.totalorder %s398, %s400
      %p407 = scmp.eq.s32.totalorder %s33, 1
      %p408 = por %p406, %p407
      %p409 = scmp.ne.s32.totalorder %s400, %s401
      %p410 = scmp.eq.s32.totalorder %s33, 0
      %p411 = por %p409, %p410
      %p412 = scmp.ne.s32.totalorder %s400, %s401
      %p413 = scmp.eq.s32.totalorder %s34, 1
      %p414 = por %p412, %p413
      %p416 = scmp.ne.s32.totalorder %s401, %s415
      %p417 = scmp.eq.s32.totalorder %s34, 0
      %p418 = por %p416, %p417
      %s420 = sadd.s32 %s419, 1
      %p423 = scmp.eq.s32.totalorder %s28, 1
      %p424 = scmp.ne.s32.totalorder %s419, %s421
      %p425 = scmp.eq.s32.totalorder %s28, 0
      %p426 = por %p424, %p425
      %p427 = scmp.ne.s32.totalorder %s419, %s421
      %p428 = scmp.eq.s32.totalorder %s33, 1
      %p429 = por %p427, %p428
      %p430 = scmp.ne.s32.totalorder %s421, %s422
      %p431 = scmp.eq.s32.totalorder %s33, 0
      %p432 = por %p430, %p431
      %p433 = scmp.ne.s32.totalorder %s421, %s422
      %p434 = scmp.eq.s32.totalorder %s34, 1
      %p435 = por %p433, %p434
      %p437 = scmp.ne.s32.totalorder %s422, %s436
      %p438 = scmp.eq.s32.totalorder %s34, 0
      %p439 = por %p437, %p438
      %s440 = ssub.s32 %s28, %s35
      %p441 = scmp.eq.s32.totalorder %s440, 0
      %s443 = sadd.s32 %s442, 1
      %s444 = scalar_select %p441, %s442, %s443
      %p447 = pneg %p441
      %p448 = scmp.eq.s32.totalorder %s28, 1
      %p449 = por %p447, %p448
      %p450 = scmp.ne.s32.totalorder %s442, %s445
      %p451 = scmp.eq.s32.totalorder %s28, 0
      %p452 = por %p450, %p451
      %p453 = scmp.ne.s32.totalorder %s442, %s445
      %p454 = scmp.eq.s32.totalorder %s33, 1
      %p455 = por %p453, %p454
      %p456 = scmp.ne.s32.totalorder %s445, %s446
      %p457 = scmp.eq.s32.totalorder %s33, 0
      %p458 = por %p456, %p457
      %p459 = scmp.ne.s32.totalorder %s445, %s446
      %p460 = scmp.eq.s32.totalorder %s34, 1
      %p461 = por %p459, %p460
      %p463 = scmp.ne.s32.totalorder %s446, %s462
      %p464 = scmp.eq.s32.totalorder %s34, 0
      %p465 = por %p463, %p464
      %p466 = scmp.le.s32.totalorder 1, %s28
      %p467 = scmp.lt.s32.totalorder %s28, 3
      %p468 = pnand %p466, %p467
      %p469 = pneg %p468
      // Predicated region
      $region9: #{dino_feature_pyramid.1} parent=5 // pred_check
        _
      $region10: #{dino_feature_pyramid.1} parent=5 // pred_check_branch
        %471 = sbr.rel (%p468) target = $region12
      $region11: #{dino_feature_pyramid.1} parent=5 // pred_region
        %s472 = ssub.s32 %s28, 1
        // Predicated region
        $region13: #{dino_feature_pyramid.1} parent=11 // pred_check
          %p473 = pneg %p75
        $region14: #{dino_feature_pyramid.1} parent=11 // pred_check_branch
          %475 = sbr.rel (%p473) target = $region16
        $region15: #{dino_feature_pyramid.1} parent=11 // pred_region
          _
        $region16: #{dino_feature_pyramid.1} parent=11 // pred_fallthru
          _
        // Predicated region
        $region17: #{dino_feature_pyramid.1} parent=11 // pred_check
          %p476 = pneg %p96
        $region18: #{dino_feature_pyramid.1} parent=11 // pred_check_branch
          %478 = sbr.rel (%p476) target = $region20
        $region19: #{dino_feature_pyramid.1} parent=11 // pred_region
          _
        $region20: #{dino_feature_pyramid.1} parent=11 // pred_fallthru
          _
        // Predicated region
        $region21: #{dino_feature_pyramid.1} parent=11 // pred_check
          %p479 = pneg %p117
        $region22: #{dino_feature_pyramid.1} parent=11 // pred_check_branch
          %481 = sbr.rel (%p479) target = $region24
        $region23: #{dino_feature_pyramid.1} parent=11 // pred_region
          _
        $region24: #{dino_feature_pyramid.1} parent=11 // pred_fallthru
          _
        // Predicated region
        $region25: #{dino_feature_pyramid.1} parent=11 // pred_check
          %p482 = pneg %p138
        $region26: #{dino_feature_pyramid.1} parent=11 // pred_check_branch
          %484 = sbr.rel (%p482) target = $region28
        $region27: #{dino_feature_pyramid.1} parent=11 // pred_region
          _
        $region28: #{dino_feature_pyramid.1} parent=11 // pred_fallthru
          _
        // Predicated region
        $region29: #{dino_feature_pyramid.1} parent=11 // pred_check
          %p485 = pneg %p159
        $region30: #{dino_feature_pyramid.1} parent=11 // pred_check_branch
          %487 = sbr.rel (%p485) target = $region32
        $region31: #{dino_feature_pyramid.1} parent=11 // pred_region
          _
        $region32: #{dino_feature_pyramid.1} parent=11 // pred_fallthru
          _
        // Predicated region
        $region33: #{dino_feature_pyramid.1} parent=11 // pred_check
          %p488 = pneg %p180
        $region34: #{dino_feature_pyramid.1} parent=11 // pred_check_branch
          %490 = sbr.rel (%p488) target = $region36
        $region35: #{dino_feature_pyramid.1} parent=11 // pred_region
          _
        $region36: #{dino_feature_pyramid.1} parent=11 // pred_fallthru
          _
        // Predicated region
        $region37: #{dino_feature_pyramid.1} parent=11 // pred_check
          %p491 = pneg %p201
        $region38: #{dino_feature_pyramid.1} parent=11 // pred_check_branch
          %493 = sbr.rel (%p491) target = $region40
        $region39: #{dino_feature_pyramid.1} parent=11 // pred_region
          _
        $region40: #{dino_feature_pyramid.1} parent=11 // pred_fallthru
          _
        // Predicated region
        $region41: #{dino_feature_pyramid.1} parent=11 // pred_check
          %p494 = pneg %p222
        $region42: #{dino_feature_pyramid.1} parent=11 // pred_check_branch
          %496 = sbr.rel (%p494) target = $region44
        $region43: #{dino_feature_pyramid.1} parent=11 // pred_region
          _
        $region44: #{dino_feature_pyramid.1} parent=11 // pred_fallthru
          _
        // Predicated region
        $region45: #{dino_feature_pyramid.1} parent=11 // pred_check
          %p497 = pneg %p243
        $region46: #{dino_feature_pyramid.1} parent=11 // pred_check_branch
          %499 = sbr.rel (%p497) target = $region48
        $region47: #{dino_feature_pyramid.1} parent=11 // pred_region
          _
        $region48: #{dino_feature_pyramid.1} parent=11 // pred_fallthru
          _
        // Predicated region
        $region49: #{dino_feature_pyramid.1} parent=11 // pred_check
          %p500 = pneg %p264
        $region50: #{dino_feature_pyramid.1} parent=11 // pred_check_branch
          %502 = sbr.rel (%p500) target = $region52
        $region51: #{dino_feature_pyramid.1} parent=11 // pred_region
          _
        $region52: #{dino_feature_pyramid.1} parent=11 // pred_fallthru
          _
        // Predicated region
        $region53: #{dino_feature_pyramid.1} parent=11 // pred_check
          %p503 = pneg %p285
        $region54: #{dino_feature_pyramid.1} parent=11 // pred_check_branch
          %505 = sbr.rel (%p503) target = $region56
        $region55: #{dino_feature_pyramid.1} parent=11 // pred_region
          _
        $region56: #{dino_feature_pyramid.1} parent=11 // pred_fallthru
          _
        // Predicated region
        $region57: #{dino_feature_pyramid.1} parent=11 // pred_check
          %p506 = pneg %p306
        $region58: #{dino_feature_pyramid.1} parent=11 // pred_check_branch
          %508 = sbr.rel (%p506) target = $region60
        $region59: #{dino_feature_pyramid.1} parent=11 // pred_region
          _
        $region60: #{dino_feature_pyramid.1} parent=11 // pred_fallthru
          _
        // Predicated region
        $region61: #{dino_feature_pyramid.1} parent=11 // pred_check
          %p509 = pneg %p327
        $region62: #{dino_feature_pyramid.1} parent=11 // pred_check_branch
          %511 = sbr.rel (%p509) target = $region64
        $region63: #{dino_feature_pyramid.1} parent=11 // pred_region
          _
        $region64: #{dino_feature_pyramid.1} parent=11 // pred_fallthru
          _
        // Predicated region
        $region65: #{dino_feature_pyramid.1} parent=11 // pred_check
          %p512 = pneg %p348
        $region66: #{dino_feature_pyramid.1} parent=11 // pred_check_branch
          %514 = sbr.rel (%p512) target = $region68
        $region67: #{dino_feature_pyramid.1} parent=11 // pred_region
          _
        $region68: #{dino_feature_pyramid.1} parent=11 // pred_fallthru
          _
        // Predicated region
        $region69: #{dino_feature_pyramid.1} parent=11 // pred_check
          %p515 = pneg %p369
        $region70: #{dino_feature_pyramid.1} parent=11 // pred_check_branch
          %517 = sbr.rel (%p515) target = $region72
        $region71: #{dino_feature_pyramid.1} parent=11 // pred_region
          _
        $region72: #{dino_feature_pyramid.1} parent=11 // pred_fallthru
          _
        // Predicated region
        $region73: #{dino_feature_pyramid.1} parent=11 // pred_check
          %p518 = pneg %p390
        $region74: #{dino_feature_pyramid.1} parent=11 // pred_check_branch
          %520 = sbr.rel (%p518) target = $region76
        $region75: #{dino_feature_pyramid.1} parent=11 // pred_region
          _
        $region76: #{dino_feature_pyramid.1} parent=11 // pred_fallthru
          _
        // Predicated region
        $region77: #{dino_feature_pyramid.1} parent=11 // pred_check
          %p521 = pneg %p411
        $region78: #{dino_feature_pyramid.1} parent=11 // pred_check_branch
          %523 = sbr.rel (%p521) target = $region80
        $region79: #{dino_feature_pyramid.1} parent=11 // pred_region
          _
        $region80: #{dino_feature_pyramid.1} parent=11 // pred_fallthru
          _
        // Predicated region
        $region81: #{dino_feature_pyramid.1} parent=11 // pred_check
          %p524 = pneg %p432
        $region82: #{dino_feature_pyramid.1} parent=11 // pred_check_branch
          %526 = sbr.rel (%p524) target = $region84
        $region83: #{dino_feature_pyramid.1} parent=11 // pred_region
          _
        $region84: #{dino_feature_pyramid.1} parent=11 // pred_fallthru
          _
      $region12: #{dino_feature_pyramid.1} parent=5 // pred_fallthru
        _
      %p527 = scmp.lt.s32.totalorder %s28, 2
      // Predicated region
      $region85: #{dino_feature_pyramid.1} parent=5 // pred_check
        %p528 = pneg %p527
      $region86: #{dino_feature_pyramid.1} parent=5 // pred_check_branch
        %530 = sbr.rel (%p528) target = $region88
      $region87: #{dino_feature_pyramid.1} parent=5 // pred_region
        // Predicated region
        $region89: #{dino_feature_pyramid.1} parent=87 // pred_check
          %p531 = pneg %p48
        $region90: #{dino_feature_pyramid.1} parent=87 // pred_check_branch
          %533 = sbr.rel (%p531) target = $region92
        $region91: #{dino_feature_pyramid.1} parent=87 // pred_region
          %p534 = scmp.lt.s32.totalorder %s28, 1
          %s535 = scalar_select %p534, %s28, 1
          %s536 = smul.addr %s535, 10
          %s537 = smul.addr %s536, 8
          %s538 = scalar_lea.vmem %s0, %s537
        $region92: #{dino_feature_pyramid.1} parent=87 // pred_fallthru
          _
      $region88: #{dino_feature_pyramid.1} parent=5 // pred_fallthru
        _
      %p539 = scmp.le.s32.totalorder 1, %s28
      %p540 = scmp.lt.s32.totalorder %s28, 3
      %p541 = pnand %p539, %p540
      %p542 = pneg %p541
      // Predicated region
      $region93: #{dino_feature_pyramid.1} parent=5 // pred_check
        _
      $region94: #{dino_feature_pyramid.1} parent=5 // pred_check_branch
        %544 = sbr.rel (%p541) target = $region96
      $region95: #{dino_feature_pyramid.1} parent=5 // pred_region
        %s545 = ssub.s32 %s28, 1
        %p546 = scmp.lt.s32.totalorder %s33, 1
        %s547 = scalar_select %p546, %s33, 1
        %s548 = smul.addr %s547, 10
        %s549 = smul.addr %s548, 8
        %s550 = scalar_lea.vmem %s0, %s549
        %p551 = pneg %p54
        %p552 = pneg %p51
        %p553 = pneg %p75
        %p554 = pneg %p72
        %p555 = pneg %p96
        %p556 = pneg %p93
        %p557 = pneg %p117
        %p558 = pneg %p114
        %p559 = pneg %p138
        %p560 = pneg %p135
        %p561 = pneg %p159
        %p562 = pneg %p156
        %p563 = pneg %p180
        %p564 = pneg %p177
        %p565 = pneg %p201
        %p566 = pneg %p198
        %p567 = pneg %p222
        %p568 = pneg %p219
        %p569 = pneg %p243
        %p570 = pneg %p240
        %p571 = pneg %p264
        %p572 = pneg %p261
        %p573 = pneg %p285
        %p574 = pneg %p282
        %p575 = pneg %p306
        %p576 = pneg %p303
        %p577 = pneg %p327
        %p578 = pneg %p324
        %p579 = pneg %p348
        %p580 = pneg %p345
        %p581 = pneg %p369
        %p582 = pneg %p366
        %p583 = pneg %p390
        %p584 = pneg %p387
        %p585 = pneg %p411
        %p586 = pneg %p408
        %p587 = pneg %p432
        %p588 = pneg %p429
        %p589 = pneg %p458
        %p590 = pneg %p455
        %s591 = sand.u32 %s445, 1
        %s592 = scalar_lea.sflag [#allocation4], %s591
        %s593 = sand.u32 %s445, 1
        %s594 = smul.addr %s593, 16
        %s595 = scalar_lea.vmem [#allocation3], %s594
        %p596 = scmp.lt.s32.totalorder %s33, 1
        %s597 = scalar_select %p596, %s33, 1
        %s598 = smul.addr %s597, 10
        %s599 = smul.addr %s598, 8
        %s600 = scalar_lea.vmem %s0, %s599
        %v602 = vld [vmem:[%s600] sm:$0xff]
        %v603 = vld [vmem:[%s600 + $0x8] sm:$0xff]
        %v604 = vld [vmem:[%s600 + $0x10] sm:$0xff]
        %v605 = vld [vmem:[%s600 + $0x18] sm:$0xff]
        %v606 = vld [vmem:[%s600 + $0x20] sm:$0xff]
        %v607 = vld [vmem:[%s600 + $0x28] sm:$0xff]
        %v608 = vld [vmem:[%s600 + $0x30] sm:$0xff]
        %v609 = vld [vmem:[%s600 + $0x38] sm:$0xff]
        %v610 = vld [vmem:[%s600 + $0x40] sm:$0xff]
        %v611 = vld [vmem:[%s600 + $0x48] sm:$0xff]
        %v612 = vpack.c.bf16 %v607, %v602
        %v613 = vpack.c.bf16 %v608, %v603
        %v614 = vpack.c.bf16 %v609, %v604
        %v615 = vpack.c.bf16 %v610, %v605
        %v616 = vpack.c.bf16 %v611, %v606
        %v617 = vld [vmem:[%s1] sm:$0xf]
        %v618 = vld [vmem:[%s1 + $0x4] sm:$0xf]
        %v619 = vld [vmem:[%s1 + $0x8] sm:$0xf]
        %v620 = vld [vmem:[%s1 + $0xc] sm:$0xf]
        %v621 = vld [vmem:[%s1 + $0x10] sm:$0xf]
        %v622 = vld [vmem:[%s1 + $0x14] sm:$0xf]
        %v623 = vld [vmem:[%s1 + $0x18] sm:$0xf]
        %v624 = vld [vmem:[%s1 + $0x1c] sm:$0xf]
        %v625 = vld [vmem:[%s1 + $0x20] sm:$0xf]
        %v626 = vld [vmem:[%s1 + $0x24] sm:$0xf]
        %v627 = vld [vmem:[%s1 + $0x28] sm:$0xf]
        %v628 = vld [vmem:[%s1 + $0x2c] sm:$0xf]
        %v629 = vld [vmem:[%s1 + $0x30] sm:$0xf]
        %v630 = vld [vmem:[%s1 + $0x34] sm:$0xf]
        %v631 = vld [vmem:[%s1 + $0x38] sm:$0xf]
        %v632 = vld [vmem:[%s1 + $0x3c] sm:$0xf]
        %v633 = vld [vmem:[%s1 + $0x40] sm:$0xf]
        %v634 = vld [vmem:[%s1 + $0x44] sm:$0xf]
        %v635 = vld [vmem:[%s1 + $0x48] sm:$0xf]
        %v636 = vld [vmem:[%s1 + $0x4c] sm:$0xf]
        %v637 = vld [vmem:[%s1 + $0x50] sm:$0xf]
        %v638 = vld [vmem:[%s1 + $0x54] sm:$0xf]
        %v639 = vld [vmem:[%s1 + $0x58] sm:$0xf]
        %v640 = vld [vmem:[%s1 + $0x5c] sm:$0xf]
        %v641 = vld [vmem:[%s1 + $0x60] sm:$0xf]
        %v642 = vld [vmem:[%s1 + $0x64] sm:$0xf]
        %v643 = vld [vmem:[%s1 + $0x68] sm:$0xf]
        %v644 = vld [vmem:[%s1 + $0x6c] sm:$0xf]
        %v645 = vld [vmem:[%s1 + $0x70] sm:$0xf]
        %v646 = vld [vmem:[%s1 + $0x74] sm:$0xf]
        %v647 = vld [vmem:[%s1 + $0x78] sm:$0xf]
        %v648 = vld [vmem:[%s1 + $0x7c] sm:$0xf]
        %v649 = vld [vmem:[%s1 + $0x80] sm:$0xf]
        %v650 = vld [vmem:[%s1 + $0x84] sm:$0xf]
        %v651 = vld [vmem:[%s1 + $0x88] sm:$0xf]
        %v652 = vld [vmem:[%s1 + $0x8c] sm:$0xf]
        %v653 = vld [vmem:[%s1 + $0x90] sm:$0xf]
        %v654 = vld [vmem:[%s1 + $0x94] sm:$0xf]
        %v655 = vld [vmem:[%s1 + $0x98] sm:$0xf]
        %v656 = vld [vmem:[%s1 + $0x9c] sm:$0xf]
        %v657 = vld [vmem:[%s1 + $0xa0] sm:$0xf]
        %v658 = vld [vmem:[%s1 + $0xa4] sm:$0xf]
        %v659 = vld [vmem:[%s1 + $0xa8] sm:$0xf]
        %v660 = vld [vmem:[%s1 + $0xac] sm:$0xf]
        %v661 = vld [vmem:[%s1 + $0xb0] sm:$0xf]
        %v662 = vld [vmem:[%s1 + $0xb4] sm:$0xf]
        %v663 = vld [vmem:[%s1 + $0xb8] sm:$0xf]
        %v664 = vld [vmem:[%s1 + $0xbc] sm:$0xf]
        %v665 = vld [vmem:[%s1 + $0xc0] sm:$0xf]
        %v666 = vld [vmem:[%s1 + $0xc4] sm:$0xf]
        %v667 = vld [vmem:[%s1 + $0xc8] sm:$0xf]
        %v668 = vld [vmem:[%s1 + $0xcc] sm:$0xf]
        %v669 = vld [vmem:[%s1 + $0xd0] sm:$0xf]
        %v670 = vld [vmem:[%s1 + $0xd4] sm:$0xf]
        %v671 = vld [vmem:[%s1 + $0xd8] sm:$0xf]
        %v672 = vld [vmem:[%s1 + $0xdc] sm:$0xf]
        %v673 = vld [vmem:[%s1 + $0xe0] sm:$0xf]
        %v674 = vld [vmem:[%s1 + $0xe4] sm:$0xf]
        %v675 = vld [vmem:[%s1 + $0xe8] sm:$0xf]
        %v676 = vld [vmem:[%s1 + $0xec] sm:$0xf]
        %v677 = vld [vmem:[%s1 + $0xf0] sm:$0xf]
        %v678 = vld [vmem:[%s1 + $0xf4] sm:$0xf]
        %v679 = vld [vmem:[%s1 + $0xf8] sm:$0xf]
        %v680 = vld [vmem:[%s1 + $0xfc] sm:$0xf]
        %v681 = vld [vmem:[%s1 + $0x100] sm:$0xf]
        %v682 = vld [vmem:[%s1 + $0x104] sm:$0xf]
        %v683 = vld [vmem:[%s1 + $0x108] sm:$0xf]
        %v684 = vld [vmem:[%s1 + $0x10c] sm:$0xf]
        %v685 = vld [vmem:[%s1 + $0x110] sm:$0xf]
        %v686 = vld [vmem:[%s1 + $0x114] sm:$0xf]
        %v687 = vld [vmem:[%s1 + $0x118] sm:$0xf]
        %v688 = vld [vmem:[%s1 + $0x11c] sm:$0xf]
        %v689 = vld [vmem:[%s1 + $0x120] sm:$0xf]
        %v690 = vld [vmem:[%s1 + $0x124] sm:$0xf]
        %v691 = vld [vmem:[%s1 + $0x128] sm:$0xf]
        %v692 = vld [vmem:[%s1 + $0x12c] sm:$0xf]
        %v693 = vld [vmem:[%s1 + $0x130] sm:$0xf]
        %v694 = vld [vmem:[%s1 + $0x134] sm:$0xf]
        %v695 = vld [vmem:[%s1 + $0x138] sm:$0xf]
        %v696 = vld [vmem:[%s1 + $0x13c] sm:$0xf]
        %v697 = vld [vmem:[%s2] sm:$0x1]
        %v699 = vlaneseq
        %v700 = vshrl.u32 %v699, 7
        %v701 = vsub.s32 0, %v700
        %v702 = vrot.slane %v697, %v701
        %v784 = vunpack.c.l.b16 %v617
        %v785 = vunpack.c.l.b16 %v618
        %v786 = vunpack.c.l.b16 %v619
        %v787 = vunpack.c.l.b16 %v620
        %v788 = vunpack.c.l.b16 %v621
        %v789 = vunpack.c.l.b16 %v622
        %v790 = vunpack.c.l.b16 %v623
        %v791 = vunpack.c.l.b16 %v624
        %v792 = vunpack.c.l.b16 %v625
        %v793 = vunpack.c.l.b16 %v626
        %v794 = vunpack.c.l.b16 %v627
        %v795 = vunpack.c.l.b16 %v628
        %v796 = vunpack.c.l.b16 %v629
        %v797 = vunpack.c.l.b16 %v630
        %v798 = vunpack.c.l.b16 %v631
        %v799 = vunpack.c.l.b16 %v632
        %v800 = vunpack.c.l.b16 %v633
        %v801 = vunpack.c.l.b16 %v634
        %v802 = vunpack.c.l.b16 %v635
        %v803 = vunpack.c.l.b16 %v636
        %v804 = vunpack.c.l.b16 %v637
        %v805 = vunpack.c.l.b16 %v638
        %v806 = vunpack.c.l.b16 %v639
        %v807 = vunpack.c.l.b16 %v640
        %v808 = vunpack.c.l.b16 %v641
        %v809 = vunpack.c.l.b16 %v642
        %v810 = vunpack.c.l.b16 %v643
        %v811 = vunpack.c.l.b16 %v644
        %v812 = vunpack.c.l.b16 %v645
        %v813 = vunpack.c.l.b16 %v646
        %v814 = vunpack.c.l.b16 %v647
        %v815 = vunpack.c.l.b16 %v648
        %v816 = vunpack.c.l.b16 %v649
        %v817 = vunpack.c.l.b16 %v650
        %v818 = vunpack.c.l.b16 %v651
        %v819 = vunpack.c.l.b16 %v652
        %v820 = vunpack.c.l.b16 %v653
        %v821 = vunpack.c.l.b16 %v654
        %v822 = vunpack.c.l.b16 %v655
        %v823 = vunpack.c.l.b16 %v656
        %v824 = vunpack.c.l.b16 %v657
        %v825 = vunpack.c.l.b16 %v658
        %v826 = vunpack.c.l.b16 %v659
        %v827 = vunpack.c.l.b16 %v660
        %v828 = vunpack.c.l.b16 %v661
        %v829 = vunpack.c.l.b16 %v662
        %v830 = vunpack.c.l.b16 %v663
        %v831 = vunpack.c.l.b16 %v664
        %v832 = vunpack.c.l.b16 %v665
        %v833 = vunpack.c.l.b16 %v666
        %v834 = vunpack.c.l.b16 %v667
        %v835 = vunpack.c.l.b16 %v668
        %v836 = vunpack.c.l.b16 %v669
        %v837 = vunpack.c.l.b16 %v670
        %v838 = vunpack.c.l.b16 %v671
        %v839 = vunpack.c.l.b16 %v672
        %v840 = vunpack.c.l.b16 %v673
        %v841 = vunpack.c.l.b16 %v674
        %v842 = vunpack.c.l.b16 %v675
        %v843 = vunpack.c.l.b16 %v676
        %v844 = vunpack.c.l.b16 %v677
        %v845 = vunpack.c.l.b16 %v678
        %v846 = vunpack.c.l.b16 %v679
        %v847 = vunpack.c.l.b16 %v680
        %v848 = vunpack.c.l.b16 %v681
        %v849 = vunpack.c.l.b16 %v682
        %v850 = vunpack.c.l.b16 %v683
        %v851 = vunpack.c.l.b16 %v684
        %v852 = vunpack.c.l.b16 %v685
        %v853 = vunpack.c.l.b16 %v686
        %v854 = vunpack.c.l.b16 %v687
        %v855 = vunpack.c.l.b16 %v688
        %v856 = vunpack.c.l.b16 %v689
        %v857 = vunpack.c.l.b16 %v690
        %v858 = vunpack.c.l.b16 %v691
        %v859 = vunpack.c.l.b16 %v692
        %v860 = vunpack.c.l.b16 %v693
        %v861 = vunpack.c.l.b16 %v694
        %v862 = vunpack.c.l.b16 %v695
        %v863 = vunpack.c.l.b16 %v696
        %v864 = vpack.c.b16 %v785, %v784
        %v865 = vpack.c.b16 %v787, %v786
        %v866 = vpack.c.b16 %v789, %v788
        %v867 = vpack.c.b16 %v791, %v790
        %v868 = vpack.c.b16 %v793, %v792
        %v869 = vpack.c.b16 %v795, %v794
        %v870 = vpack.c.b16 %v797, %v796
        %v871 = vpack.c.b16 %v799, %v798
        %v872 = vpack.c.b16 %v801, %v800
        %v873 = vpack.c.b16 %v803, %v802
        %v874 = vpack.c.b16 %v805, %v804
        %v875 = vpack.c.b16 %v807, %v806
        %v876 = vpack.c.b16 %v809, %v808
        %v877 = vpack.c.b16 %v811, %v810
        %v878 = vpack.c.b16 %v813, %v812
        %v879 = vpack.c.b16 %v815, %v814
        %v880 = vpack.c.b16 %v817, %v816
        %v881 = vpack.c.b16 %v819, %v818
        %v882 = vpack.c.b16 %v821, %v820
        %v883 = vpack.c.b16 %v823, %v822
        %v884 = vpack.c.b16 %v825, %v824
        %v885 = vpack.c.b16 %v827, %v826
        %v886 = vpack.c.b16 %v829, %v828
        %v887 = vpack.c.b16 %v831, %v830
        %v888 = vpack.c.b16 %v833, %v832
        %v889 = vpack.c.b16 %v835, %v834
        %v890 = vpack.c.b16 %v837, %v836
        %v891 = vpack.c.b16 %v839, %v838
        %v892 = vpack.c.b16 %v841, %v840
        %v893 = vpack.c.b16 %v843, %v842
        %v894 = vpack.c.b16 %v845, %v844
        %v895 = vpack.c.b16 %v847, %v846
        %v896 = vpack.c.b16 %v849, %v848
        %v897 = vpack.c.b16 %v851, %v850
        %v898 = vpack.c.b16 %v853, %v852
        %v899 = vpack.c.b16 %v855, %v854
        %v900 = vpack.c.b16 %v857, %v856
        %v901 = vpack.c.b16 %v859, %v858
        %v902 = vpack.c.b16 %v861, %v860
        %v903 = vpack.c.b16 %v863, %v862
        %944 = vmatprep.subr.bf16.mxu0 0
        %945 = vmatpush1.bf16.msra.mxu0 %v864
        %946 = vmatprep.subr.bf16.mxu0 0
        %947 = vmatpush1.bf16.msra.mxu0 %v865
        %948 = vmatprep.subr.bf16.mxu0 0
        %949 = vmatpush1.bf16.msra.mxu0 %v866
        %950 = vmatprep.subr.bf16.mxu0 0
        %951 = vmatpush1.bf16.msra.mxu0 %v867
        %952 = vmatprep.subr.bf16.mxu0 0
        %953 = vmatpush1.bf16.msra.mxu0 %v868
        %954 = vmatprep.subr.bf16.mxu0 0
        %955 = vmatpush1.bf16.msra.mxu0 %v869
        %956 = vmatprep.subr.bf16.mxu0 0
        %957 = vmatpush1.bf16.msra.mxu0 %v870
        %958 = vmatprep.subr.bf16.mxu0 0
        %959 = vmatpush1.bf16.msra.mxu0 %v871
        %960 = vmatprep.subr.bf16.mxu0 0
        %961 = vmatpush1.bf16.msra.mxu0 %v872
        %962 = vmatprep.subr.bf16.mxu0 0
        %963 = vmatpush1.bf16.msra.mxu0 %v873
        %964 = vmatprep.subr.bf16.mxu0 0
        %965 = vmatpush1.bf16.msra.mxu0 %v874
        %966 = vmatprep.subr.bf16.mxu0 0
        %967 = vmatpush1.bf16.msra.mxu0 %v875
        %968 = vmatprep.subr.bf16.mxu0 0
        %969 = vmatpush1.bf16.msra.mxu0 %v876
        %970 = vmatprep.subr.bf16.mxu0 0
        %971 = vmatpush1.bf16.msra.mxu0 %v877
        %972 = vmatprep.subr.bf16.mxu0 0
        %973 = vmatpush1.bf16.msra.mxu0 %v878
        %974 = vmatprep.subr.bf16.mxu0 0
        %975 = vmatpush1.bf16.msra.mxu0 %v879
        %976 = vmatprep.mubr.bf16.mxu0 %v613
        %977 = vmatmul.mubr.bf16.gmra.mrb[0].mxu0 %v612
        %v978 = vpop.f32.mrb[0].mxu0
        %v979 = vadd.f32 %v702, %v978
        %v980 = vpop.f32.mrb[0].mxu0
        %v981 = vpop.f32.mrb[0].mxu0
        %v982 = vadd.f32 %v702, %v981
        %v983 = vpop.f32.mrb[0].mxu0
        %984 = vdwg.mxu0
        %985 = vmatprep.subr.bf16.mxu0 0
        %986 = vmatpush1.bf16.msra.mxu0 %v880
        %987 = vmatprep.subr.bf16.mxu0 0
        %988 = vmatpush1.bf16.msra.mxu0 %v881
        %989 = vmatprep.subr.bf16.mxu0 0
        %990 = vmatpush1.bf16.msra.mxu0 %v882
        %991 = vmatprep.subr.bf16.mxu0 0
        %992 = vmatpush1.bf16.msra.mxu0 %v883
        %993 = vmatprep.subr.bf16.mxu0 0
        %994 = vmatpush1.bf16.msra.mxu0 %v884
        %995 = vmatprep.subr.bf16.mxu0 0
        %996 = vmatpush1.bf16.msra.mxu0 %v885
        %997 = vmatprep.subr.bf16.mxu0 0
        %998 = vmatpush1.bf16.msra.mxu0 %v886
        %999 = vmatprep.subr.bf16.mxu0 0
        %1000 = vmatpush1.bf16.msra.mxu0 %v887
        %1001 = vmatprep.subr.bf16.mxu0 0
        %1002 = vmatpush1.bf16.msra.mxu0 %v888
        %1003 = vmatprep.subr.bf16.mxu0 0
        %1004 = vmatpush1.bf16.msra.mxu0 %v889
        %1005 = vmatprep.subr.bf16.mxu0 0
        %1006 = vmatpush1.bf16.msra.mxu0 %v890
        %1007 = vmatprep.subr.bf16.mxu0 0
        %1008 = vmatpush1.bf16.msra.mxu0 %v891
        %1009 = vmatprep.subr.bf16.mxu0 0
        %1010 = vmatpush1.bf16.msra.mxu0 %v892
        %1011 = vmatprep.subr.bf16.mxu0 0
        %1012 = vmatpush1.bf16.msra.mxu0 %v893
        %1013 = vmatprep.subr.bf16.mxu0 0
        %1014 = vmatpush1.bf16.msra.mxu0 %v894
        %1015 = vmatprep.subr.bf16.mxu0 0
        %1016 = vmatpush1.bf16.msra.mxu0 %v895
        %1017 = vmatprep.mubr.bf16.mxu0 %v615
        %1018 = vmatmul.mubr.bf16.gmra.mrb[0].mxu0 %v614
        %v1019 = vpop.f32.mrb[0].mxu0
        %v1020 = vadd.f32 %v979, %v1019
        %v1021 = vpop.f32.mrb[0].mxu0
        %v1022 = vpop.f32.mrb[0].mxu0
        %v1023 = vadd.f32 %v982, %v1022
        %v1024 = vpop.f32.mrb[0].mxu0
        %1025 = vdwg.mxu0
        %1026 = vmatprep.subr.bf16.mxu0 0
        %1027 = vmatpush1.bf16.msra.mxu0 %v896
        %1028 = vmatprep.subr.bf16.mxu0 0
        %1029 = vmatpush1.bf16.msra.mxu0 %v897
        %1030 = vmatprep.subr.bf16.mxu0 0
        %1031 = vmatpush1.bf16.msra.mxu0 %v898
        %1032 = vmatprep.subr.bf16.mxu0 0
        %1033 = vmatpush1.bf16.msra.mxu0 %v899
        %1034 = vmatprep.subr.bf16.mxu0 0
        %1035 = vmatpush1.bf16.msra.mxu0 %v900
        %1036 = vmatprep.subr.bf16.mxu0 0
        %1037 = vmatpush1.bf16.msra.mxu0 %v901
        %1038 = vmatprep.subr.bf16.mxu0 0
        %1039 = vmatpush1.bf16.msra.mxu0 %v902
        %1040 = vmatprep.subr.bf16.mxu0 0
        %1041 = vmatpush1.bf16.msra.mxu0 %v903
        %1042 = vmatprep.subr.bf16.mxu0 0
        %1043 = vmatpush1.bf16.msra.mxu0 0
        %1044 = vmatprep.subr.bf16.mxu0 0
        %1045 = vmatpush1.bf16.msra.mxu0 0
        %1046 = vmatprep.subr.bf16.mxu0 0
        %1047 = vmatpush1.bf16.msra.mxu0 0
        %1048 = vmatprep.subr.bf16.mxu0 0
        %1049 = vmatpush1.bf16.msra.mxu0 0
        %1050 = vmatprep.subr.bf16.mxu0 0
        %1051 = vmatpush1.bf16.msra.mxu0 0
        %1052 = vmatprep.subr.bf16.mxu0 0
        %1053 = vmatpush1.bf16.msra.mxu0 0
        %1054 = vmatprep.subr.bf16.mxu0 0
        %1055 = vmatpush1.bf16.msra.mxu0 0
        %1056 = vmatprep.subr.bf16.mxu0 0
        %1057 = vmatpush1.bf16.msra.mxu0 0
        %1058 = vmatprep.mubr.bf16.mxu0 0
        %1059 = vmatmul.mubr.bf16.gmra.mrb[0].mxu0 %v616
        %v1060 = vpop.f32.mrb[0].mxu0
        %v1061 = vadd.f32 %v1020, %v1060
        %v1062 = vpop.f32.mrb[0].mxu0
        %v1063 = vpop.f32.mrb[0].mxu0
        %v1064 = vadd.f32 %v1023, %v1063
        %v1065 = vpop.f32.mrb[0].mxu0
        %1066 = vdwg.mxu0
        %vm1067 = vcmask 523264
        %1068 = vst.msk [vmem:[#allocation2] sm:$0xff] %vm1067, 0.0
        %1069 = vst.msk [vmem:[#allocation2 + $0x8] sm:$0xff] %vm1067, 0.0
        %1070 = vst.msk [vmem:[#allocation2 + $0x10] sm:$0xff] %vm1067, 0.0
        %1071 = vst.msk [vmem:[#allocation2] sm:$0xff] %vm1067, %v1061
        %1072 = vst.msk [vmem:[#allocation2 + $0x8] sm:$0xff] %vm1067, %v1064
        %v1073 = vld [vmem:[%s3] sm:$0x1]
        %vm1074 = vcmask 516096
        %1075 = vst.msk [vmem:[#allocation2 + $0x10] sm:$0x1] %vm1074, %v1073
        %v1076 = vld [vmem:[#allocation2] sm:$0xff]
        %v1077 = vld [vmem:[#allocation2 + $0x8] sm:$0xff]
        %v1078 = vld [vmem:[#allocation2 + $0x10] sm:$0xff]
        %v1079 = vld [vmem:[%s4] sm:$0xff]
        %v1080 = vld [vmem:[%s4 + $0x8] sm:$0xff]
        %v1081 = vld [vmem:[%s4 + $0x10] sm:$0xff]
        %v1082 = vadd.f32 %v1076, %v1079
        %v1083 = vadd.f32 %v1077, %v1080
        %v1084 = vadd.f32 %v1078, %v1081
        %v1085 = vlaneseq
        %v1086 = vand.u32 %v1085, 127
        %vm1087 = vcmp.lt.s32.totalorder %v1086, 17
        %v1088 = vld [vmem:[%s5] sm:$0x1]
        %v1089 = vld [vmem:[%s6] sm:$0x1]
        %v1090 = vsel %vm1067, %v1082, 0.0
        %1091 = vadd.xlane.f32.xlu0 %v1090
        %v1092 = vpop.xlane.xlu0 %1091
        %v1093 = vsel %vm1067, %v1083, 0.0
        %1094 = vadd.xlane.f32.xlu0 %v1093
        %v1095 = vpop.xlane.xlu0 %1094
        %v1096 = vsel %vm1067, %v1084, 0.0
        %1097 = vadd.xlane.f32.xlu0 %v1096
        %v1098 = vpop.xlane.xlu0 %1097
        %v1099 = vrcp.pop 64.0
        %v1100 = vmul.f32 %v1092, %v1099
        %v1101 = vmul.f32 %v1095, %v1099
        %v1102 = vmul.f32 %v1098, %v1099
        %v1103 = vsub.f32 %v1082, %v1100
        %v1104 = vsub.f32 %v1083, %v1101
        %v1105 = vsub.f32 %v1084, %v1102
        %v1106 = vmul.f32 %v1103, %v1103
        %v1107 = vmul.f32 %v1104, %v1104
        %v1108 = vmul.f32 %v1105, %v1105
        %v1109 = vsel %vm1067, %v1106, 0.0
        %1110 = vadd.xlane.f32.xlu0 %v1109
        %v1111 = vpop.xlane.xlu0 %1110
        %v1112 = vsel %vm1067, %v1107, 0.0
        %1113 = vadd.xlane.f32.xlu0 %v1112
        %v1114 = vpop.xlane.xlu0 %1113
        %v1115 = vsel %vm1067, %v1108, 0.0
        %1116 = vadd.xlane.f32.xlu0 %v1115
        %v1117 = vpop.xlane.xlu0 %1116
        %v1118 = vmul.f32 %v1111, %v1099
        %v1119 = vmul.f32 %v1114, %v1099
        %v1120 = vmul.f32 %v1117, %v1099
        %v1121 = vadd.f32 %v1118, 1e-06
        %v1122 = vadd.f32 %v1119, 1e-06
        %v1123 = vadd.f32 %v1120, 1e-06
        %v1124 = vrsqrt.pop %v1121
        %v1125 = vrsqrt.pop %v1122
        %v1126 = vrsqrt.pop %v1123
        %v1127 = vmul.f32 %v1103, %v1124
        %v1128 = vmul.f32 %v1104, %v1125
        %v1129 = vmul.f32 %v1105, %v1126
        %v1131 = vlaneseq
        %v1132 = vshrl.u32 %v1131, 7
        %v1133 = vsub.s32 0, %v1132
        %v1134 = vrot.slane %v1088, %v1133
        %v1136 = vmul.f32 %v1127, %v1134
        %v1137 = vmul.f32 %v1128, %v1134
        %v1138 = vmul.f32 %v1129, %v1134
        %v1140 = vlaneseq
        %v1141 = vshrl.u32 %v1140, 7
        %v1142 = vsub.s32 0, %v1141
        %v1143 = vrot.slane %v1089, %v1142
        %v1145 = vadd.f32 %v1136, %v1143
        %v1146 = vadd.f32 %v1137, %v1143
        %v1147 = vadd.f32 %v1138, %v1143
        %v1148 = vpack.c.bf16 %v1146, %v1145
        %v1149 = vpack.c.bf16 %v1147, %v1147
        %v1150 = vld [vmem:[%s7] sm:$0xff]
        %v1151 = vld [vmem:[%s7 + $0x8] sm:$0xff]
        %v1152 = vld [vmem:[%s7 + $0x10] sm:$0xff]
        %v1153 = vld [vmem:[%s7 + $0x18] sm:$0xff]
        %v1154 = vld [vmem:[%s7 + $0x20] sm:$0xff]
        %v1155 = vld [vmem:[%s7 + $0x28] sm:$0xff]
        %v1156 = vld [vmem:[%s7 + $0x30] sm:$0xff]
        %v1157 = vld [vmem:[%s7 + $0x38] sm:$0xff]
        %v1158 = vld [vmem:[%s8] sm:$0x3]
        %v1160 = vlaneseq
        %v1161 = vshrl.u32 %v1160, 7
        %v1162 = vsub.s32 0, %v1161
        %v1163 = vrot.slane %v1158, %v1162
        %v1164 = vlaneseq
        %v1165 = vshrl.u32 %v1164, 7
        %v1166 = vsub.s32 1, %v1165
        %v1167 = vrot.slane %v1158, %v1166
        %v1178 = vunpack.c.l.b16 %v1150
        %v1179 = vunpack.c.h.b16 %v1150
        %v1180 = vunpack.c.l.b16 %v1151
        %v1181 = vunpack.c.h.b16 %v1151
        %v1182 = vunpack.c.l.b16 %v1152
        %v1183 = vunpack.c.h.b16 %v1152
        %v1184 = vunpack.c.l.b16 %v1153
        %v1185 = vunpack.c.h.b16 %v1153
        %v1186 = vunpack.c.l.b16 %v1154
        %v1187 = vunpack.c.h.b16 %v1154
        %v1188 = vunpack.c.l.b16 %v1155
        %v1189 = vunpack.c.h.b16 %v1155
        %v1190 = vunpack.c.l.b16 %v1156
        %v1191 = vunpack.c.h.b16 %v1156
        %v1192 = vunpack.c.l.b16 %v1157
        %v1193 = vunpack.c.h.b16 %v1157
        %v1194 = vpack.c.b16 %v1180, %v1178
        %v1195 = vpack.c.b16 %v1181, %v1179
        %v1196 = vpack.c.b16 %v1184, %v1182
        %v1197 = vpack.c.b16 %v1185, %v1183
        %v1198 = vpack.c.b16 %v1188, %v1186
        %v1199 = vpack.c.b16 %v1189, %v1187
        %v1200 = vpack.c.b16 %v1192, %v1190
        %v1201 = vpack.c.b16 %v1193, %v1191
        %v1211 = vsel %vm1067, %v1148, 0
        %v1214 = vsel %vm1067, %v1149, 0
        %1216 = vmatprep.subr.bf16.mxu0 %v1195
        %1217 = vmatpush1.bf16.msra.mxu0 %v1194
        %1218 = vmatprep.subr.bf16.mxu0 %v1197
        %1219 = vmatpush1.bf16.msra.mxu0 %v1196
        %1220 = vmatprep.subr.bf16.mxu0 %v1199
        %1221 = vmatpush1.bf16.msra.mxu0 %v1198
        %1222 = vmatprep.subr.bf16.mxu0 %v1201
        %1223 = vmatpush1.bf16.msra.mxu0 %v1200
        %1224 = vmatprep.subr.bf16.mxu0 0
        %1225 = vmatpush1.bf16.msra.mxu0 0
        %1226 = vmatprep.subr.bf16.mxu0 0
        %1227 = vmatpush1.bf16.msra.mxu0 0
        %1228 = vmatprep.subr.bf16.mxu0 0
        %1229 = vmatpush1.bf16.msra.mxu0 0
        %1230 = vmatprep.subr.bf16.mxu0 0
        %1231 = vmatpush1.bf16.msra.mxu0 0
        %1232 = vmatprep.subr.bf16.mxu0 0
        %1233 = vmatpush1.bf16.msra.mxu0 0
        %1234 = vmatprep.subr.bf16.mxu0 0
        %1235 = vmatpush1.bf16.msra.mxu0 0
        %1236 = vmatprep.subr.bf16.mxu0 0
        %1237 = vmatpush1.bf16.msra.mxu0 0
        %1238 = vmatprep.subr.bf16.mxu0 0
        %1239 = vmatpush1.bf16.msra.mxu0 0
        %1240 = vmatprep.subr.bf16.mxu0 0
        %1241 = vmatpush1.bf16.msra.mxu0 0
        %1242 = vmatprep.subr.bf16.mxu0 0
        %1243 = vmatpush1.bf16.msra.mxu0 0
        %1244 = vmatprep.subr.bf16.mxu0 0
        %1245 = vmatpush1.bf16.msra.mxu0 0
        %1246 = vmatprep.subr.bf16.mxu0 0
        %1247 = vmatpush1.bf16.msra.mxu0 0
        %1248 = vmatprep.mubr.bf16.mxu0 0
        %1249 = vmatmul.mubr.bf16.gmra.mrb[0].mxu0 %v1211
        %v1250 = vpop.f32.mrb[0].mxu0
        %v1251 = vadd.f32 %v1163, %v1250
        %v1252 = vpop.f32.mrb[0].mxu0
        %v1253 = vadd.f32 %v1167, %v1252
        %v1254 = vpop.f32.mrb[0].mxu0
        %v1255 = vadd.f32 %v1163, %v1254
        %v1256 = vpop.f32.mrb[0].mxu0
        %v1257 = vadd.f32 %v1167, %v1256
        %1258 = vmatprep.mubr.bf16.mxu0 0
        %1259 = vmatmul.mubr.bf16.gmra.mrb[0].mxu0 %v1214
        %v1260 = vpop.f32.mrb[0].mxu0
        %v1261 = vadd.f32 %v1163, %v1260
        %v1262 = vpop.f32.mrb[0].mxu0
        %v1263 = vadd.f32 %v1167, %v1262
        %v1264 = vpop.f32.mrb[0].mxu0
        %v1265 = vpop.f32.mrb[0].mxu0
        %1266 = vdwg.mxu0
        %v1267 = vld [vmem:[%s9] sm:$0xf]
        %v1268 = vld [vmem:[%s9 + $0x4] sm:$0xf]
        %v1269 = vld [vmem:[%s9 + $0x8] sm:$0xf]
        %v1270 = vld [vmem:[%s9 + $0xc] sm:$0xf]
        %v1271 = vld [vmem:[%s9 + $0x10] sm:$0xf]
        %v1272 = vld [vmem:[%s9 + $0x14] sm:$0xf]
        %v1273 = vld [vmem:[%s9 + $0x18] sm:$0xf]
        %v1274 = vld [vmem:[%s9 + $0x1c] sm:$0xf]
        %v1275 = vpack.c.bf16 %v1255, %v1251
        %v1276 = vpack.c.bf16 %v1261, %v1261
        %v1277 = vpack.c.bf16 %v1257, %v1253
        %v1278 = vpack.c.bf16 %v1263, %v1263
        %1281 = vrot.lane.b32.xlu0 %v1275, 64
        %v1282 = vpop.permute.xlu0 %1281
        %1283 = vrot.lane.b32.xlu0 %v1276, 64
        %v1284 = vpop.permute.xlu0 %1283
        %vm1285 = vcmask 261120
        %v1287 = vsel %vm1285, %v1275, 0
        %v1290 = vsel %vm1285, %v1276, 0
        %v1293 = vsel %vm1285, %v1282, 0
        %v1296 = vsel %vm1285, %v1284, 0
        %1298 = vmatprep.subr.bf16.mxu0 0
        %1299 = vmatpush1.bf16.xpose.msra.mxu0 %v1293
        %1300 = vmatprep.subr.bf16.mxu0 0
        %1301 = vmatpush1.bf16.xpose.msra.mxu0 %v1296
        %1302 = vmatprep.subr.bf16.mxu0 0
        %1303 = vmatpush1.bf16.xpose.msra.mxu0 0
        %1304 = vmatprep.subr.bf16.mxu0 0
        %1305 = vmatpush1.bf16.xpose.msra.mxu0 0
        %1306 = vmatprep.subr.bf16.mxu0 0
        %1307 = vmatpush1.bf16.xpose.msra.mxu0 0
        %1308 = vmatprep.subr.bf16.mxu0 0
        %1309 = vmatpush1.bf16.xpose.msra.mxu0 0
        %1310 = vmatprep.subr.bf16.mxu0 0
        %1311 = vmatpush1.bf16.xpose.msra.mxu0 0
        %1312 = vmatprep.subr.bf16.mxu0 0
        %1313 = vmatpush1.bf16.xpose.msra.mxu0 0
        %1314 = vmatprep.subr.bf16.mxu0 0
        %1315 = vmatpush1.bf16.xpose.msra.mxu0 0
        %1316 = vmatprep.subr.bf16.mxu0 0
        %1317 = vmatpush1.bf16.xpose.msra.mxu0 0
        %1318 = vmatprep.subr.bf16.mxu0 0
        %1319 = vmatpush1.bf16.xpose.msra.mxu0 0
        %1320 = vmatprep.subr.bf16.mxu0 0
        %1321 = vmatpush1.bf16.xpose.msra.mxu0 0
        %1322 = vmatprep.subr.bf16.mxu0 0
        %1323 = vmatpush1.bf16.xpose.msra.mxu0 0
        %1324 = vmatprep.subr.bf16.mxu0 0
        %1325 = vmatpush1.bf16.xpose.msra.mxu0 0
        %1326 = vmatprep.subr.bf16.mxu0 0
        %1327 = vmatpush1.bf16.xpose.msra.mxu0 0
        %1328 = vmatprep.subr.bf16.mxu0 0
        %1329 = vmatpush1.bf16.xpose.msra.mxu0 0
        %1330 = vmatprep.mubr.bf16.mxu0 0
        %1331 = vmatmul.mubr.bf16.gmra.mrb[0].mxu0 %v1287
        %v1332 = vpop.f32.mrb[0].mxu0
        %v1333 = vadd.f32 0.0, %v1332
        %v1334 = vpop.f32.mrb[0].mxu0
        %v1335 = vpop.f32.mrb[0].mxu0
        %v1336 = vadd.f32 0.0, %v1335
        %v1337 = vpop.f32.mrb[0].mxu0
        %1338 = vmatprep.mubr.bf16.mxu0 0
        %1339 = vmatmul.mubr.bf16.gmra.mrb[0].mxu0 %v1290
        %v1340 = vpop.f32.mrb[0].mxu0
        %v1341 = vadd.f32 0.0, %v1340
        %v1342 = vpop.f32.mrb[0].mxu0
        %v1343 = vpop.f32.mrb[0].mxu0
        %v1344 = vpop.f32.mrb[0].mxu0
        %1345 = vdwg.mxu0
        %v1346 = vmul.f32 %v1333, 0.17677669
        %v1347 = vmul.f32 %v1336, 0.17677669
        %v1348 = vmul.f32 %v1341, 0.17677669
        %v1349 = vsel %vm1087, %v1346, -1e+30
        %v1350 = vsel %vm1087, %v1347, -1e+30
        %v1351 = vsel %vm1087, %v1348, -1e+30
        %vm1352 = vcmask 195584
        %v1353 = vsel %vm1352, %v1349, -inf
        %1354 = vmax.xlane.f32.xlu0 %v1353
        %v1355 = vpop.xlane.xlu0 %1354
        %v1356 = vsel %vm1352, %v1350, -inf
        %1357 = vmax.xlane.f32.xlu0 %v1356
        %v1358 = vpop.xlane.xlu0 %1357
        %v1359 = vsel %vm1352, %v1351, -inf
        %1360 = vmax.xlane.f32.xlu0 %v1359
        %v1361 = vpop.xlane.xlu0 %1360
        %v1362 = vsub.f32 %v1349, %v1355
        %v1363 = vsub.f32 %v1350, %v1358
        %v1364 = vsub.f32 %v1351, %v1361
        %v1365 = vmul.f32 %v1362, 1.442695
        %v1366 = vpow.pop %v1365
        %v1367 = vmul.f32 %v1363, 1.442695
        %v1368 = vpow.pop %v1367
        %v1369 = vmul.f32 %v1364, 1.442695
        %v1370 = vpow.pop %v1369
        %v1371 = vsel %vm1352, %v1366, 0.0
        %1372 = vadd.xlane.f32.xlu0 %v1371
        %v1373 = vpop.xlane.xlu0 %1372
        %v1374 = vsel %vm1352, %v1368, 0.0
        %1375 = vadd.xlane.f32.xlu0 %v1374
        %v1376 = vpop.xlane.xlu0 %1375
        %v1377 = vsel %vm1352, %v1370, 0.0
        %1378 = vadd.xlane.f32.xlu0 %v1377
        %v1379 = vpop.xlane.xlu0 %1378
        %v1380 = vrcp.pop %v1373
        %v1381 = vrcp.pop %v1376
        %v1382 = vrcp.pop %v1379
        %v1383 = vmul.f32 %v1366, %v1380
        %v1384 = vmul.f32 %v1368, %v1381
        %v1385 = vmul.f32 %v1370, %v1382
        %v1386 = vpack.c.bf16 %v1384, %v1383
        %v1387 = vpack.c.bf16 %v1385, %v1385
        %v1389 = vsel %vm1352, %v1386, 0
        %v1392 = vsel %vm1352, %v1387, 0
        %vm1394 = vcmask 1043456
        %v1396 = vsel %vm1394, %v1278, 0
        %1398 = vmatprep.subr.bf16.mxu0 0
        %1399 = vmatpush1.bf16.msra.mxu0 %v1277
        %1400 = vmatprep.subr.bf16.mxu0 0
        %1401 = vmatpush1.bf16.msra.mxu0 %v1396
        %1402 = vmatprep.subr.bf16.mxu0 0
        %1403 = vmatpush1.bf16.msra.mxu0 0
        %1404 = vmatprep.subr.bf16.mxu0 0
        %1405 = vmatpush1.bf16.msra.mxu0 0
        %1406 = vmatprep.subr.bf16.mxu0 0
        %1407 = vmatpush1.bf16.msra.mxu0 0
        %1408 = vmatprep.subr.bf16.mxu0 0
        %1409 = vmatpush1.bf16.msra.mxu0 0
        %1410 = vmatprep.subr.bf16.mxu0 0
        %1411 = vmatpush1.bf16.msra.mxu0 0
        %1412 = vmatprep.subr.bf16.mxu0 0
        %1413 = vmatpush1.bf16.msra.mxu0 0
        %1414 = vmatprep.subr.bf16.mxu0 0
        %1415 = vmatpush1.bf16.msra.mxu0 0
        %1416 = vmatprep.subr.bf16.mxu0 0
        %1417 = vmatpush1.bf16.msra.mxu0 0
        %1418 = vmatprep.subr.bf16.mxu0 0
        %1419 = vmatpush1.bf16.msra.mxu0 0
        %1420 = vmatprep.subr.bf16.mxu0 0
        %1421 = vmatpush1.bf16.msra.mxu0 0
        %1422 = vmatprep.subr.bf16.mxu0 0
        %1423 = vmatpush1.bf16.msra.mxu0 0
        %1424 = vmatprep.subr.bf16.mxu0 0
        %1425 = vmatpush1.bf16.msra.mxu0 0
        %1426 = vmatprep.subr.bf16.mxu0 0
        %1427 = vmatpush1.bf16.msra.mxu0 0
        %1428 = vmatprep.subr.bf16.mxu0 0
        %1429 = vmatpush1.bf16.msra.mxu0 0
        %1430 = vmatprep.mubr.bf16.mxu0 0
        %1431 = vmatmul.mubr.bf16.gmra.mrb[0].mxu0 %v1389
        %v1432 = vpop.f32.mrb[0].mxu0
        %v1433 = vadd.f32 0.0, %v1432
        %v1434 = vpop.f32.mrb[0].mxu0
        %v1435 = vpop.f32.mrb[0].mxu0
        %v1436 = vadd.f32 0.0, %v1435
        %v1437 = vpop.f32.mrb[0].mxu0
        %1438 = vmatprep.mubr.bf16.mxu0 0
        %1439 = vmatmul.mubr.bf16.gmra.mrb[0].mxu0 %v1392
        %v1440 = vpop.f32.mrb[0].mxu0
        %v1441 = vadd.f32 0.0, %v1440
        %v1442 = vpop.f32.mrb[0].mxu0
        %v1443 = vpop.f32.mrb[0].mxu0
        %v1444 = vpop.f32.mrb[0].mxu0
        %1445 = vdwg.mxu0
        %v1446 = vpack.c.bf16 %v1436, %v1433
        %v1447 = vpack.c.bf16 %v1441, %v1441
        %1448 = vrot.lane.b32.xlu0 %v1275, 96
        %v1449 = vpop.permute.xlu0 %1448
        %1450 = vrot.lane.b32.xlu0 %v1276, 96
        %v1451 = vpop.permute.xlu0 %1450
        %1452 = vrot.lane.b32.xlu0 %v1275, 32
        %v1453 = vpop.permute.xlu0 %1452
        %1454 = vrot.lane.b32.xlu0 %v1276, 32
        %v1455 = vpop.permute.xlu0 %1454
        %v1457 = vsel %vm1285, %v1449, 0
        %v1460 = vsel %vm1285, %v1451, 0
        %v1463 = vsel %vm1285, %v1453, 0
        %v1466 = vsel %vm1285, %v1455, 0
        %1468 = vmatprep.subr.bf16.mxu0 0
        %1469 = vmatpush1.bf16.xpose.msra.mxu0 %v1463
        %1470 = vmatprep.subr.bf16.mxu0 0
        %1471 = vmatpush1.bf16.xpose.msra.mxu0 %v1466
        %1472 = vmatprep.subr.bf16.mxu0 0
        %1473 = vmatpush1.bf16.xpose.msra.mxu0 0
        %1474 = vmatprep.subr.bf16.mxu0 0
        %1475 = vmatpush1.bf16.xpose.msra.mxu0 0
        %1476 = vmatprep.subr.bf16.mxu0 0
        %1477 = vmatpush1.bf16.xpose.msra.mxu0 0
        %1478 = vmatprep.subr.bf16.mxu0 0
        %1479 = vmatpush1.bf16.xpose.msra.mxu0 0
        %1480 = vmatprep.subr.bf16.mxu0 0
        %1481 = vmatpush1.bf16.xpose.msra.mxu0 0
        %1482 = vmatprep.subr.bf16.mxu0 0
        %1483 = vmatpush1.bf16.xpose.msra.mxu0 0
        %1484 = vmatprep.subr.bf16.mxu0 0
        %1485 = vmatpush1.bf16.xpose.msra.mxu0 0
        %1486 = vmatprep.subr.bf16.mxu0 0
        %1487 = vmatpush1.bf16.xpose.msra.mxu0 0
        %1488 = vmatprep.subr.bf16.mxu0 0
        %1489 = vmatpush1.bf16.xpose.msra.mxu0 0
        %1490 = vmatprep.subr.bf16.mxu0 0
        %1491 = vmatpush1.bf16.xpose.msra.mxu0 0
        %1492 = vmatprep.subr.bf16.mxu0 0
        %1493 = vmatpush1.bf16.xpose.msra.mxu0 0
        %1494 = vmatprep.subr.bf16.mxu0 0
        %1495 = vmatpush1.bf16.xpose.msra.mxu0 0
        %1496 = vmatprep.subr.bf16.mxu0 0
        %1497 = vmatpush1.bf16.xpose.msra.mxu0 0
        %1498 = vmatprep.subr.bf16.mxu0 0
        %1499 = vmatpush1.bf16.xpose.msra.mxu0 0
        %1500 = vmatprep.mubr.bf16.mxu0 0
        %1501 = vmatmul.mubr.bf16.gmra.mrb[0].mxu0 %v1457
        %v1502 = vpop.f32.mrb[0].mxu0
        %v1503 = vadd.f32 0.0, %v1502
        %v1504 = vpop.f32.mrb[0].mxu0
        %v1505 = vpop.f32.mrb[0].mxu0
        %v1506 = vadd.f32 0.0, %v1505
        %v1507 = vpop.f32.mrb[0].mxu0
        %1508 = vmatprep.mubr.bf16.mxu0 0
        %1509 = vmatmul.mubr.bf16.gmra.mrb[0].mxu0 %v1460
        %v1510 = vpop.f32.mrb[0].mxu0
        %v1511 = vadd.f32 0.0, %v1510
        %v1512 = vpop.f32.mrb[0].mxu0
        %v1513 = vpop.f32.mrb[0].mxu0
        %v1514 = vpop.f32.mrb[0].mxu0
        %1515 = vdwg.mxu0
        %v1516 = vmul.f32 %v1503, 0.17677669
        %v1517 = vmul.f32 %v1506, 0.17677669
        %v1518 = vmul.f32 %v1511, 0.17677669
        %v1519 = vsel %vm1087, %v1516, -1e+30
        %v1520 = vsel %vm1087, %v1517, -1e+30
        %v1521 = vsel %vm1087, %v1518, -1e+30
        %v1522 = vsel %vm1352, %v1519, -inf
        %1523 = vmax.xlane.f32.xlu0 %v1522
        %v1524 = vpop.xlane.xlu0 %1523
        %v1525 = vsel %vm1352, %v1520, -inf
        %1526 = vmax.xlane.f32.xlu0 %v1525
        %v1527 = vpop.xlane.xlu0 %1526
        %v1528 = vsel %vm1352, %v1521, -inf
        %1529 = vmax.xlane.f32.xlu0 %v1528
        %v1530 = vpop.xlane.xlu0 %1529
        %v1531 = vsub.f32 %v1519, %v1524
        %v1532 = vsub.f32 %v1520, %v1527
        %v1533 = vsub.f32 %v1521, %v1530
        %v1534 = vmul.f32 %v1531, 1.442695
        %v1535 = vpow.pop %v1534
        %v1536 = vmul.f32 %v1532, 1.442695
        %v1537 = vpow.pop %v1536
        %v1538 = vmul.f32 %v1533, 1.442695
        %v1539 = vpow.pop %v1538
        %v1540 = vsel %vm1352, %v1535, 0.0
        %1541 = vadd.xlane.f32.xlu0 %v1540
        %v1542 = vpop.xlane.xlu0 %1541
        %v1543 = vsel %vm1352, %v1537, 0.0
        %1544 = vadd.xlane.f32.xlu0 %v1543
        %v1545 = vpop.xlane.xlu0 %1544
        %v1546 = vsel %vm1352, %v1539, 0.0
        %1547 = vadd.xlane.f32.xlu0 %v1546
        %v1548 = vpop.xlane.xlu0 %1547
        %v1549 = vrcp.pop %v1542
        %v1550 = vrcp.pop %v1545
        %v1551 = vrcp.pop %v1548
        %v1552 = vmul.f32 %v1535, %v1549
        %v1553 = vmul.f32 %v1537, %v1550
        %v1554 = vmul.f32 %v1539, %v1551
        %v1555 = vpack.c.bf16 %v1553, %v1552
        %v1556 = vpack.c.bf16 %v1554, %v1554
        %1559 = vrot.lane.b32.xlu0 %v1277, 96
        %v1560 = vpop.permute.xlu0 %1559
        %1561 = vrot.lane.b32.xlu0 %v1278, 96
        %v1562 = vpop.permute.xlu0 %1561
        %v1565 = vsel %vm1352, %v1555, 0
        %v1568 = vsel %vm1352, %v1556, 0
        %v1571 = vsel %vm1394, %v1562, 0
        %1573 = vmatprep.subr.bf16.mxu0 0
        %1574 = vmatpush1.bf16.msra.mxu0 %v1560
        %1575 = vmatprep.subr.bf16.mxu0 0
        %1576 = vmatpush1.bf16.msra.mxu0 %v1571
        %1577 = vmatprep.subr.bf16.mxu0 0
        %1578 = vmatpush1.bf16.msra.mxu0 0
        %1579 = vmatprep.subr.bf16.mxu0 0
        %1580 = vmatpush1.bf16.msra.mxu0 0
        %1581 = vmatprep.subr.bf16.mxu0 0
        %1582 = vmatpush1.bf16.msra.mxu0 0
        %1583 = vmatprep.subr.bf16.mxu0 0
        %1584 = vmatpush1.bf16.msra.mxu0 0
        %1585 = vmatprep.subr.bf16.mxu0 0
        %1586 = vmatpush1.bf16.msra.mxu0 0
        %1587 = vmatprep.subr.bf16.mxu0 0
        %1588 = vmatpush1.bf16.msra.mxu0 0
        %1589 = vmatprep.subr.bf16.mxu0 0
        %1590 = vmatpush1.bf16.msra.mxu0 0
        %1591 = vmatprep.subr.bf16.mxu0 0
        %1592 = vmatpush1.bf16.msra.mxu0 0
        %1593 = vmatprep.subr.bf16.mxu0 0
        %1594 = vmatpush1.bf16.msra.mxu0 0
        %1595 = vmatprep.subr.bf16.mxu0 0
        %1596 = vmatpush1.bf16.msra.mxu0 0
        %1597 = vmatprep.subr.bf16.mxu0 0
        %1598 = vmatpush1.bf16.msra.mxu0 0
        %1599 = vmatprep.subr.bf16.mxu0 0
        %1600 = vmatpush1.bf16.msra.mxu0 0
        %1601 = vmatprep.subr.bf16.mxu0 0
        %1602 = vmatpush1.bf16.msra.mxu0 0
        %1603 = vmatprep.subr.bf16.mxu0 0
        %1604 = vmatpush1.bf16.msra.mxu0 0
        %1605 = vmatprep.mubr.bf16.mxu0 0
        %1606 = vmatmul.mubr.bf16.gmra.mrb[0].mxu0 %v1565
        %v1607 = vpop.f32.mrb[0].mxu0
        %v1608 = vadd.f32 0.0, %v1607
        %v1609 = vpop.f32.mrb[0].mxu0
        %v1610 = vpop.f32.mrb[0].mxu0
        %v1611 = vadd.f32 0.0, %v1610
        %v1612 = vpop.f32.mrb[0].mxu0
        %1613 = vmatprep.mubr.bf16.mxu0 0
        %1614 = vmatmul.mubr.bf16.gmra.mrb[0].mxu0 %v1568
        %v1615 = vpop.f32.mrb[0].mxu0
        %v1616 = vadd.f32 0.0, %v1615
        %v1617 = vpop.f32.mrb[0].mxu0
        %v1618 = vpop.f32.mrb[0].mxu0
        %v1619 = vpop.f32.mrb[0].mxu0
        %1620 = vdwg.mxu0
        %v1621 = vpack.c.bf16 %v1611, %v1608
        %v1622 = vpack.c.bf16 %v1616, %v1616
        %v1627 = vunpack.c.l.b16 %v1271
        %v1628 = vunpack.c.l.b16 %v1272
        %v1629 = vunpack.c.l.b16 %v1273
        %v1630 = vunpack.c.l.b16 %v1274
        %v1631 = vpack.c.b16 %v1628, %v1627
        %v1632 = vpack.c.b16 %v1630, %v1629
        %v1636 = vsel %vm1285, %v1621, 0
        %v1639 = vsel %vm1285, %v1622, 0
        %1641 = vmatprep.subr.bf16.mxu0 0
        %1642 = vmatpush1.bf16.msra.mxu0 %v1631
        %1643 = vmatprep.subr.bf16.mxu0 0
        %1644 = vmatpush1.bf16.msra.mxu0 %v1632
        %1645 = vmatprep.subr.bf16.mxu0 0
        %1646 = vmatpush1.bf16.msra.mxu0 0
        %1647 = vmatprep.subr.bf16.mxu0 0
        %1648 = vmatpush1.bf16.msra.mxu0 0
        %1649 = vmatprep.subr.bf16.mxu0 0
        %1650 = vmatpush1.bf16.msra.mxu0 0
        %1651 = vmatprep.subr.bf16.mxu0 0
        %1652 = vmatpush1.bf16.msra.mxu0 0
        %1653 = vmatprep.subr.bf16.mxu0 0
        %1654 = vmatpush1.bf16.msra.mxu0 0
        %1655 = vmatprep.subr.bf16.mxu0 0
        %1656 = vmatpush1.bf16.msra.mxu0 0
        %1657 = vmatprep.subr.bf16.mxu0 0
        %1658 = vmatpush1.bf16.msra.mxu0 0
        %1659 = vmatprep.subr.bf16.mxu0 0
        %1660 = vmatpush1.bf16.msra.mxu0 0
        %1661 = vmatprep.subr.bf16.mxu0 0
        %1662 = vmatpush1.bf16.msra.mxu0 0
        %1663 = vmatprep.subr.bf16.mxu0 0
        %1664 = vmatpush1.bf16.msra.mxu0 0
        %1665 = vmatprep.subr.bf16.mxu0 0
        %1666 = vmatpush1.bf16.msra.mxu0 0
        %1667 = vmatprep.subr.bf16.mxu0 0
        %1668 = vmatpush1.bf16.msra.mxu0 0
        %1669 = vmatprep.subr.bf16.mxu0 0
        %1670 = vmatpush1.bf16.msra.mxu0 0
        %1671 = vmatprep.subr.bf16.mxu0 0
        %1672 = vmatpush1.bf16.msra.mxu0 0
        %1673 = vmatprep.mubr.bf16.mxu0 0
        %1674 = vmatmul.mubr.bf16.gmra.mrb[0].mxu0 %v1636
        %v1675 = vpop.f32.mrb[0].mxu0
        %v1676 = vadd.f32 0.0, %v1675
        %v1677 = vpop.f32.mrb[0].mxu0
        %v1678 = vpop.f32.mrb[0].mxu0
        %v1679 = vadd.f32 0.0, %v1678
        %v1680 = vpop.f32.mrb[0].mxu0
        %1681 = vmatprep.mubr.bf16.mxu0 0
        %1682 = vmatmul.mubr.bf16.gmra.mrb[0].mxu0 %v1639
        %v1683 = vpop.f32.mrb[0].mxu0
        %v1684 = vadd.f32 0.0, %v1683
        %v1685 = vpop.f32.mrb[0].mxu0
        %v1686 = vpop.f32.mrb[0].mxu0
        %v1687 = vpop.f32.mrb[0].mxu0
        %1688 = vdwg.mxu0
        %v1693 = vunpack.c.l.b16 %v1267
        %v1694 = vunpack.c.l.b16 %v1268
        %v1695 = vunpack.c.l.b16 %v1269
        %v1696 = vunpack.c.l.b16 %v1270
        %v1697 = vpack.c.b16 %v1694, %v1693
        %v1698 = vpack.c.b16 %v1696, %v1695
        %v1702 = vsel %vm1285, %v1446, 0
        %v1705 = vsel %vm1285, %v1447, 0
        %1707 = vmatprep.subr.bf16.mxu0 0
        %1708 = vmatpush1.bf16.msra.mxu0 %v1697
        %1709 = vmatprep.subr.bf16.mxu0 0
        %1710 = vmatpush1.bf16.msra.mxu0 %v1698
        %1711 = vmatprep.subr.bf16.mxu0 0
        %1712 = vmatpush1.bf16.msra.mxu0 0
        %1713 = vmatprep.subr.bf16.mxu0 0
        %1714 = vmatpush1.bf16.msra.mxu0 0
        %1715 = vmatprep.subr.bf16.mxu0 0
        %1716 = vmatpush1.bf16.msra.mxu0 0
        %1717 = vmatprep.subr.bf16.mxu0 0
        %1718 = vmatpush1.bf16.msra.mxu0 0
        %1719 = vmatprep.subr.bf16.mxu0 0
        %1720 = vmatpush1.bf16.msra.mxu0 0
        %1721 = vmatprep.subr.bf16.mxu0 0
        %1722 = vmatpush1.bf16.msra.mxu0 0
        %1723 = vmatprep.subr.bf16.mxu0 0
        %1724 = vmatpush1.bf16.msra.mxu0 0
        %1725 = vmatprep.subr.bf16.mxu0 0
        %1726 = vmatpush1.bf16.msra.mxu0 0
        %1727 = vmatprep.subr.bf16.mxu0 0
        %1728 = vmatpush1.bf16.msra.mxu0 0
        %1729 = vmatprep.subr.bf16.mxu0 0
        %1730 = vmatpush1.bf16.msra.mxu0 0
        %1731 = vmatprep.subr.bf16.mxu0 0
        %1732 = vmatpush1.bf16.msra.mxu0 0
        %1733 = vmatprep.subr.bf16.mxu0 0
        %1734 = vmatpush1.bf16.msra.mxu0 0
        %1735 = vmatprep.subr.bf16.mxu0 0
        %1736 = vmatpush1.bf16.msra.mxu0 0
        %1737 = vmatprep.subr.bf16.mxu0 0
        %1738 = vmatpush1.bf16.msra.mxu0 0
        %1739 = vmatprep.mubr.bf16.mxu0 0
        %1740 = vmatmul.mubr.bf16.gmra.mrb[0].mxu0 %v1702
        %v1741 = vpop.f32.mrb[0].mxu0
        %v1742 = vadd.f32 %v1676, %v1741
        %v1743 = vpop.f32.mrb[0].mxu0
        %v1744 = vpop.f32.mrb[0].mxu0
        %v1745 = vadd.f32 %v1679, %v1744
        %v1746 = vpop.f32.mrb[0].mxu0
        %1747 = vmatprep.mubr.bf16.mxu0 0
        %1748 = vmatmul.mubr.bf16.gmra.mrb[0].mxu0 %v1705
        %v1749 = vpop.f32.mrb[0].mxu0
        %v1750 = vadd.f32 %v1684, %v1749
        %v1751 = vpop.f32.mrb[0].mxu0
        %v1752 = vpop.f32.mrb[0].mxu0
        %v1753 = vpop.f32.mrb[0].mxu0
        %1754 = vdwg.mxu0
        %v1755 = vadd.f32 %v1082, %v1742
        %v1756 = vadd.f32 %v1083, %v1745
        %v1757 = vadd.f32 %v1084, %v1750
        %v1758 = vld [vmem:[%s10] sm:$0x1]
        %v1760 = vlaneseq
        %v1761 = vshrl.u32 %v1760, 7
        %v1762 = vsub.s32 0, %v1761
        %v1763 = vrot.slane %v1758, %v1762
        %v1765 = vadd.f32 %v1755, %v1763
        %v1766 = vadd.f32 %v1756, %v1763
        %v1767 = vadd.f32 %v1757, %v1763
        %v1768 = vld [vmem:[%s11] sm:$0x1]
        %v1769 = vld [vmem:[%s12] sm:$0x1]
        %v1770 = vsel %vm1067, %v1765, 0.0
        %1771 = vadd.xlane.f32.xlu0 %v1770
        %v1772 = vpop.xlane.xlu0 %1771
        %v1773 = vsel %vm1067, %v1766, 0.0
        %1774 = vadd.xlane.f32.xlu0 %v1773
        %v1775 = vpop.xlane.xlu0 %1774
        %v1776 = vsel %vm1067, %v1767, 0.0
        %1777 = vadd.xlane.f32.xlu0 %v1776
        %v1778 = vpop.xlane.xlu0 %1777
        %v1779 = vmul.f32 %v1772, %v1099
        %v1780 = vmul.f32 %v1775, %v1099
        %v1781 = vmul.f32 %v1778, %v1099
        %v1782 = vsub.f32 %v1765, %v1779
        %v1783 = vsub.f32 %v1766, %v1780
        %v1784 = vsub.f32 %v1767, %v1781
        %v1785 = vmul.f32 %v1782, %v1782
        %v1786 = vmul.f32 %v1783, %v1783
        %v1787 = vmul.f32 %v1784, %v1784
        %v1788 = vsel %vm1067, %v1785, 0.0
        %1789 = vadd.xlane.f32.xlu0 %v1788
        %v1790 = vpop.xlane.xlu0 %1789
        %v1791 = vsel %vm1067, %v1786, 0.0
        %1792 = vadd.xlane.f32.xlu0 %v1791
        %v1793 = vpop.xlane.xlu0 %1792
        %v1794 = vsel %vm1067, %v1787, 0.0
        %1795 = vadd.xlane.f32.xlu0 %v1794
        %v1796 = vpop.xlane.xlu0 %1795
        %v1797 = vmul.f32 %v1790, %v1099
        %v1798 = vmul.f32 %v1793, %v1099
        %v1799 = vmul.f32 %v1796, %v1099
        %v1800 = vadd.f32 %v1797, 1e-06
        %v1801 = vadd.f32 %v1798, 1e-06
        %v1802 = vadd.f32 %v1799, 1e-06
        %v1803 = vrsqrt.pop %v1800
        %v1804 = vrsqrt.pop %v1801
        %v1805 = vrsqrt.pop %v1802
        %v1806 = vmul.f32 %v1782, %v1803
        %v1807 = vmul.f32 %v1783, %v1804
        %v1808 = vmul.f32 %v1784, %v1805
        %v1810 = vlaneseq
        %v1811 = vshrl.u32 %v1810, 7
        %v1812 = vsub.s32 0, %v1811
        %v1813 = vrot.slane %v1768, %v1812
        %v1815 = vmul.f32 %v1806, %v1813
        %v1816 = vmul.f32 %v1807, %v1813
        %v1817 = vmul.f32 %v1808, %v1813
        %v1819 = vlaneseq
        %v1820 = vshrl.u32 %v1819, 7
        %v1821 = vsub.s32 0, %v1820
        %v1822 = vrot.slane %v1769, %v1821
        %v1824 = vadd.f32 %v1815, %v1822
        %v1825 = vadd.f32 %v1816, %v1822
        %v1826 = vadd.f32 %v1817, %v1822
        %v1827 = vpack.c.bf16 %v1825, %v1824
        %v1828 = vpack.c.bf16 %v1826, %v1826
        %v1829 = vld [vmem:[%s13] sm:$0xf]
        %v1830 = vld [vmem:[%s13 + $0x4] sm:$0xf]
        %v1831 = vld [vmem:[%s13 + $0x8] sm:$0xf]
        %v1832 = vld [vmem:[%s13 + $0xc] sm:$0xf]
        %v1833 = vld [vmem:[%s13 + $0x10] sm:$0xf]
        %v1834 = vld [vmem:[%s13 + $0x14] sm:$0xf]
        %v1835 = vld [vmem:[%s13 + $0x18] sm:$0xf]
        %v1836 = vld [vmem:[%s13 + $0x1c] sm:$0xf]
        %v1837 = vld [vmem:[%s14] sm:$0x1]
        %v1839 = vlaneseq
        %v1840 = vshrl.u32 %v1839, 7
        %v1841 = vsub.s32 0, %v1840
        %v1842 = vrot.slane %v1837, %v1841
        %v1852 = vunpack.c.l.b16 %v1829
        %v1853 = vunpack.c.l.b16 %v1830
        %v1854 = vunpack.c.l.b16 %v1831
        %v1855 = vunpack.c.l.b16 %v1832
        %v1856 = vunpack.c.l.b16 %v1833
        %v1857 = vunpack.c.l.b16 %v1834
        %v1858 = vunpack.c.l.b16 %v1835
        %v1859 = vunpack.c.l.b16 %v1836
        %v1860 = vpack.c.b16 %v1853, %v1852
        %v1861 = vpack.c.b16 %v1855, %v1854
        %v1862 = vpack.c.b16 %v1857, %v1856
        %v1863 = vpack.c.b16 %v1859, %v1858
        %v1869 = vsel %vm1067, %v1827, 0
        %v1872 = vsel %vm1067, %v1828, 0
        %1874 = vmatprep.subr.bf16.mxu0 0
        %1875 = vmatpush1.bf16.msra.mxu0 %v1860
        %1876 = vmatprep.subr.bf16.mxu0 0
        %1877 = vmatpush1.bf16.msra.mxu0 %v1861
        %1878 = vmatprep.subr.bf16.mxu0 0
        %1879 = vmatpush1.bf16.msra.mxu0 %v1862
        %1880 = vmatprep.subr.bf16.mxu0 0
        %1881 = vmatpush1.bf16.msra.mxu0 %v1863
        %1882 = vmatprep.subr.bf16.mxu0 0
        %1883 = vmatpush1.bf16.msra.mxu0 0
        %1884 = vmatprep.subr.bf16.mxu0 0
        %1885 = vmatpush1.bf16.msra.mxu0 0
        %1886 = vmatprep.subr.bf16.mxu0 0
        %1887 = vmatpush1.bf16.msra.mxu0 0
        %1888 = vmatprep.subr.bf16.mxu0 0
        %1889 = vmatpush1.bf16.msra.mxu0 0
        %1890 = vmatprep.subr.bf16.mxu0 0
        %1891 = vmatpush1.bf16.msra.mxu0 0
        %1892 = vmatprep.subr.bf16.mxu0 0
        %1893 = vmatpush1.bf16.msra.mxu0 0
        %1894 = vmatprep.subr.bf16.mxu0 0
        %1895 = vmatpush1.bf16.msra.mxu0 0
        %1896 = vmatprep.subr.bf16.mxu0 0
        %1897 = vmatpush1.bf16.msra.mxu0 0
        %1898 = vmatprep.subr.bf16.mxu0 0
        %1899 = vmatpush1.bf16.msra.mxu0 0
        %1900 = vmatprep.subr.bf16.mxu0 0
        %1901 = vmatpush1.bf16.msra.mxu0 0
        %1902 = vmatprep.subr.bf16.mxu0 0
        %1903 = vmatpush1.bf16.msra.mxu0 0
        %1904 = vmatprep.subr.bf16.mxu0 0
        %1905 = vmatpush1.bf16.msra.mxu0 0
        %1906 = vmatprep.mubr.bf16.mxu0 0
        %1907 = vmatmul.mubr.bf16.gmra.mrb[0].mxu0 %v1869
        %v1908 = vpop.f32.mrb[0].mxu0
        %v1909 = vadd.f32 %v1842, %v1908
        %v1910 = vpop.f32.mrb[0].mxu0
        %v1911 = vpop.f32.mrb[0].mxu0
        %v1912 = vadd.f32 %v1842, %v1911
        %v1913 = vpop.f32.mrb[0].mxu0
        %1914 = vmatprep.mubr.bf16.mxu0 0
        %1915 = vmatmul.mubr.bf16.gmra.mrb[0].mxu0 %v1872
        %v1916 = vpop.f32.mrb[0].mxu0
        %v1917 = vadd.f32 %v1842, %v1916
        %v1918 = vpop.f32.mrb[0].mxu0
        %v1919 = vpop.f32.mrb[0].mxu0
        %v1920 = vpop.f32.mrb[0].mxu0
        %1921 = vdwg.mxu0
        %v1922 = vmul.f32 %v1909, %v1909
        %v1923 = vmul.f32 %v1912, %v1912
        %v1924 = vmul.f32 %v1917, %v1917
        %v1925 = vmul.f32 %v1909, %v1922
        %v1926 = vmul.f32 %v1912, %v1923
        %v1927 = vmul.f32 %v1917, %v1924
        %v1928 = vmul.f32 %v1925, 0.044715
        %v1929 = vmul.f32 %v1926, 0.044715
        %v1930 = vmul.f32 %v1927, 0.044715
        %v1931 = vadd.f32 %v1909, %v1928
        %v1932 = vadd.f32 %v1912, %v1929
        %v1933 = vadd.f32 %v1917, %v1930
        %v1934 = vmul.f32 %v1931, 0.7978846
        %v1935 = vmul.f32 %v1932, 0.7978846
        %v1936 = vmul.f32 %v1933, 0.7978846
        %v1937 = vtanh.pop %v1934
        %v1938 = vtanh.pop %v1935
        %v1939 = vtanh.pop %v1936
        %v1940 = vadd.f32 %v1937, 1.0
        %v1941 = vadd.f32 %v1938, 1.0
        %v1942 = vadd.f32 %v1939, 1.0
        %v1943 = vmul.f32 %v1940, 0.5
        %v1944 = vmul.f32 %v1941, 0.5
        %v1945 = vmul.f32 %v1942, 0.5
        %v1946 = vmul.f32 %v1909, %v1943
        %v1947 = vmul.f32 %v1912, %v1944
        %v1948 = vmul.f32 %v1917, %v1945
        %v1949 = vpack.c.bf16 %v1947, %v1946
        %v1950 = vpack.c.bf16 %v1948, %v1948
        %v1951 = vld [vmem:[%s15] sm:$0xf]
        %v1952 = vld [vmem:[%s15 + $0x4] sm:$0xf]
        %v1953 = vld [vmem:[%s15 + $0x8] sm:$0xf]
        %v1954 = vld [vmem:[%s15 + $0xc] sm:$0xf]
        %v1955 = vld [vmem:[%s15 + $0x10] sm:$0xf]
        %v1956 = vld [vmem:[%s15 + $0x14] sm:$0xf]
        %v1957 = vld [vmem:[%s15 + $0x18] sm:$0xf]
        %v1958 = vld [vmem:[%s15 + $0x1c] sm:$0xf]
        %v1959 = vld [vmem:[%s15 + $0x20] sm:$0xf]
        %v1960 = vld [vmem:[%s15 + $0x24] sm:$0xf]
        %v1961 = vld [vmem:[%s15 + $0x28] sm:$0xf]
        %v1962 = vld [vmem:[%s15 + $0x2c] sm:$0xf]
        %v1963 = vld [vmem:[%s15 + $0x30] sm:$0xf]
        %v1964 = vld [vmem:[%s15 + $0x34] sm:$0xf]
        %v1965 = vld [vmem:[%s15 + $0x38] sm:$0xf]
        %v1966 = vld [vmem:[%s15 + $0x3c] sm:$0xf]
        %v1983 = vunpack.c.l.b16 %v1951
        %v1984 = vunpack.c.l.b16 %v1952
        %v1985 = vunpack.c.l.b16 %v1953
        %v1986 = vunpack.c.l.b16 %v1954
        %v1987 = vunpack.c.l.b16 %v1955
        %v1988 = vunpack.c.l.b16 %v1956
        %v1989 = vunpack.c.l.b16 %v1957
        %v1990 = vunpack.c.l.b16 %v1958
        %v1991 = vunpack.c.l.b16 %v1959
        %v1992 = vunpack.c.l.b16 %v1960
        %v1993 = vunpack.c.l.b16 %v1961
        %v1994 = vunpack.c.l.b16 %v1962
        %v1995 = vunpack.c.l.b16 %v1963
        %v1996 = vunpack.c.l.b16 %v1964
        %v1997 = vunpack.c.l.b16 %v1965
        %v1998 = vunpack.c.l.b16 %v1966
        %v1999 = vpack.c.b16 %v1984, %v1983
        %v2000 = vpack.c.b16 %v1986, %v1985
        %v2001 = vpack.c.b16 %v1988, %v1987
        %v2002 = vpack.c.b16 %v1990, %v1989
        %v2003 = vpack.c.b16 %v1992, %v1991
        %v2004 = vpack.c.b16 %v1994, %v1993
        %v2005 = vpack.c.b16 %v1996, %v1995
        %v2006 = vpack.c.b16 %v1998, %v1997
        %2015 = vmatprep.subr.bf16.mxu0 0
        %2016 = vmatpush1.bf16.msra.mxu0 %v1999
        %2017 = vmatprep.subr.bf16.mxu0 0
        %2018 = vmatpush1.bf16.msra.mxu0 %v2000
        %2019 = vmatprep.subr.bf16.mxu0 0
        %2020 = vmatpush1.bf16.msra.mxu0 %v2001
        %2021 = vmatprep.subr.bf16.mxu0 0
        %2022 = vmatpush1.bf16.msra.mxu0 %v2002
        %2023 = vmatprep.subr.bf16.mxu0 0
        %2024 = vmatpush1.bf16.msra.mxu0 %v2003
        %2025 = vmatprep.subr.bf16.mxu0 0
        %2026 = vmatpush1.bf16.msra.mxu0 %v2004
        %2027 = vmatprep.subr.bf16.mxu0 0
        %2028 = vmatpush1.bf16.msra.mxu0 %v2005
        %2029 = vmatprep.subr.bf16.mxu0 0
        %2030 = vmatpush1.bf16.msra.mxu0 %v2006
        %2031 = vmatprep.subr.bf16.mxu0 0
        %2032 = vmatpush1.bf16.msra.mxu0 0
        %2033 = vmatprep.subr.bf16.mxu0 0
        %2034 = vmatpush1.bf16.msra.mxu0 0
        %2035 = vmatprep.subr.bf16.mxu0 0
        %2036 = vmatpush1.bf16.msra.mxu0 0
        %2037 = vmatprep.subr.bf16.mxu0 0
        %2038 = vmatpush1.bf16.msra.mxu0 0
        %2039 = vmatprep.subr.bf16.mxu0 0
        %2040 = vmatpush1.bf16.msra.mxu0 0
        %2041 = vmatprep.subr.bf16.mxu0 0
        %2042 = vmatpush1.bf16.msra.mxu0 0
        %2043 = vmatprep.subr.bf16.mxu0 0
        %2044 = vmatpush1.bf16.msra.mxu0 0
        %2045 = vmatprep.subr.bf16.mxu0 0
        %2046 = vmatpush1.bf16.msra.mxu0 0
        %2047 = vmatprep.mubr.bf16.mxu0 0
        %2048 = vmatmul.mubr.bf16.gmra.mrb[0].mxu0 %v1949
        %v2049 = vpop.f32.mrb[0].mxu0
        %v2050 = vadd.f32 0.0, %v2049
        %v2051 = vpop.f32.mrb[0].mxu0
        %v2052 = vpop.f32.mrb[0].mxu0
        %v2053 = vadd.f32 0.0, %v2052
        %v2054 = vpop.f32.mrb[0].mxu0
        %2055 = vmatprep.mubr.bf16.mxu0 0
        %2056 = vmatmul.mubr.bf16.gmra.mrb[0].mxu0 %v1950
        %v2057 = vpop.f32.mrb[0].mxu0
        %v2058 = vadd.f32 0.0, %v2057
        %v2059 = vpop.f32.mrb[0].mxu0
        %v2060 = vpop.f32.mrb[0].mxu0
        %v2061 = vpop.f32.mrb[0].mxu0
        %2062 = vdwg.mxu0
        %v2063 = vadd.f32 %v1765, %v2050
        %v2064 = vadd.f32 %v1766, %v2053
        %v2065 = vadd.f32 %v1767, %v2058
        %v2066 = vld [vmem:[%s16] sm:$0x1]
        %v2068 = vlaneseq
        %v2069 = vshrl.u32 %v2068, 7
        %v2070 = vsub.s32 0, %v2069
        %v2071 = vrot.slane %v2066, %v2070
        %v2073 = vadd.f32 %v2063, %v2071
        %v2074 = vadd.f32 %v2064, %v2071
        %v2075 = vadd.f32 %v2065, %v2071
        %s2076 = scalar_lea.vmem %s5, 1
        %v2077 = vld [vmem:[%s2076] sm:$0x1]
        %s2078 = scalar_lea.vmem %s6, 1
        %v2079 = vld [vmem:[%s2078] sm:$0x1]
        %v2080 = vsel %vm1067, %v2073, 0.0
        %2081 = vadd.xlane.f32.xlu0 %v2080
        %v2082 = vpop.xlane.xlu0 %2081
        %v2083 = vsel %vm1067, %v2074, 0.0
        %2084 = vadd.xlane.f32.xlu0 %v2083
        %v2085 = vpop.xlane.xlu0 %2084
        %v2086 = vsel %vm1067, %v2075, 0.0
        %2087 = vadd.xlane.f32.xlu0 %v2086
        %v2088 = vpop.xlane.xlu0 %2087
        %v2089 = vmul.f32 %v2082, %v1099
        %v2090 = vmul.f32 %v2085, %v1099
        %v2091 = vmul.f32 %v2088, %v1099
        %v2092 = vsub.f32 %v2073, %v2089
        %v2093 = vsub.f32 %v2074, %v2090
        %v2094 = vsub.f32 %v2075, %v2091
        %v2095 = vmul.f32 %v2092, %v2092
        %v2096 = vmul.f32 %v2093, %v2093
        %v2097 = vmul.f32 %v2094, %v2094
        %v2098 = vsel %vm1067, %v2095, 0.0
        %2099 = vadd.xlane.f32.xlu0 %v2098
        %v2100 = vpop.xlane.xlu0 %2099
        %v2101 = vsel %vm1067, %v2096, 0.0
        %2102 = vadd.xlane.f32.xlu0 %v2101
        %v2103 = vpop.xlane.xlu0 %2102
        %v2104 = vsel %vm1067, %v2097, 0.0
        %2105 = vadd.xlane.f32.xlu0 %v2104
        %v2106 = vpop.xlane.xlu0 %2105
        %v2107 = vmul.f32 %v2100, %v1099
        %v2108 = vmul.f32 %v2103, %v1099
        %v2109 = vmul.f32 %v2106, %v1099
        %v2110 = vadd.f32 %v2107, 1e-06
        %v2111 = vadd.f32 %v2108, 1e-06
        %v2112 = vadd.f32 %v2109, 1e-06
        %v2113 = vrsqrt.pop %v2110
        %v2114 = vrsqrt.pop %v2111
        %v2115 = vrsqrt.pop %v2112
        %v2116 = vmul.f32 %v2092, %v2113
        %v2117 = vmul.f32 %v2093, %v2114
        %v2118 = vmul.f32 %v2094, %v2115
        %v2120 = vlaneseq
        %v2121 = vshrl.u32 %v2120, 7
        %v2122 = vsub.s32 0, %v2121
        %v2123 = vrot.slane %v2077, %v2122
        %v2125 = vmul.f32 %v2116, %v2123
        %v2126 = vmul.f32 %v2117, %v2123
        %v2127 = vmul.f32 %v2118, %v2123
        %v2129 = vlaneseq
        %v2130 = vshrl.u32 %v2129, 7
        %v2131 = vsub.s32 0, %v2130
        %v2132 = vrot.slane %v2079, %v2131
        %v2134 = vadd.f32 %v2125, %v2132
        %v2135 = vadd.f32 %v2126, %v2132
        %v2136 = vadd.f32 %v2127, %v2132
        %v2137 = vpack.c.bf16 %v2135, %v2134
        %v2138 = vpack.c.bf16 %v2136, %v2136
        %s2139 = scalar_lea.vmem %s7, 64
        %v2140 = vld [vmem:[%s2139] sm:$0xff]
        %v2141 = vld [vmem:[%s2139 + $0x8] sm:$0xff]
        %v2142 = vld [vmem:[%s2139 + $0x10] sm:$0xff]
        %v2143 = vld [vmem:[%s2139 + $0x18] sm:$0xff]
        %v2144 = vld [vmem:[%s2139 + $0x20] sm:$0xff]
        %v2145 = vld [vmem:[%s2139 + $0x28] sm:$0xff]
        %v2146 = vld [vmem:[%s2139 + $0x30] sm:$0xff]
        %v2147 = vld [vmem:[%s2139 + $0x38] sm:$0xff]
        %s2148 = scalar_lea.vmem %s8, 2
        %v2149 = vld [vmem:[%s2148] sm:$0x3]
        %v2151 = vlaneseq
        %v2152 = vshrl.u32 %v2151, 7
        %v2153 = vsub.s32 0, %v2152
        %v2154 = vrot.slane %v2149, %v2153
        %v2155 = vlaneseq
        %v2156 = vshrl.u32 %v2155, 7
        %v2157 = vsub.s32 1, %v2156
        %v2158 = vrot.slane %v2149, %v2157
        %v2169 = vunpack.c.l.b16 %v2140
        %v2170 = vunpack.c.h.b16 %v2140
        %v2171 = vunpack.c.l.b16 %v2141
        %v2172 = vunpack.c.h.b16 %v2141
        %v2173 = vunpack.c.l.b16 %v2142
        %v2174 = vunpack.c.h.b16 %v2142
        %v2175 = vunpack.c.l.b16 %v2143
        %v2176 = vunpack.c.h.b16 %v2143
        %v2177 = vunpack.c.l.b16 %v2144
        %v2178 = vunpack.c.h.b16 %v2144
        %v2179 = vunpack.c.l.b16 %v2145
        %v2180 = vunpack.c.h.b16 %v2145
        %v2181 = vunpack.c.l.b16 %v2146
        %v2182 = vunpack.c.h.b16 %v2146
        %v2183 = vunpack.c.l.b16 %v2147
        %v2184 = vunpack.c.h.b16 %v2147
        %v2185 = vpack.c.b16 %v2171, %v2169
        %v2186 = vpack.c.b16 %v2172, %v2170
        %v2187 = vpack.c.b16 %v2175, %v2173
        %v2188 = vpack.c.b16 %v2176, %v2174
        %v2189 = vpack.c.b16 %v2179, %v2177
        %v2190 = vpack.c.b16 %v2180, %v2178
        %v2191 = vpack.c.b16 %v2183, %v2181
        %v2192 = vpack.c.b16 %v2184, %v2182
        %v2202 = vsel %vm1067, %v2137, 0
        %v2205 = vsel %vm1067, %v2138, 0
        %2207 = vmatprep.subr.bf16.mxu0 %v2186
        %2208 = vmatpush1.bf16.msra.mxu0 %v2185
        %2209 = vmatprep.subr.bf16.mxu0 %v2188
        %2210 = vmatpush1.bf16.msra.mxu0 %v2187
        %2211 = vmatprep.subr.bf16.mxu0 %v2190
        %2212 = vmatpush1.bf16.msra.mxu0 %v2189
        %2213 = vmatprep.subr.bf16.mxu0 %v2192
        %2214 = vmatpush1.bf16.msra.mxu0 %v2191
        %2215 = vmatprep.subr.bf16.mxu0 0
        %2216 = vmatpush1.bf16.msra.mxu0 0
        %2217 = vmatprep.subr.bf16.mxu0 0
        %2218 = vmatpush1.bf16.msra.mxu0 0
        %2219 = vmatprep.subr.bf16.mxu0 0
        %2220 = vmatpush1.bf16.msra.mxu0 0
        %2221 = vmatprep.subr.bf16.mxu0 0
        %2222 = vmatpush1.bf16.msra.mxu0 0
        %2223 = vmatprep.subr.bf16.mxu0 0
        %2224 = vmatpush1.bf16.msra.mxu0 0
        %2225 = vmatprep.subr.bf16.mxu0 0
        %2226 = vmatpush1.bf16.msra.mxu0 0
        %2227 = vmatprep.subr.bf16.mxu0 0
        %2228 = vmatpush1.bf16.msra.mxu0 0
        %2229 = vmatprep.subr.bf16.mxu0 0
        %2230 = vmatpush1.bf16.msra.mxu0 0
        %2231 = vmatprep.subr.bf16.mxu0 0
        %2232 = vmatpush1.bf16.msra.mxu0 0
        %2233 = vmatprep.subr.bf16.mxu0 0
        %2234 = vmatpush1.bf16.msra.mxu0 0
        %2235 = vmatprep.subr.bf16.mxu0 0
        %2236 = vmatpush1.bf16.msra.mxu0 0
        %2237 = vmatprep.subr.bf16.mxu0 0
        %2238 = vmatpush1.bf16.msra.mxu0 0
        %2239 = vmatprep.mubr.bf16.mxu0 0
        %2240 = vmatmul.mubr.bf16.gmra.mrb[0].mxu0 %v2202
        %v2241 = vpop.f32.mrb[0].mxu0
        %v2242 = vadd.f32 %v2154, %v2241
        %v2243 = vpop.f32.mrb[0].mxu0
        %v2244 = vadd.f32 %v2158, %v2243
        %v2245 = vpop.f32.mrb[0].mxu0
        %v2246 = vadd.f32 %v2154, %v2245
        %v2247 = vpop.f32.mrb[0].mxu0
        %v2248 = vadd.f32 %v2158, %v2247
        %2249 = vmatprep.mubr.bf16.mxu0 0
        %2250 = vmatmul.mubr.bf16.gmra.mrb[0].mxu0 %v2205
        %v2251 = vpop.f32.mrb[0].mxu0
        %v2252 = vadd.f32 %v2154, %v2251
        %v2253 = vpop.f32.mrb[0].mxu0
        %v2254 = vadd.f32 %v2158, %v2253
        %v2255 = vpop.f32.mrb[0].mxu0
        %v2256 = vpop.f32.mrb[0].mxu0
        %2257 = vdwg.mxu0
        %s2258 = scalar_lea.vmem %s9, 32
        %v2259 = vld [vmem:[%s2258] sm:$0xf]
        %v2260 = vld [vmem:[%s2258 + $0x4] sm:$0xf]
        %v2261 = vld [vmem:[%s2258 + $0x8] sm:$0xf]
        %v2262 = vld [vmem:[%s2258 + $0xc] sm:$0xf]
        %v2263 = vld [vmem:[%s2258 + $0x10] sm:$0xf]
        %v2264 = vld [vmem:[%s2258 + $0x14] sm:$0xf]
        %v2265 = vld [vmem:[%s2258 + $0x18] sm:$0xf]
        %v2266 = vld [vmem:[%s2258 + $0x1c] sm:$0xf]
        %v2267 = vpack.c.bf16 %v2246, %v2242
        %v2268 = vpack.c.bf16 %v2252, %v2252
        %v2269 = vpack.c.bf16 %v2248, %v2244
        %v2270 = vpack.c.bf16 %v2254, %v2254
        %2273 = vrot.lane.b32.xlu0 %v2267, 64
        %v2274 = vpop.permute.xlu0 %2273
        %2275 = vrot.lane.b32.xlu0 %v2268, 64
        %v2276 = vpop.permute.xlu0 %2275
        %v2278 = vsel %vm1285, %v2267, 0
        %v2281 = vsel %vm1285, %v2268, 0
        %v2284 = vsel %vm1285, %v2274, 0
        %v2287 = vsel %vm1285, %v2276, 0
        %2289 = vmatprep.subr.bf16.mxu0 0
        %2290 = vmatpush1.bf16.xpose.msra.mxu0 %v2284
        %2291 = vmatprep.subr.bf16.mxu0 0
        %2292 = vmatpush1.bf16.xpose.msra.mxu0 %v2287
        %2293 = vmatprep.subr.bf16.mxu0 0
        %2294 = vmatpush1.bf16.xpose.msra.mxu0 0
        %2295 = vmatprep.subr.bf16.mxu0 0
        %2296 = vmatpush1.bf16.xpose.msra.mxu0 0
        %2297 = vmatprep.subr.bf16.mxu0 0
        %2298 = vmatpush1.bf16.xpose.msra.mxu0 0
        %2299 = vmatprep.subr.bf16.mxu0 0
        %2300 = vmatpush1.bf16.xpose.msra.mxu0 0
        %2301 = vmatprep.subr.bf16.mxu0 0
        %2302 = vmatpush1.bf16.xpose.msra.mxu0 0
        %2303 = vmatprep.subr.bf16.mxu0 0
        %2304 = vmatpush1.bf16.xpose.msra.mxu0 0
        %2305 = vmatprep.subr.bf16.mxu0 0
        %2306 = vmatpush1.bf16.xpose.msra.mxu0 0
        %2307 = vmatprep.subr.bf16.mxu0 0
        %2308 = vmatpush1.bf16.xpose.msra.mxu0 0
        %2309 = vmatprep.subr.bf16.mxu0 0
        %2310 = vmatpush1.bf16.xpose.msra.mxu0 0
        %2311 = vmatprep.subr.bf16.mxu0 0
        %2312 = vmatpush1.bf16.xpose.msra.mxu0 0
        %2313 = vmatprep.subr.bf16.mxu0 0
        %2314 = vmatpush1.bf16.xpose.msra.mxu0 0
        %2315 = vmatprep.subr.bf16.mxu0 0
        %2316 = vmatpush1.bf16.xpose.msra.mxu0 0
        %2317 = vmatprep.subr.bf16.mxu0 0
        %2318 = vmatpush1.bf16.xpose.msra.mxu0 0
        %2319 = vmatprep.subr.bf16.mxu0 0
        %2320 = vmatpush1.bf16.xpose.msra.mxu0 0
        %2321 = vmatprep.mubr.bf16.mxu0 0
        %2322 = vmatmul.mubr.bf16.gmra.mrb[0].mxu0 %v2278
        %v2323 = vpop.f32.mrb[0].mxu0
        %v2324 = vadd.f32 0.0, %v2323
        %v2325 = vpop.f32.mrb[0].mxu0
        %v2326 = vpop.f32.mrb[0].mxu0
        %v2327 = vadd.f32 0.0, %v2326
        %v2328 = vpop.f32.mrb[0].mxu0
        %2329 = vmatprep.mubr.bf16.mxu0 0
        %2330 = vmatmul.mubr.bf16.gmra.mrb[0].mxu0 %v2281
        %v2331 = vpop.f32.mrb[0].mxu0
        %v2332 = vadd.f32 0.0, %v2331
        %v2333 = vpop.f32.mrb[0].mxu0
        %v2334 = vpop.f32.mrb[0].mxu0
        %v2335 = vpop.f32.mrb[0].mxu0
        %2336 = vdwg.mxu0
        %v2337 = vmul.f32 %v2324, 0.17677669
        %v2338 = vmul.f32 %v2327, 0.17677669
        %v2339 = vmul.f32 %v2332, 0.17677669
        %v2340 = vsel %vm1087, %v2337, -1e+30
        %v2341 = vsel %vm1087, %v2338, -1e+30
        %v2342 = vsel %vm1087, %v2339, -1e+30
        %v2343 = vsel %vm1352, %v2340, -inf
        %2344 = vmax.xlane.f32.xlu0 %v2343
        %v2345 = vpop.xlane.xlu0 %2344
        %v2346 = vsel %vm1352, %v2341, -inf
        %2347 = vmax.xlane.f32.xlu0 %v2346
        %v2348 = vpop.xlane.xlu0 %2347
        %v2349 = vsel %vm1352, %v2342, -inf
        %2350 = vmax.xlane.f32.xlu0 %v2349
        %v2351 = vpop.xlane.xlu0 %2350
        %v2352 = vsub.f32 %v2340, %v2345
        %v2353 = vsub.f32 %v2341, %v2348
        %v2354 = vsub.f32 %v2342, %v2351
        %v2355 = vmul.f32 %v2352, 1.442695
        %v2356 = vpow.pop %v2355
        %v2357 = vmul.f32 %v2353, 1.442695
        %v2358 = vpow.pop %v2357
        %v2359 = vmul.f32 %v2354, 1.442695
        %v2360 = vpow.pop %v2359
        %v2361 = vsel %vm1352, %v2356, 0.0
        %2362 = vadd.xlane.f32.xlu0 %v2361
        %v2363 = vpop.xlane.xlu0 %2362
        %v2364 = vsel %vm1352, %v2358, 0.0
        %2365 = vadd.xlane.f32.xlu0 %v2364
        %v2366 = vpop.xlane.xlu0 %2365
        %v2367 = vsel %vm1352, %v2360, 0.0
        %2368 = vadd.xlane.f32.xlu0 %v2367
        %v2369 = vpop.xlane.xlu0 %2368
        %v2370 = vrcp.pop %v2363
        %v2371 = vrcp.pop %v2366
        %v2372 = vrcp.pop %v2369
        %v2373 = vmul.f32 %v2356, %v2370
        %v2374 = vmul.f32 %v2358, %v2371
        %v2375 = vmul.f32 %v2360, %v2372
        %v2376 = vpack.c.bf16 %v2374, %v2373
        %v2377 = vpack.c.bf16 %v2375, %v2375
        %v2379 = vsel %vm1352, %v2376, 0
        %v2382 = vsel %vm1352, %v2377, 0
        %v2385 = vsel %vm1394, %v2270, 0
        %2387 = vmatprep.subr.bf16.mxu0 0
        %2388 = vmatpush1.bf16.msra.mxu0 %v2269
        %2389 = vmatprep.subr.bf16.mxu0 0
        %2390 = vmatpush1.bf16.msra.mxu0 %v2385
        %2391 = vmatprep.subr.bf16.mxu0 0
        %2392 = vmatpush1.bf16.msra.mxu0 0
        %2393 = vmatprep.subr.bf16.mxu0 0
        %2394 = vmatpush1.bf16.msra.mxu0 0
        %2395 = vmatprep.subr.bf16.mxu0 0
        %2396 = vmatpush1.bf16.msra.mxu0 0
        %2397 = vmatprep.subr.bf16.mxu0 0
        %2398 = vmatpush1.bf16.msra.mxu0 0
        %2399 = vmatprep.subr.bf16.mxu0 0
        %2400 = vmatpush1.bf16.msra.mxu0 0
        %2401 = vmatprep.subr.bf16.mxu0 0
        %2402 = vmatpush1.bf16.msra.mxu0 0
        %2403 = vmatprep.subr.bf16.mxu0 0
        %2404 = vmatpush1.bf16.msra.mxu0 0
        %2405 = vmatprep.subr.bf16.mxu0 0
        %2406 = vmatpush1.bf16.msra.mxu0 0
        %2407 = vmatprep.subr.bf16.mxu0 0
        %2408 = vmatpush1.bf16.msra.mxu0 0
        %2409 = vmatprep.subr.bf16.mxu0 0
        %2410 = vmatpush1.bf16.msra.mxu0 0
        %2411 = vmatprep.subr.bf16.mxu0 0
        %2412 = vmatpush1.bf16.msra.mxu0 0
        %2413 = vmatprep.subr.bf16.mxu0 0
        %2414 = vmatpush1.bf16.msra.mxu0 0
        %2415 = vmatprep.subr.bf16.mxu0 0
        %2416 = vmatpush1.bf16.msra.mxu0 0
        %2417 = vmatprep.subr.bf16.mxu0 0
        %2418 = vmatpush1.bf16.msra.mxu0 0
        %2419 = vmatprep.mubr.bf16.mxu0 0
        %2420 = vmatmul.mubr.bf16.gmra.mrb[0].mxu0 %v2379
        %v2421 = vpop.f32.mrb[0].mxu0
        %v2422 = vadd.f32 0.0, %v2421
        %v2423 = vpop.f32.mrb[0].mxu0
        %v2424 = vpop.f32.mrb[0].mxu0
        %v2425 = vadd.f32 0.0, %v2424
        %v2426 = vpop.f32.mrb[0].mxu0
        %2427 = vmatprep.mubr.bf16.mxu0 0
        %2428 = vmatmul.mubr.bf16.gmra.mrb[0].mxu0 %v2382
        %v2429 = vpop.f32.mrb[0].mxu0
        %v2430 = vadd.f32 0.0, %v2429
        %v2431 = vpop.f32.mrb[0].mxu0
        %v2432 = vpop.f32.mrb[0].mxu0
        %v2433 = vpop.f32.mrb[0].mxu0
        %2434 = vdwg.mxu0
        %v2435 = vpack.c.bf16 %v2425, %v2422
        %v2436 = vpack.c.bf16 %v2430, %v2430
        %2437 = vrot.lane.b32.xlu0 %v2267, 96
        %v2438 = vpop.permute.xlu0 %2437
        %2439 = vrot.lane.b32.xlu0 %v2268, 96
        %v2440 = vpop.permute.xlu0 %2439
        %2441 = vrot.lane.b32.xlu0 %v2267, 32
        %v2442 = vpop.permute.xlu0 %2441
        %2443 = vrot.lane.b32.xlu0 %v2268, 32
        %v2444 = vpop.permute.xlu0 %2443
        %v2446 = vsel %vm1285, %v2438, 0
        %v2449 = vsel %vm1285, %v2440, 0
        %v2452 = vsel %vm1285, %v2442, 0
        %v2455 = vsel %vm1285, %v2444, 0
        %2457 = vmatprep.subr.bf16.mxu0 0
        %2458 = vmatpush1.bf16.xpose.msra.mxu0 %v2452
        %2459 = vmatprep.subr.bf16.mxu0 0
        %2460 = vmatpush1.bf16.xpose.msra.mxu0 %v2455
        %2461 = vmatprep.subr.bf16.mxu0 0
        %2462 = vmatpush1.bf16.xpose.msra.mxu0 0
        %2463 = vmatprep.subr.bf16.mxu0 0
        %2464 = vmatpush1.bf16.xpose.msra.mxu0 0
        %2465 = vmatprep.subr.bf16.mxu0 0
        %2466 = vmatpush1.bf16.xpose.msra.mxu0 0
        %2467 = vmatprep.subr.bf16.mxu0 0
        %2468 = vmatpush1.bf16.xpose.msra.mxu0 0
        %2469 = vmatprep.subr.bf16.mxu0 0
        %2470 = vmatpush1.bf16.xpose.msra.mxu0 0
        %2471 = vmatprep.subr.bf16.mxu0 0
        %2472 = vmatpush1.bf16.xpose.msra.mxu0 0
        %2473 = vmatprep.subr.bf16.mxu0 0
        %2474 = vmatpush1.bf16.xpose.msra.mxu0 0
        %2475 = vmatprep.subr.bf16.mxu0 0
        %2476 = vmatpush1.bf16.xpose.msra.mxu0 0
        %2477 = vmatprep.subr.bf16.mxu0 0
        %2478 = vmatpush1.bf16.xpose.msra.mxu0 0
        %2479 = vmatprep.subr.bf16.mxu0 0
        %2480 = vmatpush1.bf16.xpose.msra.mxu0 0
        %2481 = vmatprep.subr.bf16.mxu0 0
        %2482 = vmatpush1.bf16.xpose.msra.mxu0 0
        %2483 = vmatprep.subr.bf16.mxu0 0
        %2484 = vmatpush1.bf16.xpose.msra.mxu0 0
        %2485 = vmatprep.subr.bf16.mxu0 0
        %2486 = vmatpush1.bf16.xpose.msra.mxu0 0
        %2487 = vmatprep.subr.bf16.mxu0 0
        %2488 = vmatpush1.bf16.xpose.msra.mxu0 0
        %2489 = vmatprep.mubr.bf16.mxu0 0
        %2490 = vmatmul.mubr.bf16.gmra.mrb[0].mxu0 %v2446
        %v2491 = vpop.f32.mrb[0].mxu0
        %v2492 = vadd.f32 0.0, %v2491
        %v2493 = vpop.f32.mrb[0].mxu0
        %v2494 = vpop.f32.mrb[0].mxu0
        %v2495 = vadd.f32 0.0, %v2494
        %v2496 = vpop.f32.mrb[0].mxu0
        %2497 = vmatprep.mubr.bf16.mxu0 0
        %2498 = vmatmul.mubr.bf16.gmra.mrb[0].mxu0 %v2449
        %v2499 = vpop.f32.mrb[0].mxu0
        %v2500 = vadd.f32 0.0, %v2499
        %v2501 = vpop.f32.mrb[0].mxu0
        %v2502 = vpop.f32.mrb[0].mxu0
        %v2503 = vpop.f32.mrb[0].mxu0
        %2504 = vdwg.mxu0
        %v2505 = vmul.f32 %v2492, 0.17677669
        %v2506 = vmul.f32 %v2495, 0.17677669
        %v2507 = vmul.f32 %v2500, 0.17677669
        %v2508 = vsel %vm1087, %v2505, -1e+30
        %v2509 = vsel %vm1087, %v2506, -1e+30
        %v2510 = vsel %vm1087, %v2507, -1e+30
        %v2511 = vsel %vm1352, %v2508, -inf
        %2512 = vmax.xlane.f32.xlu0 %v2511
        %v2513 = vpop.xlane.xlu0 %2512
        %v2514 = vsel %vm1352, %v2509, -inf
        %2515 = vmax.xlane.f32.xlu0 %v2514
        %v2516 = vpop.xlane.xlu0 %2515
        %v2517 = vsel %vm1352, %v2510, -inf
        %2518 = vmax.xlane.f32.xlu0 %v2517
        %v2519 = vpop.xlane.xlu0 %2518
        %v2520 = vsub.f32 %v2508, %v2513
        %v2521 = vsub.f32 %v2509, %v2516
        %v2522 = vsub.f32 %v2510, %v2519
        %v2523 = vmul.f32 %v2520, 1.442695
        %v2524 = vpow.pop %v2523
        %v2525 = vmul.f32 %v2521, 1.442695
        %v2526 = vpow.pop %v2525
        %v2527 = vmul.f32 %v2522, 1.442695
        %v2528 = vpow.pop %v2527
        %v2529 = vsel %vm1352, %v2524, 0.0
        %2530 = vadd.xlane.f32.xlu0 %v2529
        %v2531 = vpop.xlane.xlu0 %2530
        %v2532 = vsel %vm1352, %v2526, 0.0
        %2533 = vadd.xlane.f32.xlu0 %v2532
        %v2534 = vpop.xlane.xlu0 %2533
        %v2535 = vsel %vm1352, %v2528, 0.0
        %2536 = vadd.xlane.f32.xlu0 %v2535
        %v2537 = vpop.xlane.xlu0 %2536
        %v2538 = vrcp.pop %v2531
        %v2539 = vrcp.pop %v2534
        %v2540 = vrcp.pop %v2537
        %v2541 = vmul.f32 %v2524, %v2538
        %v2542 = vmul.f32 %v2526, %v2539
        %v2543 = vmul.f32 %v2528, %v2540
        %v2544 = vpack.c.bf16 %v2542, %v2541
        %v2545 = vpack.c.bf16 %v2543, %v2543
        %2548 = vrot.lane.b32.xlu0 %v2269, 96
        %v2549 = vpop.permute.xlu0 %2548
        %2550 = vrot.lane.b32.xlu0 %v2270, 96
        %v2551 = vpop.permute.xlu0 %2550
        %v2554 = vsel %vm1352, %v2544, 0
        %v2557 = vsel %vm1352, %v2545, 0
        %v2560 = vsel %vm1394, %v2551, 0
        %2562 = vmatprep.subr.bf16.mxu0 0
        %2563 = vmatpush1.bf16.msra.mxu0 %v2549
        %2564 = vmatprep.subr.bf16.mxu0 0
        %2565 = vmatpush1.bf16.msra.mxu0 %v2560
        %2566 = vmatprep.subr.bf16.mxu0 0
        %2567 = vmatpush1.bf16.msra.mxu0 0
        %2568 = vmatprep.subr.bf16.mxu0 0
        %2569 = vmatpush1.bf16.msra.mxu0 0
        %2570 = vmatprep.subr.bf16.mxu0 0
        %2571 = vmatpush1.bf16.msra.mxu0 0
        %2572 = vmatprep.subr.bf16.mxu0 0
        %2573 = vmatpush1.bf16.msra.mxu0 0
        %2574 = vmatprep.subr.bf16.mxu0 0
        %2575 = vmatpush1.bf16.msra.mxu0 0
        %2576 = vmatprep.subr.bf16.mxu0 0
        %2577 = vmatpush1.bf16.msra.mxu0 0
        %2578 = vmatprep.subr.bf16.mxu0 0
        %2579 = vmatpush1.bf16.msra.mxu0 0
        %2580 = vmatprep.subr.bf16.mxu0 0
        %2581 = vmatpush1.bf16.msra.mxu0 0
        %2582 = vmatprep.subr.bf16.mxu0 0
        %2583 = vmatpush1.bf16.msra.mxu0 0
        %2584 = vmatprep.subr.bf16.mxu0 0
        %2585 = vmatpush1.bf16.msra.mxu0 0
        %2586 = vmatprep.subr.bf16.mxu0 0
        %2587 = vmatpush1.bf16.msra.mxu0 0
        %2588 = vmatprep.subr.bf16.mxu0 0
        %2589 = vmatpush1.bf16.msra.mxu0 0
        %2590 = vmatprep.subr.bf16.mxu0 0
        %2591 = vmatpush1.bf16.msra.mxu0 0
        %2592 = vmatprep.subr.bf16.mxu0 0
        %2593 = vmatpush1.bf16.msra.mxu0 0
        %2594 = vmatprep.mubr.bf16.mxu0 0
        %2595 = vmatmul.mubr.bf16.gmra.mrb[0].mxu0 %v2554
        %v2596 = vpop.f32.mrb[0].mxu0
        %v2597 = vadd.f32 0.0, %v2596
        %v2598 = vpop.f32.mrb[0].mxu0
        %v2599 = vpop.f32.mrb[0].mxu0
        %v2600 = vadd.f32 0.0, %v2599
        %v2601 = vpop.f32.mrb[0].mxu0
        %2602 = vmatprep.mubr.bf16.mxu0 0
        %2603 = vmatmul.mubr.bf16.gmra.mrb[0].mxu0 %v2557
        %v2604 = vpop.f32.mrb[0].mxu0
        %v2605 = vadd.f32 0.0, %v2604
        %v2606 = vpop.f32.mrb[0].mxu0
        %v2607 = vpop.f32.mrb[0].mxu0
        %v2608 = vpop.f32.mrb[0].mxu0
        %2609 = vdwg.mxu0
        %v2610 = vpack.c.bf16 %v2600, %v2597
        %v2611 = vpack.c.bf16 %v2605, %v2605
        %v2616 = vunpack.c.l.b16 %v2263
        %v2617 = vunpack.c.l.b16 %v2264
        %v2618 = vunpack.c.l.b16 %v2265
        %v2619 = vunpack.c.l.b16 %v2266
        %v2620 = vpack.c.b16 %v2617, %v2616
        %v2621 = vpack.c.b16 %v2619, %v2618
        %v2625 = vsel %vm1285, %v2610, 0
        %v2628 = vsel %vm1285, %v2611, 0
        %2630 = vmatprep.subr.bf16.mxu0 0
        %2631 = vmatpush1.bf16.msra.mxu0 %v2620
        %2632 = vmatprep.subr.bf16.mxu0 0
        %2633 = vmatpush1.bf16.msra.mxu0 %v2621
        %2634 = vmatprep.subr.bf16.mxu0 0
        %2635 = vmatpush1.bf16.msra.mxu0 0
        %2636 = vmatprep.subr.bf16.mxu0 0
        %2637 = vmatpush1.bf16.msra.mxu0 0
        %2638 = vmatprep.subr.bf16.mxu0 0
        %2639 = vmatpush1.bf16.msra.mxu0 0
        %2640 = vmatprep.subr.bf16.mxu0 0
        %2641 = vmatpush1.bf16.msra.mxu0 0
        %2642 = vmatprep.subr.bf16.mxu0 0
        %2643 = vmatpush1.bf16.msra.mxu0 0
        %2644 = vmatprep.subr.bf16.mxu0 0
        %2645 = vmatpush1.bf16.msra.mxu0 0
        %2646 = vmatprep.subr.bf16.mxu0 0
        %2647 = vmatpush1.bf16.msra.mxu0 0
        %2648 = vmatprep.subr.bf16.mxu0 0
        %2649 = vmatpush1.bf16.msra.mxu0 0
        %2650 = vmatprep.subr.bf16.mxu0 0
        %2651 = vmatpush1.bf16.msra.mxu0 0
        %2652 = vmatprep.subr.bf16.mxu0 0
        %2653 = vmatpush1.bf16.msra.mxu0 0
        %2654 = vmatprep.subr.bf16.mxu0 0
        %2655 = vmatpush1.bf16.msra.mxu0 0
        %2656 = vmatprep.subr.bf16.mxu0 0
        %2657 = vmatpush1.bf16.msra.mxu0 0
        %2658 = vmatprep.subr.bf16.mxu0 0
        %2659 = vmatpush1.bf16.msra.mxu0 0
        %2660 = vmatprep.subr.bf16.mxu0 0
        %2661 = vmatpush1.bf16.msra.mxu0 0
        %2662 = vmatprep.mubr.bf16.mxu0 0
        %2663 = vmatmul.mubr.bf16.gmra.mrb[0].mxu0 %v2625
        %v2664 = vpop.f32.mrb[0].mxu0
        %v2665 = vadd.f32 0.0, %v2664
        %v2666 = vpop.f32.mrb[0].mxu0
        %v2667 = vpop.f32.mrb[0].mxu0
        %v2668 = vadd.f32 0.0, %v2667
        %v2669 = vpop.f32.mrb[0].mxu0
        %2670 = vmatprep.mubr.bf16.mxu0 0
        %2671 = vmatmul.mubr.bf16.gmra.mrb[0].mxu0 %v2628
        %v2672 = vpop.f32.mrb[0].mxu0
        %v2673 = vadd.f32 0.0, %v2672
        %v2674 = vpop.f32.mrb[0].mxu0
        %v2675 = vpop.f32.mrb[0].mxu0
        %v2676 = vpop.f32.mrb[0].mxu0
        %2677 = vdwg.mxu0
        %v2682 = vunpack.c.l.b16 %v2259
        %v2683 = vunpack.c.l.b16 %v2260
        %v2684 = vunpack.c.l.b16 %v2261
        %v2685 = vunpack.c.l.b16 %v2262
        %v2686 = vpack.c.b16 %v2683, %v2682
        %v2687 = vpack.c.b16 %v2685, %v2684
        %v2691 = vsel %vm1285, %v2435, 0
        %v2694 = vsel %vm1285, %v2436, 0
        %2696 = vmatprep.subr.bf16.mxu0 0
        %2697 = vmatpush1.bf16.msra.mxu0 %v2686
        %2698 = vmatprep.subr.bf16.mxu0 0
        %2699 = vmatpush1.bf16.msra.mxu0 %v2687
        %2700 = vmatprep.subr.bf16.mxu0 0
        %2701 = vmatpush1.bf16.msra.mxu0 0
        %2702 = vmatprep.subr.bf16.mxu0 0
        %2703 = vmatpush1.bf16.msra.mxu0 0
        %2704 = vmatprep.subr.bf16.mxu0 0
        %2705 = vmatpush1.bf16.msra.mxu0 0
        %2706 = vmatprep.subr.bf16.mxu0 0
        %2707 = vmatpush1.bf16.msra.mxu0 0
        %2708 = vmatprep.subr.bf16.mxu0 0
        %2709 = vmatpush1.bf16.msra.mxu0 0
        %2710 = vmatprep.subr.bf16.mxu0 0
        %2711 = vmatpush1.bf16.msra.mxu0 0
        %2712 = vmatprep.subr.bf16.mxu0 0
        %2713 = vmatpush1.bf16.msra.mxu0 0
        %2714 = vmatprep.subr.bf16.mxu0 0
        %2715 = vmatpush1.bf16.msra.mxu0 0
        %2716 = vmatprep.subr.bf16.mxu0 0
        %2717 = vmatpush1.bf16.msra.mxu0 0
        %2718 = vmatprep.subr.bf16.mxu0 0
        %2719 = vmatpush1.bf16.msra.mxu0 0
        %2720 = vmatprep.subr.bf16.mxu0 0
        %2721 = vmatpush1.bf16.msra.mxu0 0
        %2722 = vmatprep.subr.bf16.mxu0 0
        %2723 = vmatpush1.bf16.msra.mxu0 0
        %2724 = vmatprep.subr.bf16.mxu0 0
        %2725 = vmatpush1.bf16.msra.mxu0 0
        %2726 = vmatprep.subr.bf16.mxu0 0
        %2727 = vmatpush1.bf16.msra.mxu0 0
        %2728 = vmatprep.mubr.bf16.mxu0 0
        %2729 = vmatmul.mubr.bf16.gmra.mrb[0].mxu0 %v2691
        %v2730 = vpop.f32.mrb[0].mxu0
        %v2731 = vadd.f32 %v2665, %v2730
        %v2732 = vpop.f32.mrb[0].mxu0
        %v2733 = vpop.f32.mrb[0].mxu0
        %v2734 = vadd.f32 %v2668, %v2733
        %v2735 = vpop.f32.mrb[0].mxu0
        %2736 = vmatprep.mubr.bf16.mxu0 0
        %2737 = vmatmul.mubr.bf16.gmra.mrb[0].mxu0 %v2694
        %v2738 = vpop.f32.mrb[0].mxu0
        %v2739 = vadd.f32 %v2673, %v2738
        %v2740 = vpop.f32.mrb[0].mxu0
        %v2741 = vpop.f32.mrb[0].mxu0
        %v2742 = vpop.f32.mrb[0].mxu0
        %2743 = vdwg.mxu0
        %v2744 = vadd.f32 %v2073, %v2731
        %v2745 = vadd.f32 %v2074, %v2734
        %v2746 = vadd.f32 %v2075, %v2739
        %s2747 = scalar_lea.vmem %s10, 1
        %v2748 = vld [vmem:[%s2747] sm:$0x1]
        %v2750 = vlaneseq
        %v2751 = vshrl.u32 %v2750, 7
        %v2752 = vsub.s32 0, %v2751
        %v2753 = vrot.slane %v2748, %v2752
        %v2755 = vadd.f32 %v2744, %v2753
        %v2756 = vadd.f32 %v2745, %v2753
        %v2757 = vadd.f32 %v2746, %v2753
        %s2758 = scalar_lea.vmem %s11, 1
        %v2759 = vld [vmem:[%s2758] sm:$0x1]
        %s2760 = scalar_lea.vmem %s12, 1
        %v2761 = vld [vmem:[%s2760] sm:$0x1]
        %v2762 = vsel %vm1067, %v2755, 0.0
        %2763 = vadd.xlane.f32.xlu0 %v2762
        %v2764 = vpop.xlane.xlu0 %2763
        %v2765 = vsel %vm1067, %v2756, 0.0
        %2766 = vadd.xlane.f32.xlu0 %v2765
        %v2767 = vpop.xlane.xlu0 %2766
        %v2768 = vsel %vm1067, %v2757, 0.0
        %2769 = vadd.xlane.f32.xlu0 %v2768
        %v2770 = vpop.xlane.xlu0 %2769
        %v2771 = vmul.f32 %v2764, %v1099
        %v2772 = vmul.f32 %v2767, %v1099
        %v2773 = vmul.f32 %v2770, %v1099
        %v2774 = vsub.f32 %v2755, %v2771
        %v2775 = vsub.f32 %v2756, %v2772
        %v2776 = vsub.f32 %v2757, %v2773
        %v2777 = vmul.f32 %v2774, %v2774
        %v2778 = vmul.f32 %v2775, %v2775
        %v2779 = vmul.f32 %v2776, %v2776
        %v2780 = vsel %vm1067, %v2777, 0.0
        %2781 = vadd.xlane.f32.xlu0 %v2780
        %v2782 = vpop.xlane.xlu0 %2781
        %v2783 = vsel %vm1067, %v2778, 0.0
        %2784 = vadd.xlane.f32.xlu0 %v2783
        %v2785 = vpop.xlane.xlu0 %2784
        %v2786 = vsel %vm1067, %v2779, 0.0
        %2787 = vadd.xlane.f32.xlu0 %v2786
        %v2788 = vpop.xlane.xlu0 %2787
        %v2789 = vmul.f32 %v2782, %v1099
        %v2790 = vmul.f32 %v2785, %v1099
        %v2791 = vmul.f32 %v2788, %v1099
        %v2792 = vadd.f32 %v2789, 1e-06
        %v2793 = vadd.f32 %v2790, 1e-06
        %v2794 = vadd.f32 %v2791, 1e-06
        %v2795 = vrsqrt.pop %v2792
        %v2796 = vrsqrt.pop %v2793
        %v2797 = vrsqrt.pop %v2794
        %v2798 = vmul.f32 %v2774, %v2795
        %v2799 = vmul.f32 %v2775, %v2796
        %v2800 = vmul.f32 %v2776, %v2797
        %v2802 = vlaneseq
        %v2803 = vshrl.u32 %v2802, 7
        %v2804 = vsub.s32 0, %v2803
        %v2805 = vrot.slane %v2759, %v2804
        %v2807 = vmul.f32 %v2798, %v2805
        %v2808 = vmul.f32 %v2799, %v2805
        %v2809 = vmul.f32 %v2800, %v2805
        %v2811 = vlaneseq
        %v2812 = vshrl.u32 %v2811, 7
        %v2813 = vsub.s32 0, %v2812
        %v2814 = vrot.slane %v2761, %v2813
        %v2816 = vadd.f32 %v2807, %v2814
        %v2817 = vadd.f32 %v2808, %v2814
        %v2818 = vadd.f32 %v2809, %v2814
        %v2819 = vpack.c.bf16 %v2817, %v2816
        %v2820 = vpack.c.bf16 %v2818, %v2818
        %s2821 = scalar_lea.vmem %s13, 32
        %v2822 = vld [vmem:[%s2821] sm:$0xf]
        %v2823 = vld [vmem:[%s2821 + $0x4] sm:$0xf]
        %v2824 = vld [vmem:[%s2821 + $0x8] sm:$0xf]
        %v2825 = vld [vmem:[%s2821 + $0xc] sm:$0xf]
        %v2826 = vld [vmem:[%s2821 + $0x10] sm:$0xf]
        %v2827 = vld [vmem:[%s2821 + $0x14] sm:$0xf]
        %v2828 = vld [vmem:[%s2821 + $0x18] sm:$0xf]
        %v2829 = vld [vmem:[%s2821 + $0x1c] sm:$0xf]
        %s2830 = scalar_lea.vmem %s14, 1
        %v2831 = vld [vmem:[%s2830] sm:$0x1]
        %v2833 = vlaneseq
        %v2834 = vshrl.u32 %v2833, 7
        %v2835 = vsub.s32 0, %v2834
        %v2836 = vrot.slane %v2831, %v2835
        %v2846 = vunpack.c.l.b16 %v2822
        %v2847 = vunpack.c.l.b16 %v2823
        %v2848 = vunpack.c.l.b16 %v2824
        %v2849 = vunpack.c.l.b16 %v2825
        %v2850 = vunpack.c.l.b16 %v2826
        %v2851 = vunpack.c.l.b16 %v2827
        %v2852 = vunpack.c.l.b16 %v2828
        %v2853 = vunpack.c.l.b16 %v2829
        %v2854 = vpack.c.b16 %v2847, %v2846
        %v2855 = vpack.c.b16 %v2849, %v2848
        %v2856 = vpack.c.b16 %v2851, %v2850
        %v2857 = vpack.c.b16 %v2853, %v2852
        %v2863 = vsel %vm1067, %v2819, 0
        %v2866 = vsel %vm1067, %v2820, 0
        %2868 = vmatprep.subr.bf16.mxu0 0
        %2869 = vmatpush1.bf16.msra.mxu0 %v2854
        %2870 = vmatprep.subr.bf16.mxu0 0
        %2871 = vmatpush1.bf16.msra.mxu0 %v2855
        %2872 = vmatprep.subr.bf16.mxu0 0
        %2873 = vmatpush1.bf16.msra.mxu0 %v2856
        %2874 = vmatprep.subr.bf16.mxu0 0
        %2875 = vmatpush1.bf16.msra.mxu0 %v2857
        %2876 = vmatprep.subr.bf16.mxu0 0
        %2877 = vmatpush1.bf16.msra.mxu0 0
        %2878 = vmatprep.subr.bf16.mxu0 0
        %2879 = vmatpush1.bf16.msra.mxu0 0
        %2880 = vmatprep.subr.bf16.mxu0 0
        %2881 = vmatpush1.bf16.msra.mxu0 0
        %2882 = vmatprep.subr.bf16.mxu0 0
        %2883 = vmatpush1.bf16.msra.mxu0 0
        %2884 = vmatprep.subr.bf16.mxu0 0
        %2885 = vmatpush1.bf16.msra.mxu0 0
        %2886 = vmatprep.subr.bf16.mxu0 0
        %2887 = vmatpush1.bf16.msra.mxu0 0
        %2888 = vmatprep.subr.bf16.mxu0 0
        %2889 = vmatpush1.bf16.msra.mxu0 0
        %2890 = vmatprep.subr.bf16.mxu0 0
        %2891 = vmatpush1.bf16.msra.mxu0 0
        %2892 = vmatprep.subr.bf16.mxu0 0
        %2893 = vmatpush1.bf16.msra.mxu0 0
        %2894 = vmatprep.subr.bf16.mxu0 0
        %2895 = vmatpush1.bf16.msra.mxu0 0
        %2896 = vmatprep.subr.bf16.mxu0 0
        %2897 = vmatpush1.bf16.msra.mxu0 0
        %2898 = vmatprep.subr.bf16.mxu0 0
        %2899 = vmatpush1.bf16.msra.mxu0 0
        %2900 = vmatprep.mubr.bf16.mxu0 0
        %2901 = vmatmul.mubr.bf16.gmra.mrb[0].mxu0 %v2863
        %v2902 = vpop.f32.mrb[0].mxu0
        %v2903 = vadd.f32 %v2836, %v2902
        %v2904 = vpop.f32.mrb[0].mxu0
        %v2905 = vpop.f32.mrb[0].mxu0
        %v2906 = vadd.f32 %v2836, %v2905
        %v2907 = vpop.f32.mrb[0].mxu0
        %2908 = vmatprep.mubr.bf16.mxu0 0
        %2909 = vmatmul.mubr.bf16.gmra.mrb[0].mxu0 %v2866
        %v2910 = vpop.f32.mrb[0].mxu0
        %v2911 = vadd.f32 %v2836, %v2910
        %v2912 = vpop.f32.mrb[0].mxu0
        %v2913 = vpop.f32.mrb[0].mxu0
        %v2914 = vpop.f32.mrb[0].mxu0
        %2915 = vdwg.mxu0
        %v2916 = vmul.f32 %v2903, %v2903
        %v2917 = vmul.f32 %v2906, %v2906
        %v2918 = vmul.f32 %v2911, %v2911
        %v2919 = vmul.f32 %v2903, %v2916
        %v2920 = vmul.f32 %v2906, %v2917
        %v2921 = vmul.f32 %v2911, %v2918
        %v2922 = vmul.f32 %v2919, 0.044715
        %v2923 = vmul.f32 %v2920, 0.044715
        %v2924 = vmul.f32 %v2921, 0.044715
        %v2925 = vadd.f32 %v2903, %v2922
        %v2926 = vadd.f32 %v2906, %v2923
        %v2927 = vadd.f32 %v2911, %v2924
        %v2928 = vmul.f32 %v2925, 0.7978846
        %v2929 = vmul.f32 %v2926, 0.7978846
        %v2930 = vmul.f32 %v2927, 0.7978846
        %v2931 = vtanh.pop %v2928
        %v2932 = vtanh.pop %v2929
        %v2933 = vtanh.pop %v2930
        %v2934 = vadd.f32 %v2931, 1.0
        %v2935 = vadd.f32 %v2932, 1.0
        %v2936 = vadd.f32 %v2933, 1.0
        %v2937 = vmul.f32 %v2934, 0.5
        %v2938 = vmul.f32 %v2935, 0.5
        %v2939 = vmul.f32 %v2936, 0.5
        %v2940 = vmul.f32 %v2903, %v2937
        %v2941 = vmul.f32 %v2906, %v2938
        %v2942 = vmul.f32 %v2911, %v2939
        %v2943 = vpack.c.bf16 %v2941, %v2940
        %v2944 = vpack.c.bf16 %v2942, %v2942
        %s2945 = scalar_lea.vmem %s15, 64
        %v2946 = vld [vmem:[%s2945] sm:$0xf]
        %v2947 = vld [vmem:[%s2945 + $0x4] sm:$0xf]
        %v2948 = vld [vmem:[%s2945 + $0x8] sm:$0xf]
        %v2949 = vld [vmem:[%s2945 + $0xc] sm:$0xf]
        %v2950 = vld [vmem:[%s2945 + $0x10] sm:$0xf]
        %v2951 = vld [vmem:[%s2945 + $0x14] sm:$0xf]
        %v2952 = vld [vmem:[%s2945 + $0x18] sm:$0xf]
        %v2953 = vld [vmem:[%s2945 + $0x1c] sm:$0xf]
        %v2954 = vld [vmem:[%s2945 + $0x20] sm:$0xf]
        %v2955 = vld [vmem:[%s2945 + $0x24] sm:$0xf]
        %v2956 = vld [vmem:[%s2945 + $0x28] sm:$0xf]
        %v2957 = vld [vmem:[%s2945 + $0x2c] sm:$0xf]
        %v2958 = vld [vmem:[%s2945 + $0x30] sm:$0xf]
        %v2959 = vld [vmem:[%s2945 + $0x34] sm:$0xf]
        %v2960 = vld [vmem:[%s2945 + $0x38] sm:$0xf]
        %v2961 = vld [vmem:[%s2945 + $0x3c] sm:$0xf]
        %v2978 = vunpack.c.l.b16 %v2946
        %v2979 = vunpack.c.l.b16 %v2947
        %v2980 = vunpack.c.l.b16 %v2948
        %v2981 = vunpack.c.l.b16 %v2949
        %v2982 = vunpack.c.l.b16 %v2950
        %v2983 = vunpack.c.l.b16 %v2951
        %v2984 = vunpack.c.l.b16 %v2952
        %v2985 = vunpack.c.l.b16 %v2953
        %v2986 = vunpack.c.l.b16 %v2954
        %v2987 = vunpack.c.l.b16 %v2955
        %v2988 = vunpack.c.l.b16 %v2956
        %v2989 = vunpack.c.l.b16 %v2957
        %v2990 = vunpack.c.l.b16 %v2958
        %v2991 = vunpack.c.l.b16 %v2959
        %v2992 = vunpack.c.l.b16 %v2960
        %v2993 = vunpack.c.l.b16 %v2961
        %v2994 = vpack.c.b16 %v2979, %v2978
        %v2995 = vpack.c.b16 %v2981, %v2980
        %v2996 = vpack.c.b16 %v2983, %v2982
        %v2997 = vpack.c.b16 %v2985, %v2984
        %v2998 = vpack.c.b16 %v2987, %v2986
        %v2999 = vpack.c.b16 %v2989, %v2988
        %v3000 = vpack.c.b16 %v2991, %v2990
        %v3001 = vpack.c.b16 %v2993, %v2992
        %3010 = vmatprep.subr.bf16.mxu0 0
        %3011 = vmatpush1.bf16.msra.mxu0 %v2994
        %3012 = vmatprep.subr.bf16.mxu0 0
        %3013 = vmatpush1.bf16.msra.mxu0 %v2995
        %3014 = vmatprep.subr.bf16.mxu0 0
        %3015 = vmatpush1.bf16.msra.mxu0 %v2996
        %3016 = vmatprep.subr.bf16.mxu0 0
        %3017 = vmatpush1.bf16.msra.mxu0 %v2997
        %3018 = vmatprep.subr.bf16.mxu0 0
        %3019 = vmatpush1.bf16.msra.mxu0 %v2998
        %3020 = vmatprep.subr.bf16.mxu0 0
        %3021 = vmatpush1.bf16.msra.mxu0 %v2999
        %3022 = vmatprep.subr.bf16.mxu0 0
        %3023 = vmatpush1.bf16.msra.mxu0 %v3000
        %3024 = vmatprep.subr.bf16.mxu0 0
        %3025 = vmatpush1.bf16.msra.mxu0 %v3001
        %3026 = vmatprep.subr.bf16.mxu0 0
        %3027 = vmatpush1.bf16.msra.mxu0 0
        %3028 = vmatprep.subr.bf16.mxu0 0
        %3029 = vmatpush1.bf16.msra.mxu0 0
        %3030 = vmatprep.subr.bf16.mxu0 0
        %3031 = vmatpush1.bf16.msra.mxu0 0
        %3032 = vmatprep.subr.bf16.mxu0 0
        %3033 = vmatpush1.bf16.msra.mxu0 0
        %3034 = vmatprep.subr.bf16.mxu0 0
        %3035 = vmatpush1.bf16.msra.mxu0 0
        %3036 = vmatprep.subr.bf16.mxu0 0
        %3037 = vmatpush1.bf16.msra.mxu0 0
        %3038 = vmatprep.subr.bf16.mxu0 0
        %3039 = vmatpush1.bf16.msra.mxu0 0
        %3040 = vmatprep.subr.bf16.mxu0 0
        %3041 = vmatpush1.bf16.msra.mxu0 0
        %3042 = vmatprep.mubr.bf16.mxu0 0
        %3043 = vmatmul.mubr.bf16.gmra.mrb[0].mxu0 %v2943
        %v3044 = vpop.f32.mrb[0].mxu0
        %v3045 = vadd.f32 0.0, %v3044
        %v3046 = vpop.f32.mrb[0].mxu0
        %v3047 = vpop.f32.mrb[0].mxu0
        %v3048 = vadd.f32 0.0, %v3047
        %v3049 = vpop.f32.mrb[0].mxu0
        %3050 = vmatprep.mubr.bf16.mxu0 0
        %3051 = vmatmul.mubr.bf16.gmra.mrb[0].mxu0 %v2944
        %v3052 = vpop.f32.mrb[0].mxu0
        %v3053 = vpop.f32.mrb[0].mxu0
        %v3054 = vpop.f32.mrb[0].mxu0
        %v3055 = vpop.f32.mrb[0].mxu0
        %3056 = vdwg.mxu0
        %v3057 = vadd.f32 %v2755, %v3045
        %v3058 = vadd.f32 %v2756, %v3048
        %s3059 = scalar_lea.vmem %s16, 1
        %v3060 = vld [vmem:[%s3059] sm:$0x1]
        %v3062 = vlaneseq
        %v3063 = vshrl.u32 %v3062, 7
        %v3064 = vsub.s32 0, %v3063
        %v3065 = vrot.slane %v3060, %v3064
        %v3067 = vadd.f32 %v3057, %v3065
        %v3068 = vadd.f32 %v3058, %v3065
        %v3069 = vld [vmem:[%s17] sm:$0x1]
        %v3070 = vld [vmem:[%s18] sm:$0x1]
        %v3071 = vsel %vm1067, %v3067, 0.0
        %3072 = vadd.xlane.f32.xlu0 %v3071
        %v3073 = vpop.xlane.xlu0 %3072
        %v3074 = vsel %vm1067, %v3068, 0.0
        %3075 = vadd.xlane.f32.xlu0 %v3074
        %v3076 = vpop.xlane.xlu0 %3075
        %v3077 = vmul.f32 %v3073, %v1099
        %v3078 = vmul.f32 %v3076, %v1099
        %v3079 = vsub.f32 %v3067, %v3077
        %v3080 = vsub.f32 %v3068, %v3078
        %v3081 = vmul.f32 %v3079, %v3079
        %v3082 = vmul.f32 %v3080, %v3080
        %v3083 = vsel %vm1067, %v3081, 0.0
        %3084 = vadd.xlane.f32.xlu0 %v3083
        %v3085 = vpop.xlane.xlu0 %3084
        %v3086 = vsel %vm1067, %v3082, 0.0
        %3087 = vadd.xlane.f32.xlu0 %v3086
        %v3088 = vpop.xlane.xlu0 %3087
        %v3089 = vmul.f32 %v3085, %v1099
        %v3090 = vmul.f32 %v3088, %v1099
        %v3091 = vadd.f32 %v3089, 1e-06
        %v3092 = vadd.f32 %v3090, 1e-06
        %v3093 = vrsqrt.pop %v3091
        %v3094 = vrsqrt.pop %v3092
        %v3095 = vmul.f32 %v3079, %v3093
        %v3096 = vmul.f32 %v3080, %v3094
        %v3098 = vlaneseq
        %v3099 = vshrl.u32 %v3098, 7
        %v3100 = vsub.s32 0, %v3099
        %v3101 = vrot.slane %v3069, %v3100
        %v3103 = vmul.f32 %v3095, %v3101
        %v3104 = vmul.f32 %v3096, %v3101
        %v3106 = vlaneseq
        %v3107 = vshrl.u32 %v3106, 7
        %v3108 = vsub.s32 0, %v3107
        %v3109 = vrot.slane %v3070, %v3108
        %v3111 = vadd.f32 %v3103, %v3109
        %v3112 = vadd.f32 %v3104, %v3109
        %3113 = vst.msk [vmem:[%s595] sm:$0xff] %vm1067, %v3111
        %3114 = vst.msk [vmem:[%s595 + $0x8] sm:$0xff] %vm1067, %v3112
        %s3115 = sand.u32 %s445, 1
        %s3116 = scalar_lea.sflag [#allocation4], %s3115
        %s3117 = sand.u32 %s445, 1
        %s3118 = smul.addr %s3117, 16
        %s3119 = scalar_lea.vmem [#allocation3], %s3118
        // Predicated region
        $region97: #{dino_feature_pyramid.1} parent=95 // pred_check
          %p3120 = pneg %p455
        $region98: #{dino_feature_pyramid.1} parent=95 // pred_check_branch
          %3122 = sbr.rel (%p3120) target = $region100
        $region99: #{dino_feature_pyramid.1} parent=95 // pred_region
          %s3124 = ssub.s32 256, 256
          %3125 = vsyncadd %s3116, %s3124
          %s3126 = smul.addr %s33, 2
          %s3127 = smul.addr %s3126, 128
          %s3128 = scalar_lea.hbm %s19, %s3127
          %s3129 = sshll.u32 %s3119, 4
          %s3130 = int_to_ptr.vmem [resolvable:$true] %s3129
          %3135 = dma.vmem_to_hbm [thread:$0]  %s3130, 256, %s3128, %s3116, 128, 128, 8
        $region100: #{dino_feature_pyramid.1} parent=95 // pred_fallthru
          _
      $region96: #{dino_feature_pyramid.1} parent=5 // pred_fallthru
        _
      %p3136 = scmp.le.s32.totalorder 2, %s28
      // Predicated region
      $region101: #{dino_feature_pyramid.1} parent=5 // pred_check
        %p3137 = pneg %p3136
      $region102: #{dino_feature_pyramid.1} parent=5 // pred_check_branch
        %3139 = sbr.rel (%p3137) target = $region104
      $region103: #{dino_feature_pyramid.1} parent=5 // pred_region
        %s3140 = ssub.s32 %s28, 2
        // Predicated region
        $region105: #{dino_feature_pyramid.1} parent=103 // pred_check
          %p3141 = pneg %p461
        $region106: #{dino_feature_pyramid.1} parent=103 // pred_check_branch
          %3143 = sbr.rel (%p3141) target = $region108
        $region107: #{dino_feature_pyramid.1} parent=103 // pred_region
          %s3144 = sand.u32 %s446, 1
          %s3145 = scalar_lea.sflag [#allocation4], %s3144
          %s3146 = sand.u32 %s446, 1
          %s3147 = smul.addr %s3146, 16
          %s3148 = scalar_lea.vmem [#allocation3], %s3147
          %3149 = dma.done %s3145, 256
        $region108: #{dino_feature_pyramid.1} parent=103 // pred_fallthru
          _
      $region104: #{dino_feature_pyramid.1} parent=5 // pred_fallthru
        _
    $region6: #{dino_feature_pyramid.1} parent=1 // loop_footer
      %s32 = sadd.s32 1, %s28
    $region7: #{dino_feature_pyramid.1} parent=1 // loop_footer_branch
      %27 = sbr.rel target = $region3
    $region8: #{dino_feature_pyramid.1} parent=1 // loop_exit
      _
    %3150 = vsyncpa [#allocation4], 1
    %s3151 = scalar_lea.sflag [#allocation4], 1
    %3152 = vsyncpa %s3151, 1

</llo_original>
